<compile_context>
chip_gen: v7x
topology: tpu7x:2x2x1
jax: 0.10.0
libtpu: 0.0.40
codegen_flags: <defaults>
</compile_context>

<pallas_src>
import jax
import jax.numpy as jnp
from jax.experimental import pallas as pl
from jax.experimental.pallas import tpu as pltpu  # noqa: F401  (TPU backend assumed)

EMB_DIM = 16
HID_DIM = 32
SRC_VOCAB = 64
TRG_VOCAB = 64
VOCAB_PAD = 128            # logits padded to a full 128-lane vreg (unmasked stores)
GATE_DIM = 4 * HID_DIM     # 128: gates [i | f | g | o] stacked on the lane axis

HI = jax.lax.Precision.HIGHEST  # full-f32 XLA dots in weight prep / reference


# ------------------------------ fused Seq2Seq kernel ------------------------------
def seq2seq_kernel(src_ref, trg_ref, tf_ref,
                   enc_t2g_ref, enc_whh_ref,
                   dec_t2g_ref, dec_whh_ref,
                   fc_w_ref, fc_b_ref,
                   out_ref):
    # src_ref: (S, B, 1) int32 source tokens
    # trg_ref: (T, B, 1) int32 target tokens
    # tf_ref : (T, B, 1) f32   teacher-forcing mask (1.0 => feed trg[t] as next input)
    # enc_t2g / dec_t2g: (V, 128) per-token fused gate tables (emb @ W_ih + b_ih+b_hh)
    # enc_whh / dec_whh: (H, 128) fused recurrent weights
    # fc_w: (H, 128) zero-padded beyond TRG_VOCAB; fc_b: (1, 128) zero-padded
    # out_ref: (T, B, 128) f32 logits (row 0 stays zero)
    src_len, batch, _ = src_ref.shape
    trg_len = trg_ref.shape[0]
    hid = enc_whh_ref.shape[0]
    vocab = enc_t2g_ref.shape[0]       # SRC_VOCAB == TRG_VOCAB here
    vpad = out_ref.shape[-1]
    f32 = jnp.float32

    # ---- hoisted loop-invariant vreg constants (JAX does not CSE broadcast_in_dim) ----
    token_iota = jax.lax.broadcasted_iota(jnp.int32, (batch, vocab), 1)      # (B, V)
    token_iota_f = token_iota.astype(f32)
    gate_lane = jax.lax.broadcasted_iota(jnp.int32, (batch, 4 * hid), 1)     # (B, 128)
    tanh_mask = jnp.logical_and(gate_lane >= 2 * hid, gate_lane < 3 * hid)   # 'g' lanes
    logit_lane = jax.lax.broadcasted_iota(jnp.int32, (batch, vpad), 1)       # (B, 128)
    valid_lane = logit_lane < vocab
    lane_f = logit_lane.astype(f32)

    # ---- weights: load once, reuse across all timesteps (VMEM resident) ----
    enc_t2g = enc_t2g_ref[...]
    enc_whh = enc_whh_ref[...]
    dec_t2g = dec_t2g_ref[...]
    dec_whh = dec_whh_ref[...]
    fc_w = fc_w_ref[...]
    fc_b = fc_b_ref[...]

    def lstm_update(pre, c):
        # pre: (B, 4H) fused gate pre-activation; gate order [i | f | g | o].
        # Full-vreg EUP activations + one select, then 32-lane slices for the update.
        act = jnp.where(tanh_mask, jnp.tanh(pre), jax.nn.sigmoid(pre))
        i = act[:, 0 * hid:1 * hid]
        f = act[:, 1 * hid:2 * hid]
        g = act[:, 2 * hid:3 * hid]
        o = act[:, 3 * hid:4 * hid]
        c_new = f * c + i * g
        h_new = o * jnp.tanh(c_new)
        return h_new, c_new

    # --------------------------------- encoder ---------------------------------
    # Input projections (one-hot @ fused token table) are independent of the
    # recurrence: compute them for every timestep up front so only h @ W_hh sits
    # on the serial dependency chain.
    enc_xg = []
    for t in range(src_len):
        oh = (src_ref[t] == token_iota).astype(f32)                          # (B, V)
        enc_xg.append(jnp.dot(oh, enc_t2g, preferred_element_type=f32))      # (B, 128)

    h = jnp.zeros((batch, hid), f32)
    c = jnp.zeros((batch, hid), f32)
    for t in range(src_len):
        pre = enc_xg[t] + jnp.dot(h, enc_whh, preferred_element_type=f32)    # (B, 128)
        h, c = lstm_update(pre, c)

    # --------------------------------- decoder ---------------------------------
    # Teacher-forced token one-hots (off the chain): build them all up front.
    trg_oh = [(trg_ref[t] == token_iota).astype(f32) for t in range(trg_len)]

    out_ref[0] = jnp.zeros((batch, vpad), f32)    # outputs[0] == 0 (PyTorch reference)
    x_oh = trg_oh[0]                              # first decoder input: trg[0]
    for t in range(1, trg_len):
        pre = (jnp.dot(x_oh, dec_t2g, preferred_element_type=f32)
               + jnp.dot(h, dec_whh, preferred_element_type=f32))            # (B, 128)
        h, c = lstm_update(pre, c)

        logits = jnp.dot(h, fc_w, preferred_element_type=f32) + fc_b         # (B, 128)
        out_ref[t] = logits                       # lane-dense, unmasked store

        if t < trg_len - 1:                       # last prediction is never consumed
            # greedy argmax (first-occurrence tie-break); padded lanes masked off.
            masked = jnp.where(valid_lane, logits, jnp.float32(-1e30))
            maxv = jnp.max(masked, axis=1, keepdims=True)
            top1 = jnp.min(jnp.where(masked == maxv, lane_f, jnp.float32(vpad)),
                           axis=1, keepdims=True)                            # (B, 1)
            pred_oh = (token_iota_f == top1).astype(f32)                     # (B, V)
            # teacher forcing: select next input's one-hot on-device.
            sel = tf_ref[t]                                                  # (B, 1)
            x_oh = sel * trg_oh[t] + (1.0 - sel) * pred_oh


# ------------------------------ wrapper / weight fusion ------------------------------
def fuse_params(params):
    """Fold per-gate LSTM weights into lane-dense fused matrices (done once)."""
    def fuse_w(w):   # (4, in, H) -> (in, 4H), gates [i|f|g|o] on the lane axis
        return jnp.transpose(w, (1, 0, 2)).reshape(w.shape[1], GATE_DIM)

    def fuse_b(b):   # (4, 1, H) -> (1, 4H)
        return jnp.transpose(b, (1, 0, 2)).reshape(1, GATE_DIM)

    # embedding + x @ W_ih + (b_ih + b_hh) folded into a per-token gate table.
    enc_t2g = (jnp.dot(params["enc_emb"], fuse_w(params["enc_wih"]), precision=HI)
               + fuse_b(params["enc_b"]))
    dec_t2g = (jnp.dot(params["dec_emb"], fuse_w(params["dec_wih"]), precision=HI)
               + fuse_b(params["dec_b"]))
    return dict(
        enc_t2g=enc_t2g, enc_whh=fuse_w(params["enc_whh"]),
        dec_t2g=dec_t2g, dec_whh=fuse_w(params["dec_whh"]),
        fc_w=params["fc_w"], fc_b=params["fc_b"])


@jax.jit
def seq2seq_forward(src, trg, fused, rng, teacher_forcing_ratio=0.5):
    trg_len, batch = trg.shape
    # device-side teacher-forcing decisions (replaces host random.random()).
    tf = (jax.random.uniform(rng, (trg_len,)) < teacher_forcing_ratio).astype(jnp.float32)
    tf = jnp.broadcast_to(tf[:, None, None], (trg_len, batch, 1))
    src_tok = src.astype(jnp.int32)[:, :, None]          # (S, B, 1)
    trg_tok = trg.astype(jnp.int32)[:, :, None]          # (T, B, 1)

    logits_pad = pl.pallas_call(
        seq2seq_kernel,
        out_shape=jax.ShapeDtypeStruct((trg_len, batch, VOCAB_PAD), jnp.float32),
    )(src_tok, trg_tok, tf,
      fused["enc_t2g"], fused["enc_whh"],
      fused["dec_t2g"], fused["dec_whh"],
      fused["fc_w"], fused["fc_b"])
    return logits_pad[:, :, :TRG_VOCAB]


# ------------------------------ pure-JAX reference ------------------------------
def seq2seq_reference(src, trg, params, tf_mask):
    def lstm_step(x, h, c, wih, whh, b):
        g = [jnp.dot(x, wih[k], precision=HI) + jnp.dot(h, whh[k], precision=HI) + b[k]
             for k in range(4)]
        i, f = jax.nn.sigmoid(g[0]), jax.nn.sigmoid(g[1])
        gg, o = jnp.tanh(g[2]), jax.nn.sigmoid(g[3])
        c = f * c + i * gg
        return o * jnp.tanh(c), c

    src_len, batch = src.shape
    trg_len = trg.shape[0]
    h = jnp.zeros((batch, HID_DIM), jnp.float32)
    c = jnp.zeros((batch, HID_DIM), jnp.float32)
    for t in range(src_len):
        x = params["enc_emb"][src[t]]
        h, c = lstm_step(x, h, c, params["enc_wih"], params["enc_whh"], params["enc_b"])

    outs = [jnp.zeros((batch, TRG_VOCAB), jnp.float32)]
    inp = trg[0]
    for t in range(1, trg_len):
        x = params["dec_emb"][inp]
        h, c = lstm_step(x, h, c, params["dec_wih"], params["dec_whh"], params["dec_b"])
        logits = jnp.dot(h, params["fc_w"], precision=HI) + params["fc_b"]
        outs.append(logits[:, :TRG_VOCAB])
        top1 = jnp.argmax(logits[:, :TRG_VOCAB], axis=1).astype(trg.dtype)
        inp = jnp.where(tf_mask[t] > 0, trg[t], top1)
    return jnp.stack(outs, axis=0)


# ------------------------------- parameter init -------------------------------
def init_params(key):
    hid, emb = HID_DIM, EMB_DIM
    s = 1.0 / float(hid) ** 0.5
    ks = jax.random.split(key, 12)

    def u(k, shape, scale):
        return jax.random.uniform(k, shape, jnp.float32, -scale, scale)

    # LSTM weights stored per-gate [i, f, g, o], pre-transposed vs PyTorch
    # (weight_ih (4H,in) -> (4,in,H); weight_hh (4H,H) -> (4,H,H)); bias_ih + bias_hh
    # folded into one per-gate bias.  fc_out is padded to 128 lanes with ZERO columns.
    fc_w = jnp.zeros((hid, VOCAB_PAD), jnp.float32).at[:, :TRG_VOCAB].set(
        u(ks[10], (hid, TRG_VOCAB), s))
    fc_b = jnp.zeros((1, VOCAB_PAD), jnp.float32).at[:, :TRG_VOCAB].set(
        u(ks[11], (1, TRG_VOCAB), s))
    return dict(
        enc_emb=u(ks[0], (SRC_VOCAB, emb), 0.1),
        enc_wih=u(ks[1], (4, emb, hid), s),
        enc_whh=u(ks[2], (4, hid, hid), s),
        enc_b=u(ks[3], (4, 1, hid), s) + u(ks[4], (4, 1, hid), s),
        dec_emb=u(ks[5], (TRG_VOCAB, emb), 0.1),
        dec_wih=u(ks[6], (4, emb, hid), s),
        dec_whh=u(ks[7], (4, hid, hid), s),
        dec_b=u(ks[8], (4, 1, hid), s) + u(ks[9], (4, 1, hid), s),
        fc_w=fc_w, fc_b=fc_b)


if __name__ == "__main__":
    key = jax.random.PRNGKey(0)
    pkey, skey, tkey, fkey = jax.random.split(key, 4)
    params = init_params(pkey)
    fused = fuse_params(params)     # one-time weight fusion (not in the per-forward path)

    src_len, trg_len, batch = 6, 8, 8
    src = jax.random.randint(skey, (src_len, batch), 0, SRC_VOCAB, dtype=jnp.int32)
    trg = jax.random.randint(tkey, (trg_len, batch), 0, TRG_VOCAB, dtype=jnp.int32)

    # main run: teacher_forcing_ratio = 0.5 (mixed teacher-forced / greedy feedback)
    outputs = seq2seq_forward(src, trg, fused, fkey, 0.5)
    outputs = jax.block_until_ready(outputs)
    assert outputs.shape == (trg_len, batch, TRG_VOCAB)
    assert bool(jnp.all(outputs[0] == 0.0))

    # check 1: fully teacher-forced (deterministic token path) vs pure-JAX reference.
    out_tf = jax.block_until_ready(seq2seq_forward(src, trg, fused, fkey, 1.0))
    ones_mask = jnp.ones((trg_len,), jnp.int32)
    ref_tf = seq2seq_reference(src, trg, params, ones_mask)
    assert jnp.allclose(out_tf, ref_tf, atol=5e-3, rtol=5e-3), \
        float(jnp.max(jnp.abs(out_tf - ref_tf)))

    # check 2: fully greedy path (in-kernel argmax + feedback).  To stay robust to
    # tie-break / tiny-precision token flips, replay the kernel's own argmax tokens
    # through the reference as forced inputs and compare logits along that path.
    out_gr = jax.block_until_ready(seq2seq_forward(src, trg, fused, fkey, 0.0))
    pred = jnp.argmax(out_gr, axis=2).astype(trg.dtype)          # (T, B)
    trg_replay = jnp.concatenate([trg[0:1], pred[1:]], axis=0)   # inputs the kernel used
    ref_gr = seq2seq_reference(src, trg_replay, params, ones_mask)
    assert jnp.allclose(out_gr, ref_gr, atol=5e-3, rtol=5e-3), \
        float(jnp.max(jnp.abs(out_gr - ref_gr)))

    print("KERNEL_OK")
</pallas_src>

<mosaic_0001>
module attributes {stable_mosaic.version = 11 : i64} {
  func.func @seq2seq_kernel(%arg0: memref<6x8x1xi32, #tpu.memory_space<vmem>>, %arg1: memref<8x8x1xi32, #tpu.memory_space<vmem>>, %arg2: memref<8x8x1xf32, #tpu.memory_space<vmem>>, %arg3: memref<64x128xf32, #tpu.memory_space<vmem>>, %arg4: memref<32x128xf32, #tpu.memory_space<vmem>>, %arg5: memref<64x128xf32, #tpu.memory_space<vmem>>, %arg6: memref<32x128xf32, #tpu.memory_space<vmem>>, %arg7: memref<32x128xf32, #tpu.memory_space<vmem>>, %arg8: memref<1x128xf32, #tpu.memory_space<vmem>>, %arg9: memref<8x8x128xf32, #tpu.memory_space<vmem>>) attributes {dimension_semantics = [], scalar_prefetch = 0 : i64, scratch_operands = 0 : i64, tpu.core_type = #tpu.core_type<tc>} {
    %0 = tpu.iota {dimensions = array<i32: 1>} : vector<8x64xi32>
    %1 = arith.sitofp %0 : vector<8x64xi32> to vector<8x64xf32>
    %2 = tpu.iota {dimensions = array<i32: 1>} : vector<8x128xi32>
    %c64_i32 = arith.constant 64 : i32
    %3 = vector.broadcast %c64_i32 : i32 to vector<8x128xi32>
    %4 = arith.cmpi sge, %2, %3 : vector<8x128xi32>
    %c96_i32 = arith.constant 96 : i32
    %5 = vector.broadcast %c96_i32 : i32 to vector<8x128xi32>
    %6 = arith.cmpi slt, %2, %5 : vector<8x128xi32>
    %7 = arith.andi %4, %6 : vector<8x128xi1>
    %8 = tpu.iota {dimensions = array<i32: 1>} : vector<8x128xi32>
    %c64_i32_0 = arith.constant 64 : i32
    %9 = vector.broadcast %c64_i32_0 : i32 to vector<8x128xi32>
    %10 = arith.cmpi slt, %8, %9 : vector<8x128xi32>
    %11 = arith.sitofp %8 : vector<8x128xi32> to vector<8x128xf32>
    %c0 = arith.constant 0 : index
    %c0_1 = arith.constant 0 : index
    %12 = vector.load %arg3[%c0, %c0_1] : memref<64x128xf32, #tpu.memory_space<vmem>>, vector<64x128xf32>
    %c0_2 = arith.constant 0 : index
    %c0_3 = arith.constant 0 : index
    %13 = vector.load %arg4[%c0_2, %c0_3] : memref<32x128xf32, #tpu.memory_space<vmem>>, vector<32x128xf32>
    %c0_4 = arith.constant 0 : index
    %c0_5 = arith.constant 0 : index
    %14 = vector.load %arg5[%c0_4, %c0_5] : memref<64x128xf32, #tpu.memory_space<vmem>>, vector<64x128xf32>
    %c0_6 = arith.constant 0 : index
    %c0_7 = arith.constant 0 : index
    %15 = vector.load %arg6[%c0_6, %c0_7] : memref<32x128xf32, #tpu.memory_space<vmem>>, vector<32x128xf32>
    %c0_8 = arith.constant 0 : index
    %c0_9 = arith.constant 0 : index
    %16 = vector.load %arg7[%c0_8, %c0_9] : memref<32x128xf32, #tpu.memory_space<vmem>>, vector<32x128xf32>
    %c0_10 = arith.constant 0 : index
    %c0_11 = arith.constant 0 : index
    %17 = vector.load %arg8[%c0_10, %c0_11] : memref<1x128xf32, #tpu.memory_space<vmem>>, vector<1x128xf32>
    %c0_12 = arith.constant 0 : index
    %c0_13 = arith.constant 0 : index
    %c0_14 = arith.constant 0 : index
    %18 = vector.load %arg0[%c0_12, %c0_13, %c0_14] : memref<6x8x1xi32, #tpu.memory_space<vmem>>, vector<1x8x1xi32>
    %19 = vector.shape_cast %18 : vector<1x8x1xi32> to vector<8x1xi32>
    %20 = vector.broadcast %19 : vector<8x1xi32> to vector<8x64xi32>
    %21 = arith.cmpi eq, %20, %0 : vector<8x64xi32>
    %22 = arith.extui %21 : vector<8x64xi1> to vector<8x64xi32>
    %23 = arith.sitofp %22 : vector<8x64xi32> to vector<8x64xf32>
    %cst = arith.constant dense<0.000000e+00> : vector<8x128xf32>
    %24 = tpu.matmul %23, %12, %cst {dimension_numbers = #tpu.dot_dimension_numbers<[1], [0], [0], [1], [0, 0, 1, 1], [], []>} : vector<8x64xf32>, vector<64x128xf32>, vector<8x128xf32> -> vector<8x128xf32>
    %c1 = arith.constant 1 : index
    %c0_15 = arith.constant 0 : index
    %c0_16 = arith.constant 0 : index
    %25 = vector.load %arg0[%c1, %c0_15, %c0_16] : memref<6x8x1xi32, #tpu.memory_space<vmem>>, vector<1x8x1xi32>
    %26 = vector.shape_cast %25 : vector<1x8x1xi32> to vector<8x1xi32>
    %27 = vector.broadcast %26 : vector<8x1xi32> to vector<8x64xi32>
    %28 = arith.cmpi eq, %27, %0 : vector<8x64xi32>
    %29 = arith.extui %28 : vector<8x64xi1> to vector<8x64xi32>
    %30 = arith.sitofp %29 : vector<8x64xi32> to vector<8x64xf32>
    %cst_17 = arith.constant dense<0.000000e+00> : vector<8x128xf32>
    %31 = tpu.matmul %30, %12, %cst_17 {dimension_numbers = #tpu.dot_dimension_numbers<[1], [0], [0], [1], [0, 0, 1, 1], [], []>} : vector<8x64xf32>, vector<64x128xf32>, vector<8x128xf32> -> vector<8x128xf32>
    %c2 = arith.constant 2 : index
    %c0_18 = arith.constant 0 : index
    %c0_19 = arith.constant 0 : index
    %32 = vector.load %arg0[%c2, %c0_18, %c0_19] : memref<6x8x1xi32, #tpu.memory_space<vmem>>, vector<1x8x1xi32>
    %33 = vector.shape_cast %32 : vector<1x8x1xi32> to vector<8x1xi32>
    %34 = vector.broadcast %33 : vector<8x1xi32> to vector<8x64xi32>
    %35 = arith.cmpi eq, %34, %0 : vector<8x64xi32>
    %36 = arith.extui %35 : vector<8x64xi1> to vector<8x64xi32>
    %37 = arith.sitofp %36 : vector<8x64xi32> to vector<8x64xf32>
    %cst_20 = arith.constant dense<0.000000e+00> : vector<8x128xf32>
    %38 = tpu.matmul %37, %12, %cst_20 {dimension_numbers = #tpu.dot_dimension_numbers<[1], [0], [0], [1], [0, 0, 1, 1], [], []>} : vector<8x64xf32>, vector<64x128xf32>, vector<8x128xf32> -> vector<8x128xf32>
    %c3 = arith.constant 3 : index
    %c0_21 = arith.constant 0 : index
    %c0_22 = arith.constant 0 : index
    %39 = vector.load %arg0[%c3, %c0_21, %c0_22] : memref<6x8x1xi32, #tpu.memory_space<vmem>>, vector<1x8x1xi32>
    %40 = vector.shape_cast %39 : vector<1x8x1xi32> to vector<8x1xi32>
    %41 = vector.broadcast %40 : vector<8x1xi32> to vector<8x64xi32>
    %42 = arith.cmpi eq, %41, %0 : vector<8x64xi32>
    %43 = arith.extui %42 : vector<8x64xi1> to vector<8x64xi32>
    %44 = arith.sitofp %43 : vector<8x64xi32> to vector<8x64xf32>
    %cst_23 = arith.constant dense<0.000000e+00> : vector<8x128xf32>
    %45 = tpu.matmul %44, %12, %cst_23 {dimension_numbers = #tpu.dot_dimension_numbers<[1], [0], [0], [1], [0, 0, 1, 1], [], []>} : vector<8x64xf32>, vector<64x128xf32>, vector<8x128xf32> -> vector<8x128xf32>
    %c4 = arith.constant 4 : index
    %c0_24 = arith.constant 0 : index
    %c0_25 = arith.constant 0 : index
    %46 = vector.load %arg0[%c4, %c0_24, %c0_25] : memref<6x8x1xi32, #tpu.memory_space<vmem>>, vector<1x8x1xi32>
    %47 = vector.shape_cast %46 : vector<1x8x1xi32> to vector<8x1xi32>
    %48 = vector.broadcast %47 : vector<8x1xi32> to vector<8x64xi32>
    %49 = arith.cmpi eq, %48, %0 : vector<8x64xi32>
    %50 = arith.extui %49 : vector<8x64xi1> to vector<8x64xi32>
    %51 = arith.sitofp %50 : vector<8x64xi32> to vector<8x64xf32>
    %cst_26 = arith.constant dense<0.000000e+00> : vector<8x128xf32>
    %52 = tpu.matmul %51, %12, %cst_26 {dimension_numbers = #tpu.dot_dimension_numbers<[1], [0], [0], [1], [0, 0, 1, 1], [], []>} : vector<8x64xf32>, vector<64x128xf32>, vector<8x128xf32> -> vector<8x128xf32>
    %c5 = arith.constant 5 : index
    %c0_27 = arith.constant 0 : index
    %c0_28 = arith.constant 0 : index
    %53 = vector.load %arg0[%c5, %c0_27, %c0_28] : memref<6x8x1xi32, #tpu.memory_space<vmem>>, vector<1x8x1xi32>
    %54 = vector.shape_cast %53 : vector<1x8x1xi32> to vector<8x1xi32>
    %55 = vector.broadcast %54 : vector<8x1xi32> to vector<8x64xi32>
    %56 = arith.cmpi eq, %55, %0 : vector<8x64xi32>
    %57 = arith.extui %56 : vector<8x64xi1> to vector<8x64xi32>
    %58 = arith.sitofp %57 : vector<8x64xi32> to vector<8x64xf32>
    %cst_29 = arith.constant dense<0.000000e+00> : vector<8x128xf32>
    %59 = tpu.matmul %58, %12, %cst_29 {dimension_numbers = #tpu.dot_dimension_numbers<[1], [0], [0], [1], [0, 0, 1, 1], [], []>} : vector<8x64xf32>, vector<64x128xf32>, vector<8x128xf32> -> vector<8x128xf32>
    %cst_30 = arith.constant 0.000000e+00 : f32
    %60 = vector.broadcast %cst_30 : f32 to vector<8x32xf32>
    %cst_31 = arith.constant 0.000000e+00 : f32
    %61 = vector.broadcast %cst_31 : f32 to vector<8x32xf32>
    %cst_32 = arith.constant dense<0.000000e+00> : vector<8x128xf32>
    %62 = tpu.matmul %60, %13, %cst_32 {dimension_numbers = #tpu.dot_dimension_numbers<[1], [0], [0], [1], [0, 0, 1, 1], [], []>} : vector<8x32xf32>, vector<32x128xf32>, vector<8x128xf32> -> vector<8x128xf32>
    %63 = arith.addf %24, %62 : vector<8x128xf32>
    %64 = math.tanh %63 : vector<8x128xf32>
    %65 = arith.negf %63 : vector<8x128xf32>
    %66 = math.exp %65 : vector<8x128xf32>
    %cst_33 = arith.constant 1.000000e+00 : f32
    %67 = vector.broadcast %cst_33 : f32 to vector<8x128xf32>
    %68 = arith.addf %67, %66 : vector<8x128xf32>
    %69 = arith.divf %67, %68 : vector<8x128xf32>
    %70 = arith.select %7, %64, %69 : vector<8x128xi1>, vector<8x128xf32>
    %71 = vector.extract_strided_slice %70 {offsets = [0, 0], sizes = [8, 32], strides = [1, 1]} : vector<8x128xf32> to vector<8x32xf32>
    %72 = vector.extract_strided_slice %70 {offsets = [0, 32], sizes = [8, 32], strides = [1, 1]} : vector<8x128xf32> to vector<8x32xf32>
    %73 = vector.extract_strided_slice %70 {offsets = [0, 64], sizes = [8, 32], strides = [1, 1]} : vector<8x128xf32> to vector<8x32xf32>
    %74 = vector.extract_strided_slice %70 {offsets = [0, 96], sizes = [8, 32], strides = [1, 1]} : vector<8x128xf32> to vector<8x32xf32>
    %75 = arith.mulf %72, %61 : vector<8x32xf32>
    %76 = arith.mulf %71, %73 : vector<8x32xf32>
    %77 = arith.addf %75, %76 : vector<8x32xf32>
    %78 = math.tanh %77 : vector<8x32xf32>
    %79 = arith.mulf %74, %78 : vector<8x32xf32>
    %cst_34 = arith.constant dense<0.000000e+00> : vector<8x128xf32>
    %80 = tpu.matmul %79, %13, %cst_34 {dimension_numbers = #tpu.dot_dimension_numbers<[1], [0], [0], [1], [0, 0, 1, 1], [], []>} : vector<8x32xf32>, vector<32x128xf32>, vector<8x128xf32> -> vector<8x128xf32>
    %81 = arith.addf %31, %80 : vector<8x128xf32>
    %82 = math.tanh %81 : vector<8x128xf32>
    %83 = arith.negf %81 : vector<8x128xf32>
    %84 = math.exp %83 : vector<8x128xf32>
    %cst_35 = arith.constant 1.000000e+00 : f32
    %85 = vector.broadcast %cst_35 : f32 to vector<8x128xf32>
    %86 = arith.addf %85, %84 : vector<8x128xf32>
    %87 = arith.divf %85, %86 : vector<8x128xf32>
    %88 = arith.select %7, %82, %87 : vector<8x128xi1>, vector<8x128xf32>
    %89 = vector.extract_strided_slice %88 {offsets = [0, 0], sizes = [8, 32], strides = [1, 1]} : vector<8x128xf32> to vector<8x32xf32>
    %90 = vector.extract_strided_slice %88 {offsets = [0, 32], sizes = [8, 32], strides = [1, 1]} : vector<8x128xf32> to vector<8x32xf32>
    %91 = vector.extract_strided_slice %88 {offsets = [0, 64], sizes = [8, 32], strides = [1, 1]} : vector<8x128xf32> to vector<8x32xf32>
    %92 = vector.extract_strided_slice %88 {offsets = [0, 96], sizes = [8, 32], strides = [1, 1]} : vector<8x128xf32> to vector<8x32xf32>
    %93 = arith.mulf %90, %77 : vector<8x32xf32>
    %94 = arith.mulf %89, %91 : vector<8x32xf32>
    %95 = arith.addf %93, %94 : vector<8x32xf32>
    %96 = math.tanh %95 : vector<8x32xf32>
    %97 = arith.mulf %92, %96 : vector<8x32xf32>
    %cst_36 = arith.constant dense<0.000000e+00> : vector<8x128xf32>
    %98 = tpu.matmul %97, %13, %cst_36 {dimension_numbers = #tpu.dot_dimension_numbers<[1], [0], [0], [1], [0, 0, 1, 1], [], []>} : vector<8x32xf32>, vector<32x128xf32>, vector<8x128xf32> -> vector<8x128xf32>
    %99 = arith.addf %38, %98 : vector<8x128xf32>
    %100 = math.tanh %99 : vector<8x128xf32>
    %101 = arith.negf %99 : vector<8x128xf32>
    %102 = math.exp %101 : vector<8x128xf32>
    %cst_37 = arith.constant 1.000000e+00 : f32
    %103 = vector.broadcast %cst_37 : f32 to vector<8x128xf32>
    %104 = arith.addf %103, %102 : vector<8x128xf32>
    %105 = arith.divf %103, %104 : vector<8x128xf32>
    %106 = arith.select %7, %100, %105 : vector<8x128xi1>, vector<8x128xf32>
    %107 = vector.extract_strided_slice %106 {offsets = [0, 0], sizes = [8, 32], strides = [1, 1]} : vector<8x128xf32> to vector<8x32xf32>
    %108 = vector.extract_strided_slice %106 {offsets = [0, 32], sizes = [8, 32], strides = [1, 1]} : vector<8x128xf32> to vector<8x32xf32>
    %109 = vector.extract_strided_slice %106 {offsets = [0, 64], sizes = [8, 32], strides = [1, 1]} : vector<8x128xf32> to vector<8x32xf32>
    %110 = vector.extract_strided_slice %106 {offsets = [0, 96], sizes = [8, 32], strides = [1, 1]} : vector<8x128xf32> to vector<8x32xf32>
    %111 = arith.mulf %108, %95 : vector<8x32xf32>
    %112 = arith.mulf %107, %109 : vector<8x32xf32>
    %113 = arith.addf %111, %112 : vector<8x32xf32>
    %114 = math.tanh %113 : vector<8x32xf32>
    %115 = arith.mulf %110, %114 : vector<8x32xf32>
    %cst_38 = arith.constant dense<0.000000e+00> : vector<8x128xf32>
    %116 = tpu.matmul %115, %13, %cst_38 {dimension_numbers = #tpu.dot_dimension_numbers<[1], [0], [0], [1], [0, 0, 1, 1], [], []>} : vector<8x32xf32>, vector<32x128xf32>, vector<8x128xf32> -> vector<8x128xf32>
    %117 = arith.addf %45, %116 : vector<8x128xf32>
    %118 = math.tanh %117 : vector<8x128xf32>
    %119 = arith.negf %117 : vector<8x128xf32>
    %120 = math.exp %119 : vector<8x128xf32>
    %cst_39 = arith.constant 1.000000e+00 : f32
    %121 = vector.broadcast %cst_39 : f32 to vector<8x128xf32>
    %122 = arith.addf %121, %120 : vector<8x128xf32>
    %123 = arith.divf %121, %122 : vector<8x128xf32>
    %124 = arith.select %7, %118, %123 : vector<8x128xi1>, vector<8x128xf32>
    %125 = vector.extract_strided_slice %124 {offsets = [0, 0], sizes = [8, 32], strides = [1, 1]} : vector<8x128xf32> to vector<8x32xf32>
    %126 = vector.extract_strided_slice %124 {offsets = [0, 32], sizes = [8, 32], strides = [1, 1]} : vector<8x128xf32> to vector<8x32xf32>
    %127 = vector.extract_strided_slice %124 {offsets = [0, 64], sizes = [8, 32], strides = [1, 1]} : vector<8x128xf32> to vector<8x32xf32>
    %128 = vector.extract_strided_slice %124 {offsets = [0, 96], sizes = [8, 32], strides = [1, 1]} : vector<8x128xf32> to vector<8x32xf32>
    %129 = arith.mulf %126, %113 : vector<8x32xf32>
    %130 = arith.mulf %125, %127 : vector<8x32xf32>
    %131 = arith.addf %129, %130 : vector<8x32xf32>
    %132 = math.tanh %131 : vector<8x32xf32>
    %133 = arith.mulf %128, %132 : vector<8x32xf32>
    %cst_40 = arith.constant dense<0.000000e+00> : vector<8x128xf32>
    %134 = tpu.matmul %133, %13, %cst_40 {dimension_numbers = #tpu.dot_dimension_numbers<[1], [0], [0], [1], [0, 0, 1, 1], [], []>} : vector<8x32xf32>, vector<32x128xf32>, vector<8x128xf32> -> vector<8x128xf32>
    %135 = arith.addf %52, %134 : vector<8x128xf32>
    %136 = math.tanh %135 : vector<8x128xf32>
    %137 = arith.negf %135 : vector<8x128xf32>
    %138 = math.exp %137 : vector<8x128xf32>
    %cst_41 = arith.constant 1.000000e+00 : f32
    %139 = vector.broadcast %cst_41 : f32 to vector<8x128xf32>
    %140 = arith.addf %139, %138 : vector<8x128xf32>
    %141 = arith.divf %139, %140 : vector<8x128xf32>
    %142 = arith.select %7, %136, %141 : vector<8x128xi1>, vector<8x128xf32>
    %143 = vector.extract_strided_slice %142 {offsets = [0, 0], sizes = [8, 32], strides = [1, 1]} : vector<8x128xf32> to vector<8x32xf32>
    %144 = vector.extract_strided_slice %142 {offsets = [0, 32], sizes = [8, 32], strides = [1, 1]} : vector<8x128xf32> to vector<8x32xf32>
    %145 = vector.extract_strided_slice %142 {offsets = [0, 64], sizes = [8, 32], strides = [1, 1]} : vector<8x128xf32> to vector<8x32xf32>
    %146 = vector.extract_strided_slice %142 {offsets = [0, 96], sizes = [8, 32], strides = [1, 1]} : vector<8x128xf32> to vector<8x32xf32>
    %147 = arith.mulf %144, %131 : vector<8x32xf32>
    %148 = arith.mulf %143, %145 : vector<8x32xf32>
    %149 = arith.addf %147, %148 : vector<8x32xf32>
    %150 = math.tanh %149 : vector<8x32xf32>
    %151 = arith.mulf %146, %150 : vector<8x32xf32>
    %cst_42 = arith.constant dense<0.000000e+00> : vector<8x128xf32>
    %152 = tpu.matmul %151, %13, %cst_42 {dimension_numbers = #tpu.dot_dimension_numbers<[1], [0], [0], [1], [0, 0, 1, 1], [], []>} : vector<8x32xf32>, vector<32x128xf32>, vector<8x128xf32> -> vector<8x128xf32>
    %153 = arith.addf %59, %152 : vector<8x128xf32>
    %154 = math.tanh %153 : vector<8x128xf32>
    %155 = arith.negf %153 : vector<8x128xf32>
    %156 = math.exp %155 : vector<8x128xf32>
    %cst_43 = arith.constant 1.000000e+00 : f32
    %157 = vector.broadcast %cst_43 : f32 to vector<8x128xf32>
    %158 = arith.addf %157, %156 : vector<8x128xf32>
    %159 = arith.divf %157, %158 : vector<8x128xf32>
    %160 = arith.select %7, %154, %159 : vector<8x128xi1>, vector<8x128xf32>
    %161 = vector.extract_strided_slice %160 {offsets = [0, 0], sizes = [8, 32], strides = [1, 1]} : vector<8x128xf32> to vector<8x32xf32>
    %162 = vector.extract_strided_slice %160 {offsets = [0, 32], sizes = [8, 32], strides = [1, 1]} : vector<8x128xf32> to vector<8x32xf32>
    %163 = vector.extract_strided_slice %160 {offsets = [0, 64], sizes = [8, 32], strides = [1, 1]} : vector<8x128xf32> to vector<8x32xf32>
    %164 = vector.extract_strided_slice %160 {offsets = [0, 96], sizes = [8, 32], strides = [1, 1]} : vector<8x128xf32> to vector<8x32xf32>
    %165 = arith.mulf %162, %149 : vector<8x32xf32>
    %166 = arith.mulf %161, %163 : vector<8x32xf32>
    %167 = arith.addf %165, %166 : vector<8x32xf32>
    %168 = math.tanh %167 : vector<8x32xf32>
    %169 = arith.mulf %164, %168 : vector<8x32xf32>
    %c0_44 = arith.constant 0 : index
    %c0_45 = arith.constant 0 : index
    %c0_46 = arith.constant 0 : index
    %170 = vector.load %arg1[%c0_44, %c0_45, %c0_46] : memref<8x8x1xi32, #tpu.memory_space<vmem>>, vector<1x8x1xi32>
    %171 = vector.shape_cast %170 : vector<1x8x1xi32> to vector<8x1xi32>
    %172 = vector.broadcast %171 : vector<8x1xi32> to vector<8x64xi32>
    %173 = arith.cmpi eq, %172, %0 : vector<8x64xi32>
    %174 = arith.extui %173 : vector<8x64xi1> to vector<8x64xi32>
    %175 = arith.sitofp %174 : vector<8x64xi32> to vector<8x64xf32>
    %c1_47 = arith.constant 1 : index
    %c0_48 = arith.constant 0 : index
    %c0_49 = arith.constant 0 : index
    %176 = vector.load %arg1[%c1_47, %c0_48, %c0_49] : memref<8x8x1xi32, #tpu.memory_space<vmem>>, vector<1x8x1xi32>
    %177 = vector.shape_cast %176 : vector<1x8x1xi32> to vector<8x1xi32>
    %178 = vector.broadcast %177 : vector<8x1xi32> to vector<8x64xi32>
    %179 = arith.cmpi eq, %178, %0 : vector<8x64xi32>
    %180 = arith.extui %179 : vector<8x64xi1> to vector<8x64xi32>
    %181 = arith.sitofp %180 : vector<8x64xi32> to vector<8x64xf32>
    %c2_50 = arith.constant 2 : index
    %c0_51 = arith.constant 0 : index
    %c0_52 = arith.constant 0 : index
    %182 = vector.load %arg1[%c2_50, %c0_51, %c0_52] : memref<8x8x1xi32, #tpu.memory_space<vmem>>, vector<1x8x1xi32>
    %183 = vector.shape_cast %182 : vector<1x8x1xi32> to vector<8x1xi32>
    %184 = vector.broadcast %183 : vector<8x1xi32> to vector<8x64xi32>
    %185 = arith.cmpi eq, %184, %0 : vector<8x64xi32>
    %186 = arith.extui %185 : vector<8x64xi1> to vector<8x64xi32>
    %187 = arith.sitofp %186 : vector<8x64xi32> to vector<8x64xf32>
    %c3_53 = arith.constant 3 : index
    %c0_54 = arith.constant 0 : index
    %c0_55 = arith.constant 0 : index
    %188 = vector.load %arg1[%c3_53, %c0_54, %c0_55] : memref<8x8x1xi32, #tpu.memory_space<vmem>>, vector<1x8x1xi32>
    %189 = vector.shape_cast %188 : vector<1x8x1xi32> to vector<8x1xi32>
    %190 = vector.broadcast %189 : vector<8x1xi32> to vector<8x64xi32>
    %191 = arith.cmpi eq, %190, %0 : vector<8x64xi32>
    %192 = arith.extui %191 : vector<8x64xi1> to vector<8x64xi32>
    %193 = arith.sitofp %192 : vector<8x64xi32> to vector<8x64xf32>
    %c4_56 = arith.constant 4 : index
    %c0_57 = arith.constant 0 : index
    %c0_58 = arith.constant 0 : index
    %194 = vector.load %arg1[%c4_56, %c0_57, %c0_58] : memref<8x8x1xi32, #tpu.memory_space<vmem>>, vector<1x8x1xi32>
    %195 = vector.shape_cast %194 : vector<1x8x1xi32> to vector<8x1xi32>
    %196 = vector.broadcast %195 : vector<8x1xi32> to vector<8x64xi32>
    %197 = arith.cmpi eq, %196, %0 : vector<8x64xi32>
    %198 = arith.extui %197 : vector<8x64xi1> to vector<8x64xi32>
    %199 = arith.sitofp %198 : vector<8x64xi32> to vector<8x64xf32>
    %c5_59 = arith.constant 5 : index
    %c0_60 = arith.constant 0 : index
    %c0_61 = arith.constant 0 : index
    %200 = vector.load %arg1[%c5_59, %c0_60, %c0_61] : memref<8x8x1xi32, #tpu.memory_space<vmem>>, vector<1x8x1xi32>
    %201 = vector.shape_cast %200 : vector<1x8x1xi32> to vector<8x1xi32>
    %202 = vector.broadcast %201 : vector<8x1xi32> to vector<8x64xi32>
    %203 = arith.cmpi eq, %202, %0 : vector<8x64xi32>
    %204 = arith.extui %203 : vector<8x64xi1> to vector<8x64xi32>
    %205 = arith.sitofp %204 : vector<8x64xi32> to vector<8x64xf32>
    %c6 = arith.constant 6 : index
    %c0_62 = arith.constant 0 : index
    %c0_63 = arith.constant 0 : index
    %206 = vector.load %arg1[%c6, %c0_62, %c0_63] : memref<8x8x1xi32, #tpu.memory_space<vmem>>, vector<1x8x1xi32>
    %207 = vector.shape_cast %206 : vector<1x8x1xi32> to vector<8x1xi32>
    %208 = vector.broadcast %207 : vector<8x1xi32> to vector<8x64xi32>
    %209 = arith.cmpi eq, %208, %0 : vector<8x64xi32>
    %210 = arith.extui %209 : vector<8x64xi1> to vector<8x64xi32>
    %211 = arith.sitofp %210 : vector<8x64xi32> to vector<8x64xf32>
    %cst_64 = arith.constant 0.000000e+00 : f32
    %212 = vector.broadcast %cst_64 : f32 to vector<8x128xf32>
    %c0_65 = arith.constant 0 : index
    %c0_66 = arith.constant 0 : index
    %c0_67 = arith.constant 0 : index
    %213 = vector.load %arg9[%c0_65, %c0_66, %c0_67] : memref<8x8x128xf32, #tpu.memory_space<vmem>>, vector<1x8x128xf32>
    %214 = vector.shape_cast %213 : vector<1x8x128xf32> to vector<8x128xf32>
    %215 = vector.shape_cast %212 : vector<8x128xf32> to vector<1x8x128xf32>
    tpu.vector_store %arg9[%c0_65, %c0_66, %c0_67], %215 {strides = array<i32>} : memref<8x8x128xf32, #tpu.memory_space<vmem>>, vector<1x8x128xf32>,
    %cst_68 = arith.constant dense<0.000000e+00> : vector<8x128xf32>
    %216 = tpu.matmul %175, %14, %cst_68 {dimension_numbers = #tpu.dot_dimension_numbers<[1], [0], [0], [1], [0, 0, 1, 1], [], []>} : vector<8x64xf32>, vector<64x128xf32>, vector<8x128xf32> -> vector<8x128xf32>
    %cst_69 = arith.constant dense<0.000000e+00> : vector<8x128xf32>
    %217 = tpu.matmul %169, %15, %cst_69 {dimension_numbers = #tpu.dot_dimension_numbers<[1], [0], [0], [1], [0, 0, 1, 1], [], []>} : vector<8x32xf32>, vector<32x128xf32>, vector<8x128xf32> -> vector<8x128xf32>
    %218 = arith.addf %216, %217 : vector<8x128xf32>
    %219 = math.tanh %218 : vector<8x128xf32>
    %220 = arith.negf %218 : vector<8x128xf32>
    %221 = math.exp %220 : vector<8x128xf32>
    %cst_70 = arith.constant 1.000000e+00 : f32
    %222 = vector.broadcast %cst_70 : f32 to vector<8x128xf32>
    %223 = arith.addf %222, %221 : vector<8x128xf32>
    %224 = arith.divf %222, %223 : vector<8x128xf32>
    %225 = arith.select %7, %219, %224 : vector<8x128xi1>, vector<8x128xf32>
    %226 = vector.extract_strided_slice %225 {offsets = [0, 0], sizes = [8, 32], strides = [1, 1]} : vector<8x128xf32> to vector<8x32xf32>
    %227 = vector.extract_strided_slice %225 {offsets = [0, 32], sizes = [8, 32], strides = [1, 1]} : vector<8x128xf32> to vector<8x32xf32>
    %228 = vector.extract_strided_slice %225 {offsets = [0, 64], sizes = [8, 32], strides = [1, 1]} : vector<8x128xf32> to vector<8x32xf32>
    %229 = vector.extract_strided_slice %225 {offsets = [0, 96], sizes = [8, 32], strides = [1, 1]} : vector<8x128xf32> to vector<8x32xf32>
    %230 = arith.mulf %227, %167 : vector<8x32xf32>
    %231 = arith.mulf %226, %228 : vector<8x32xf32>
    %232 = arith.addf %230, %231 : vector<8x32xf32>
    %233 = math.tanh %232 : vector<8x32xf32>
    %234 = arith.mulf %229, %233 : vector<8x32xf32>
    %cst_71 = arith.constant dense<0.000000e+00> : vector<8x128xf32>
    %235 = tpu.matmul %234, %16, %cst_71 {dimension_numbers = #tpu.dot_dimension_numbers<[1], [0], [0], [1], [0, 0, 1, 1], [], []>} : vector<8x32xf32>, vector<32x128xf32>, vector<8x128xf32> -> vector<8x128xf32>
    %236 = vector.broadcast %17 : vector<1x128xf32> to vector<8x128xf32>
    %237 = arith.addf %235, %236 : vector<8x128xf32>
    %c1_72 = arith.constant 1 : index
    %c0_73 = arith.constant 0 : index
    %c0_74 = arith.constant 0 : index
    %238 = vector.load %arg9[%c1_72, %c0_73, %c0_74] : memref<8x8x128xf32, #tpu.memory_space<vmem>>, vector<1x8x128xf32>
    %239 = vector.shape_cast %238 : vector<1x8x128xf32> to vector<8x128xf32>
    %240 = vector.shape_cast %237 : vector<8x128xf32> to vector<1x8x128xf32>
    tpu.vector_store %arg9[%c1_72, %c0_73, %c0_74], %240 {strides = array<i32>} : memref<8x8x128xf32, #tpu.memory_space<vmem>>, vector<1x8x128xf32>,
    %cst_75 = arith.constant -1.000000e+30 : f32
    %241 = vector.broadcast %cst_75 : f32 to vector<8x128xf32>
    %242 = arith.select %10, %237, %241 : vector<8x128xi1>, vector<8x128xf32>
    %cst_76 = arith.constant dense<0xFF800000> : vector<8xf32>
    %243 = vector.multi_reduction <maximumf>, %242, %cst_76 [1] : vector<8x128xf32> to vector<8xf32>
    %244 = vector.shape_cast %243 : vector<8xf32> to vector<8x1xf32>
    %245 = vector.broadcast %244 : vector<8x1xf32> to vector<8x128xf32>
    %246 = arith.cmpf oeq, %242, %245 : vector<8x128xf32>
    %cst_77 = arith.constant 1.280000e+02 : f32
    %247 = vector.broadcast %cst_77 : f32 to vector<8x128xf32>
    %248 = arith.select %246, %11, %247 : vector<8x128xi1>, vector<8x128xf32>
    %cst_78 = arith.constant dense<0x7F800000> : vector<8xf32>
    %249 = vector.multi_reduction <minimumf>, %248, %cst_78 [1] : vector<8x128xf32> to vector<8xf32>
    %250 = vector.shape_cast %249 : vector<8xf32> to vector<8x1xf32>
    %251 = vector.broadcast %250 : vector<8x1xf32> to vector<8x64xf32>
    %252 = arith.cmpf oeq, %1, %251 : vector<8x64xf32>
    %253 = arith.extui %252 : vector<8x64xi1> to vector<8x64xi32>
    %254 = arith.sitofp %253 : vector<8x64xi32> to vector<8x64xf32>
    %c1_79 = arith.constant 1 : index
    %c0_80 = arith.constant 0 : index
    %c0_81 = arith.constant 0 : index
    %255 = vector.load %arg2[%c1_79, %c0_80, %c0_81] : memref<8x8x1xf32, #tpu.memory_space<vmem>>, vector<1x8x1xf32>
    %256 = vector.shape_cast %255 : vector<1x8x1xf32> to vector<8x1xf32>
    %257 = vector.broadcast %256 : vector<8x1xf32> to vector<8x64xf32>
    %258 = arith.mulf %257, %181 : vector<8x64xf32>
    %cst_82 = arith.constant 1.000000e+00 : f32
    %259 = vector.broadcast %cst_82 : f32 to vector<8x1xf32>
    %260 = arith.subf %259, %256 : vector<8x1xf32>
    %261 = vector.broadcast %260 : vector<8x1xf32> to vector<8x64xf32>
    %262 = arith.mulf %261, %254 : vector<8x64xf32>
    %263 = arith.addf %258, %262 : vector<8x64xf32>
    %cst_83 = arith.constant dense<0.000000e+00> : vector<8x128xf32>
    %264 = tpu.matmul %263, %14, %cst_83 {dimension_numbers = #tpu.dot_dimension_numbers<[1], [0], [0], [1], [0, 0, 1, 1], [], []>} : vector<8x64xf32>, vector<64x128xf32>, vector<8x128xf32> -> vector<8x128xf32>
    %cst_84 = arith.constant dense<0.000000e+00> : vector<8x128xf32>
    %265 = tpu.matmul %234, %15, %cst_84 {dimension_numbers = #tpu.dot_dimension_numbers<[1], [0], [0], [1], [0, 0, 1, 1], [], []>} : vector<8x32xf32>, vector<32x128xf32>, vector<8x128xf32> -> vector<8x128xf32>
    %266 = arith.addf %264, %265 : vector<8x128xf32>
    %267 = math.tanh %266 : vector<8x128xf32>
    %268 = arith.negf %266 : vector<8x128xf32>
    %269 = math.exp %268 : vector<8x128xf32>
    %cst_85 = arith.constant 1.000000e+00 : f32
    %270 = vector.broadcast %cst_85 : f32 to vector<8x128xf32>
    %271 = arith.addf %270, %269 : vector<8x128xf32>
    %272 = arith.divf %270, %271 : vector<8x128xf32>
    %273 = arith.select %7, %267, %272 : vector<8x128xi1>, vector<8x128xf32>
    %274 = vector.extract_strided_slice %273 {offsets = [0, 0], sizes = [8, 32], strides = [1, 1]} : vector<8x128xf32> to vector<8x32xf32>
    %275 = vector.extract_strided_slice %273 {offsets = [0, 32], sizes = [8, 32], strides = [1, 1]} : vector<8x128xf32> to vector<8x32xf32>
    %276 = vector.extract_strided_slice %273 {offsets = [0, 64], sizes = [8, 32], strides = [1, 1]} : vector<8x128xf32> to vector<8x32xf32>
    %277 = vector.extract_strided_slice %273 {offsets = [0, 96], sizes = [8, 32], strides = [1, 1]} : vector<8x128xf32> to vector<8x32xf32>
    %278 = arith.mulf %275, %232 : vector<8x32xf32>
    %279 = arith.mulf %274, %276 : vector<8x32xf32>
    %280 = arith.addf %278, %279 : vector<8x32xf32>
    %281 = math.tanh %280 : vector<8x32xf32>
    %282 = arith.mulf %277, %281 : vector<8x32xf32>
    %cst_86 = arith.constant dense<0.000000e+00> : vector<8x128xf32>
    %283 = tpu.matmul %282, %16, %cst_86 {dimension_numbers = #tpu.dot_dimension_numbers<[1], [0], [0], [1], [0, 0, 1, 1], [], []>} : vector<8x32xf32>, vector<32x128xf32>, vector<8x128xf32> -> vector<8x128xf32>
    %284 = vector.broadcast %17 : vector<1x128xf32> to vector<8x128xf32>
    %285 = arith.addf %283, %284 : vector<8x128xf32>
    %c2_87 = arith.constant 2 : index
    %c0_88 = arith.constant 0 : index
    %c0_89 = arith.constant 0 : index
    %286 = vector.load %arg9[%c2_87, %c0_88, %c0_89] : memref<8x8x128xf32, #tpu.memory_space<vmem>>, vector<1x8x128xf32>
    %287 = vector.shape_cast %286 : vector<1x8x128xf32> to vector<8x128xf32>
    %288 = vector.shape_cast %285 : vector<8x128xf32> to vector<1x8x128xf32>
    tpu.vector_store %arg9[%c2_87, %c0_88, %c0_89], %288 {strides = array<i32>} : memref<8x8x128xf32, #tpu.memory_space<vmem>>, vector<1x8x128xf32>,
    %cst_90 = arith.constant -1.000000e+30 : f32
    %289 = vector.broadcast %cst_90 : f32 to vector<8x128xf32>
    %290 = arith.select %10, %285, %289 : vector<8x128xi1>, vector<8x128xf32>
    %cst_91 = arith.constant dense<0xFF800000> : vector<8xf32>
    %291 = vector.multi_reduction <maximumf>, %290, %cst_91 [1] : vector<8x128xf32> to vector<8xf32>
    %292 = vector.shape_cast %291 : vector<8xf32> to vector<8x1xf32>
    %293 = vector.broadcast %292 : vector<8x1xf32> to vector<8x128xf32>
    %294 = arith.cmpf oeq, %290, %293 : vector<8x128xf32>
    %cst_92 = arith.constant 1.280000e+02 : f32
    %295 = vector.broadcast %cst_92 : f32 to vector<8x128xf32>
    %296 = arith.select %294, %11, %295 : vector<8x128xi1>, vector<8x128xf32>
    %cst_93 = arith.constant dense<0x7F800000> : vector<8xf32>
    %297 = vector.multi_reduction <minimumf>, %296, %cst_93 [1] : vector<8x128xf32> to vector<8xf32>
    %298 = vector.shape_cast %297 : vector<8xf32> to vector<8x1xf32>
    %299 = vector.broadcast %298 : vector<8x1xf32> to vector<8x64xf32>
    %300 = arith.cmpf oeq, %1, %299 : vector<8x64xf32>
    %301 = arith.extui %300 : vector<8x64xi1> to vector<8x64xi32>
    %302 = arith.sitofp %301 : vector<8x64xi32> to vector<8x64xf32>
    %c2_94 = arith.constant 2 : index
    %c0_95 = arith.constant 0 : index
    %c0_96 = arith.constant 0 : index
    %303 = vector.load %arg2[%c2_94, %c0_95, %c0_96] : memref<8x8x1xf32, #tpu.memory_space<vmem>>, vector<1x8x1xf32>
    %304 = vector.shape_cast %303 : vector<1x8x1xf32> to vector<8x1xf32>
    %305 = vector.broadcast %304 : vector<8x1xf32> to vector<8x64xf32>
    %306 = arith.mulf %305, %187 : vector<8x64xf32>
    %cst_97 = arith.constant 1.000000e+00 : f32
    %307 = vector.broadcast %cst_97 : f32 to vector<8x1xf32>
    %308 = arith.subf %307, %304 : vector<8x1xf32>
    %309 = vector.broadcast %308 : vector<8x1xf32> to vector<8x64xf32>
    %310 = arith.mulf %309, %302 : vector<8x64xf32>
    %311 = arith.addf %306, %310 : vector<8x64xf32>
    %cst_98 = arith.constant dense<0.000000e+00> : vector<8x128xf32>
    %312 = tpu.matmul %311, %14, %cst_98 {dimension_numbers = #tpu.dot_dimension_numbers<[1], [0], [0], [1], [0, 0, 1, 1], [], []>} : vector<8x64xf32>, vector<64x128xf32>, vector<8x128xf32> -> vector<8x128xf32>
    %cst_99 = arith.constant dense<0.000000e+00> : vector<8x128xf32>
    %313 = tpu.matmul %282, %15, %cst_99 {dimension_numbers = #tpu.dot_dimension_numbers<[1], [0], [0], [1], [0, 0, 1, 1], [], []>} : vector<8x32xf32>, vector<32x128xf32>, vector<8x128xf32> -> vector<8x128xf32>
    %314 = arith.addf %312, %313 : vector<8x128xf32>
    %315 = math.tanh %314 : vector<8x128xf32>
    %316 = arith.negf %314 : vector<8x128xf32>
    %317 = math.exp %316 : vector<8x128xf32>
    %cst_100 = arith.constant 1.000000e+00 : f32
    %318 = vector.broadcast %cst_100 : f32 to vector<8x128xf32>
    %319 = arith.addf %318, %317 : vector<8x128xf32>
    %320 = arith.divf %318, %319 : vector<8x128xf32>
    %321 = arith.select %7, %315, %320 : vector<8x128xi1>, vector<8x128xf32>
    %322 = vector.extract_strided_slice %321 {offsets = [0, 0], sizes = [8, 32], strides = [1, 1]} : vector<8x128xf32> to vector<8x32xf32>
    %323 = vector.extract_strided_slice %321 {offsets = [0, 32], sizes = [8, 32], strides = [1, 1]} : vector<8x128xf32> to vector<8x32xf32>
    %324 = vector.extract_strided_slice %321 {offsets = [0, 64], sizes = [8, 32], strides = [1, 1]} : vector<8x128xf32> to vector<8x32xf32>
    %325 = vector.extract_strided_slice %321 {offsets = [0, 96], sizes = [8, 32], strides = [1, 1]} : vector<8x128xf32> to vector<8x32xf32>
    %326 = arith.mulf %323, %280 : vector<8x32xf32>
    %327 = arith.mulf %322, %324 : vector<8x32xf32>
    %328 = arith.addf %326, %327 : vector<8x32xf32>
    %329 = math.tanh %328 : vector<8x32xf32>
    %330 = arith.mulf %325, %329 : vector<8x32xf32>
    %cst_101 = arith.constant dense<0.000000e+00> : vector<8x128xf32>
    %331 = tpu.matmul %330, %16, %cst_101 {dimension_numbers = #tpu.dot_dimension_numbers<[1], [0], [0], [1], [0, 0, 1, 1], [], []>} : vector<8x32xf32>, vector<32x128xf32>, vector<8x128xf32> -> vector<8x128xf32>
    %332 = vector.broadcast %17 : vector<1x128xf32> to vector<8x128xf32>
    %333 = arith.addf %331, %332 : vector<8x128xf32>
    %c3_102 = arith.constant 3 : index
    %c0_103 = arith.constant 0 : index
    %c0_104 = arith.constant 0 : index
    %334 = vector.load %arg9[%c3_102, %c0_103, %c0_104] : memref<8x8x128xf32, #tpu.memory_space<vmem>>, vector<1x8x128xf32>
    %335 = vector.shape_cast %334 : vector<1x8x128xf32> to vector<8x128xf32>
    %336 = vector.shape_cast %333 : vector<8x128xf32> to vector<1x8x128xf32>
    tpu.vector_store %arg9[%c3_102, %c0_103, %c0_104], %336 {strides = array<i32>} : memref<8x8x128xf32, #tpu.memory_space<vmem>>, vector<1x8x128xf32>,
    %cst_105 = arith.constant -1.000000e+30 : f32
    %337 = vector.broadcast %cst_105 : f32 to vector<8x128xf32>
    %338 = arith.select %10, %333, %337 : vector<8x128xi1>, vector<8x128xf32>
    %cst_106 = arith.constant dense<0xFF800000> : vector<8xf32>
    %339 = vector.multi_reduction <maximumf>, %338, %cst_106 [1] : vector<8x128xf32> to vector<8xf32>
    %340 = vector.shape_cast %339 : vector<8xf32> to vector<8x1xf32>
    %341 = vector.broadcast %340 : vector<8x1xf32> to vector<8x128xf32>
    %342 = arith.cmpf oeq, %338, %341 : vector<8x128xf32>
    %cst_107 = arith.constant 1.280000e+02 : f32
    %343 = vector.broadcast %cst_107 : f32 to vector<8x128xf32>
    %344 = arith.select %342, %11, %343 : vector<8x128xi1>, vector<8x128xf32>
    %cst_108 = arith.constant dense<0x7F800000> : vector<8xf32>
    %345 = vector.multi_reduction <minimumf>, %344, %cst_108 [1] : vector<8x128xf32> to vector<8xf32>
    %346 = vector.shape_cast %345 : vector<8xf32> to vector<8x1xf32>
    %347 = vector.broadcast %346 : vector<8x1xf32> to vector<8x64xf32>
    %348 = arith.cmpf oeq, %1, %347 : vector<8x64xf32>
    %349 = arith.extui %348 : vector<8x64xi1> to vector<8x64xi32>
    %350 = arith.sitofp %349 : vector<8x64xi32> to vector<8x64xf32>
    %c3_109 = arith.constant 3 : index
    %c0_110 = arith.constant 0 : index
    %c0_111 = arith.constant 0 : index
    %351 = vector.load %arg2[%c3_109, %c0_110, %c0_111] : memref<8x8x1xf32, #tpu.memory_space<vmem>>, vector<1x8x1xf32>
    %352 = vector.shape_cast %351 : vector<1x8x1xf32> to vector<8x1xf32>
    %353 = vector.broadcast %352 : vector<8x1xf32> to vector<8x64xf32>
    %354 = arith.mulf %353, %193 : vector<8x64xf32>
    %cst_112 = arith.constant 1.000000e+00 : f32
    %355 = vector.broadcast %cst_112 : f32 to vector<8x1xf32>
    %356 = arith.subf %355, %352 : vector<8x1xf32>
    %357 = vector.broadcast %356 : vector<8x1xf32> to vector<8x64xf32>
    %358 = arith.mulf %357, %350 : vector<8x64xf32>
    %359 = arith.addf %354, %358 : vector<8x64xf32>
    %cst_113 = arith.constant dense<0.000000e+00> : vector<8x128xf32>
    %360 = tpu.matmul %359, %14, %cst_113 {dimension_numbers = #tpu.dot_dimension_numbers<[1], [0], [0], [1], [0, 0, 1, 1], [], []>} : vector<8x64xf32>, vector<64x128xf32>, vector<8x128xf32> -> vector<8x128xf32>
    %cst_114 = arith.constant dense<0.000000e+00> : vector<8x128xf32>
    %361 = tpu.matmul %330, %15, %cst_114 {dimension_numbers = #tpu.dot_dimension_numbers<[1], [0], [0], [1], [0, 0, 1, 1], [], []>} : vector<8x32xf32>, vector<32x128xf32>, vector<8x128xf32> -> vector<8x128xf32>
    %362 = arith.addf %360, %361 : vector<8x128xf32>
    %363 = math.tanh %362 : vector<8x128xf32>
    %364 = arith.negf %362 : vector<8x128xf32>
    %365 = math.exp %364 : vector<8x128xf32>
    %cst_115 = arith.constant 1.000000e+00 : f32
    %366 = vector.broadcast %cst_115 : f32 to vector<8x128xf32>
    %367 = arith.addf %366, %365 : vector<8x128xf32>
    %368 = arith.divf %366, %367 : vector<8x128xf32>
    %369 = arith.select %7, %363, %368 : vector<8x128xi1>, vector<8x128xf32>
    %370 = vector.extract_strided_slice %369 {offsets = [0, 0], sizes = [8, 32], strides = [1, 1]} : vector<8x128xf32> to vector<8x32xf32>
    %371 = vector.extract_strided_slice %369 {offsets = [0, 32], sizes = [8, 32], strides = [1, 1]} : vector<8x128xf32> to vector<8x32xf32>
    %372 = vector.extract_strided_slice %369 {offsets = [0, 64], sizes = [8, 32], strides = [1, 1]} : vector<8x128xf32> to vector<8x32xf32>
    %373 = vector.extract_strided_slice %369 {offsets = [0, 96], sizes = [8, 32], strides = [1, 1]} : vector<8x128xf32> to vector<8x32xf32>
    %374 = arith.mulf %371, %328 : vector<8x32xf32>
    %375 = arith.mulf %370, %372 : vector<8x32xf32>
    %376 = arith.addf %374, %375 : vector<8x32xf32>
    %377 = math.tanh %376 : vector<8x32xf32>
    %378 = arith.mulf %373, %377 : vector<8x32xf32>
    %cst_116 = arith.constant dense<0.000000e+00> : vector<8x128xf32>
    %379 = tpu.matmul %378, %16, %cst_116 {dimension_numbers = #tpu.dot_dimension_numbers<[1], [0], [0], [1], [0, 0, 1, 1], [], []>} : vector<8x32xf32>, vector<32x128xf32>, vector<8x128xf32> -> vector<8x128xf32>
    %380 = vector.broadcast %17 : vector<1x128xf32> to vector<8x128xf32>
    %381 = arith.addf %379, %380 : vector<8x128xf32>
    %c4_117 = arith.constant 4 : index
    %c0_118 = arith.constant 0 : index
    %c0_119 = arith.constant 0 : index
    %382 = vector.load %arg9[%c4_117, %c0_118, %c0_119] : memref<8x8x128xf32, #tpu.memory_space<vmem>>, vector<1x8x128xf32>
    %383 = vector.shape_cast %382 : vector<1x8x128xf32> to vector<8x128xf32>
    %384 = vector.shape_cast %381 : vector<8x128xf32> to vector<1x8x128xf32>
    tpu.vector_store %arg9[%c4_117, %c0_118, %c0_119], %384 {strides = array<i32>} : memref<8x8x128xf32, #tpu.memory_space<vmem>>, vector<1x8x128xf32>,
    %cst_120 = arith.constant -1.000000e+30 : f32
    %385 = vector.broadcast %cst_120 : f32 to vector<8x128xf32>
    %386 = arith.select %10, %381, %385 : vector<8x128xi1>, vector<8x128xf32>
    %cst_121 = arith.constant dense<0xFF800000> : vector<8xf32>
    %387 = vector.multi_reduction <maximumf>, %386, %cst_121 [1] : vector<8x128xf32> to vector<8xf32>
    %388 = vector.shape_cast %387 : vector<8xf32> to vector<8x1xf32>
    %389 = vector.broadcast %388 : vector<8x1xf32> to vector<8x128xf32>
    %390 = arith.cmpf oeq, %386, %389 : vector<8x128xf32>
    %cst_122 = arith.constant 1.280000e+02 : f32
    %391 = vector.broadcast %cst_122 : f32 to vector<8x128xf32>
    %392 = arith.select %390, %11, %391 : vector<8x128xi1>, vector<8x128xf32>
    %cst_123 = arith.constant dense<0x7F800000> : vector<8xf32>
    %393 = vector.multi_reduction <minimumf>, %392, %cst_123 [1] : vector<8x128xf32> to vector<8xf32>
    %394 = vector.shape_cast %393 : vector<8xf32> to vector<8x1xf32>
    %395 = vector.broadcast %394 : vector<8x1xf32> to vector<8x64xf32>
    %396 = arith.cmpf oeq, %1, %395 : vector<8x64xf32>
    %397 = arith.extui %396 : vector<8x64xi1> to vector<8x64xi32>
    %398 = arith.sitofp %397 : vector<8x64xi32> to vector<8x64xf32>
    %c4_124 = arith.constant 4 : index
    %c0_125 = arith.constant 0 : index
    %c0_126 = arith.constant 0 : index
    %399 = vector.load %arg2[%c4_124, %c0_125, %c0_126] : memref<8x8x1xf32, #tpu.memory_space<vmem>>, vector<1x8x1xf32>
    %400 = vector.shape_cast %399 : vector<1x8x1xf32> to vector<8x1xf32>
    %401 = vector.broadcast %400 : vector<8x1xf32> to vector<8x64xf32>
    %402 = arith.mulf %401, %199 : vector<8x64xf32>
    %cst_127 = arith.constant 1.000000e+00 : f32
    %403 = vector.broadcast %cst_127 : f32 to vector<8x1xf32>
    %404 = arith.subf %403, %400 : vector<8x1xf32>
    %405 = vector.broadcast %404 : vector<8x1xf32> to vector<8x64xf32>
    %406 = arith.mulf %405, %398 : vector<8x64xf32>
    %407 = arith.addf %402, %406 : vector<8x64xf32>
    %cst_128 = arith.constant dense<0.000000e+00> : vector<8x128xf32>
    %408 = tpu.matmul %407, %14, %cst_128 {dimension_numbers = #tpu.dot_dimension_numbers<[1], [0], [0], [1], [0, 0, 1, 1], [], []>} : vector<8x64xf32>, vector<64x128xf32>, vector<8x128xf32> -> vector<8x128xf32>
    %cst_129 = arith.constant dense<0.000000e+00> : vector<8x128xf32>
    %409 = tpu.matmul %378, %15, %cst_129 {dimension_numbers = #tpu.dot_dimension_numbers<[1], [0], [0], [1], [0, 0, 1, 1], [], []>} : vector<8x32xf32>, vector<32x128xf32>, vector<8x128xf32> -> vector<8x128xf32>
    %410 = arith.addf %408, %409 : vector<8x128xf32>
    %411 = math.tanh %410 : vector<8x128xf32>
    %412 = arith.negf %410 : vector<8x128xf32>
    %413 = math.exp %412 : vector<8x128xf32>
    %cst_130 = arith.constant 1.000000e+00 : f32
    %414 = vector.broadcast %cst_130 : f32 to vector<8x128xf32>
    %415 = arith.addf %414, %413 : vector<8x128xf32>
    %416 = arith.divf %414, %415 : vector<8x128xf32>
    %417 = arith.select %7, %411, %416 : vector<8x128xi1>, vector<8x128xf32>
    %418 = vector.extract_strided_slice %417 {offsets = [0, 0], sizes = [8, 32], strides = [1, 1]} : vector<8x128xf32> to vector<8x32xf32>
    %419 = vector.extract_strided_slice %417 {offsets = [0, 32], sizes = [8, 32], strides = [1, 1]} : vector<8x128xf32> to vector<8x32xf32>
    %420 = vector.extract_strided_slice %417 {offsets = [0, 64], sizes = [8, 32], strides = [1, 1]} : vector<8x128xf32> to vector<8x32xf32>
    %421 = vector.extract_strided_slice %417 {offsets = [0, 96], sizes = [8, 32], strides = [1, 1]} : vector<8x128xf32> to vector<8x32xf32>
    %422 = arith.mulf %419, %376 : vector<8x32xf32>
    %423 = arith.mulf %418, %420 : vector<8x32xf32>
    %424 = arith.addf %422, %423 : vector<8x32xf32>
    %425 = math.tanh %424 : vector<8x32xf32>
    %426 = arith.mulf %421, %425 : vector<8x32xf32>
    %cst_131 = arith.constant dense<0.000000e+00> : vector<8x128xf32>
    %427 = tpu.matmul %426, %16, %cst_131 {dimension_numbers = #tpu.dot_dimension_numbers<[1], [0], [0], [1], [0, 0, 1, 1], [], []>} : vector<8x32xf32>, vector<32x128xf32>, vector<8x128xf32> -> vector<8x128xf32>
    %428 = vector.broadcast %17 : vector<1x128xf32> to vector<8x128xf32>
    %429 = arith.addf %427, %428 : vector<8x128xf32>
    %c5_132 = arith.constant 5 : index
    %c0_133 = arith.constant 0 : index
    %c0_134 = arith.constant 0 : index
    %430 = vector.load %arg9[%c5_132, %c0_133, %c0_134] : memref<8x8x128xf32, #tpu.memory_space<vmem>>, vector<1x8x128xf32>
    %431 = vector.shape_cast %430 : vector<1x8x128xf32> to vector<8x128xf32>
    %432 = vector.shape_cast %429 : vector<8x128xf32> to vector<1x8x128xf32>
    tpu.vector_store %arg9[%c5_132, %c0_133, %c0_134], %432 {strides = array<i32>} : memref<8x8x128xf32, #tpu.memory_space<vmem>>, vector<1x8x128xf32>,
    %cst_135 = arith.constant -1.000000e+30 : f32
    %433 = vector.broadcast %cst_135 : f32 to vector<8x128xf32>
    %434 = arith.select %10, %429, %433 : vector<8x128xi1>, vector<8x128xf32>
    %cst_136 = arith.constant dense<0xFF800000> : vector<8xf32>
    %435 = vector.multi_reduction <maximumf>, %434, %cst_136 [1] : vector<8x128xf32> to vector<8xf32>
    %436 = vector.shape_cast %435 : vector<8xf32> to vector<8x1xf32>
    %437 = vector.broadcast %436 : vector<8x1xf32> to vector<8x128xf32>
    %438 = arith.cmpf oeq, %434, %437 : vector<8x128xf32>
    %cst_137 = arith.constant 1.280000e+02 : f32
    %439 = vector.broadcast %cst_137 : f32 to vector<8x128xf32>
    %440 = arith.select %438, %11, %439 : vector<8x128xi1>, vector<8x128xf32>
    %cst_138 = arith.constant dense<0x7F800000> : vector<8xf32>
    %441 = vector.multi_reduction <minimumf>, %440, %cst_138 [1] : vector<8x128xf32> to vector<8xf32>
    %442 = vector.shape_cast %441 : vector<8xf32> to vector<8x1xf32>
    %443 = vector.broadcast %442 : vector<8x1xf32> to vector<8x64xf32>
    %444 = arith.cmpf oeq, %1, %443 : vector<8x64xf32>
    %445 = arith.extui %444 : vector<8x64xi1> to vector<8x64xi32>
    %446 = arith.sitofp %445 : vector<8x64xi32> to vector<8x64xf32>
    %c5_139 = arith.constant 5 : index
    %c0_140 = arith.constant 0 : index
    %c0_141 = arith.constant 0 : index
    %447 = vector.load %arg2[%c5_139, %c0_140, %c0_141] : memref<8x8x1xf32, #tpu.memory_space<vmem>>, vector<1x8x1xf32>
    %448 = vector.shape_cast %447 : vector<1x8x1xf32> to vector<8x1xf32>
    %449 = vector.broadcast %448 : vector<8x1xf32> to vector<8x64xf32>
    %450 = arith.mulf %449, %205 : vector<8x64xf32>
    %cst_142 = arith.constant 1.000000e+00 : f32
    %451 = vector.broadcast %cst_142 : f32 to vector<8x1xf32>
    %452 = arith.subf %451, %448 : vector<8x1xf32>
    %453 = vector.broadcast %452 : vector<8x1xf32> to vector<8x64xf32>
    %454 = arith.mulf %453, %446 : vector<8x64xf32>
    %455 = arith.addf %450, %454 : vector<8x64xf32>
    %cst_143 = arith.constant dense<0.000000e+00> : vector<8x128xf32>
    %456 = tpu.matmul %455, %14, %cst_143 {dimension_numbers = #tpu.dot_dimension_numbers<[1], [0], [0], [1], [0, 0, 1, 1], [], []>} : vector<8x64xf32>, vector<64x128xf32>, vector<8x128xf32> -> vector<8x128xf32>
    %cst_144 = arith.constant dense<0.000000e+00> : vector<8x128xf32>
    %457 = tpu.matmul %426, %15, %cst_144 {dimension_numbers = #tpu.dot_dimension_numbers<[1], [0], [0], [1], [0, 0, 1, 1], [], []>} : vector<8x32xf32>, vector<32x128xf32>, vector<8x128xf32> -> vector<8x128xf32>
    %458 = arith.addf %456, %457 : vector<8x128xf32>
    %459 = math.tanh %458 : vector<8x128xf32>
    %460 = arith.negf %458 : vector<8x128xf32>
    %461 = math.exp %460 : vector<8x128xf32>
    %cst_145 = arith.constant 1.000000e+00 : f32
    %462 = vector.broadcast %cst_145 : f32 to vector<8x128xf32>
    %463 = arith.addf %462, %461 : vector<8x128xf32>
    %464 = arith.divf %462, %463 : vector<8x128xf32>
    %465 = arith.select %7, %459, %464 : vector<8x128xi1>, vector<8x128xf32>
    %466 = vector.extract_strided_slice %465 {offsets = [0, 0], sizes = [8, 32], strides = [1, 1]} : vector<8x128xf32> to vector<8x32xf32>
    %467 = vector.extract_strided_slice %465 {offsets = [0, 32], sizes = [8, 32], strides = [1, 1]} : vector<8x128xf32> to vector<8x32xf32>
    %468 = vector.extract_strided_slice %465 {offsets = [0, 64], sizes = [8, 32], strides = [1, 1]} : vector<8x128xf32> to vector<8x32xf32>
    %469 = vector.extract_strided_slice %465 {offsets = [0, 96], sizes = [8, 32], strides = [1, 1]} : vector<8x128xf32> to vector<8x32xf32>
    %470 = arith.mulf %467, %424 : vector<8x32xf32>
    %471 = arith.mulf %466, %468 : vector<8x32xf32>
    %472 = arith.addf %470, %471 : vector<8x32xf32>
    %473 = math.tanh %472 : vector<8x32xf32>
    %474 = arith.mulf %469, %473 : vector<8x32xf32>
    %cst_146 = arith.constant dense<0.000000e+00> : vector<8x128xf32>
    %475 = tpu.matmul %474, %16, %cst_146 {dimension_numbers = #tpu.dot_dimension_numbers<[1], [0], [0], [1], [0, 0, 1, 1], [], []>} : vector<8x32xf32>, vector<32x128xf32>, vector<8x128xf32> -> vector<8x128xf32>
    %476 = vector.broadcast %17 : vector<1x128xf32> to vector<8x128xf32>
    %477 = arith.addf %475, %476 : vector<8x128xf32>
    %c6_147 = arith.constant 6 : index
    %c0_148 = arith.constant 0 : index
    %c0_149 = arith.constant 0 : index
    %478 = vector.load %arg9[%c6_147, %c0_148, %c0_149] : memref<8x8x128xf32, #tpu.memory_space<vmem>>, vector<1x8x128xf32>
    %479 = vector.shape_cast %478 : vector<1x8x128xf32> to vector<8x128xf32>
    %480 = vector.shape_cast %477 : vector<8x128xf32> to vector<1x8x128xf32>
    tpu.vector_store %arg9[%c6_147, %c0_148, %c0_149], %480 {strides = array<i32>} : memref<8x8x128xf32, #tpu.memory_space<vmem>>, vector<1x8x128xf32>,
    %cst_150 = arith.constant -1.000000e+30 : f32
    %481 = vector.broadcast %cst_150 : f32 to vector<8x128xf32>
    %482 = arith.select %10, %477, %481 : vector<8x128xi1>, vector<8x128xf32>
    %cst_151 = arith.constant dense<0xFF800000> : vector<8xf32>
    %483 = vector.multi_reduction <maximumf>, %482, %cst_151 [1] : vector<8x128xf32> to vector<8xf32>
    %484 = vector.shape_cast %483 : vector<8xf32> to vector<8x1xf32>
    %485 = vector.broadcast %484 : vector<8x1xf32> to vector<8x128xf32>
    %486 = arith.cmpf oeq, %482, %485 : vector<8x128xf32>
    %cst_152 = arith.constant 1.280000e+02 : f32
    %487 = vector.broadcast %cst_152 : f32 to vector<8x128xf32>
    %488 = arith.select %486, %11, %487 : vector<8x128xi1>, vector<8x128xf32>
    %cst_153 = arith.constant dense<0x7F800000> : vector<8xf32>
    %489 = vector.multi_reduction <minimumf>, %488, %cst_153 [1] : vector<8x128xf32> to vector<8xf32>
    %490 = vector.shape_cast %489 : vector<8xf32> to vector<8x1xf32>
    %491 = vector.broadcast %490 : vector<8x1xf32> to vector<8x64xf32>
    %492 = arith.cmpf oeq, %1, %491 : vector<8x64xf32>
    %493 = arith.extui %492 : vector<8x64xi1> to vector<8x64xi32>
    %494 = arith.sitofp %493 : vector<8x64xi32> to vector<8x64xf32>
    %c6_154 = arith.constant 6 : index
    %c0_155 = arith.constant 0 : index
    %c0_156 = arith.constant 0 : index
    %495 = vector.load %arg2[%c6_154, %c0_155, %c0_156] : memref<8x8x1xf32, #tpu.memory_space<vmem>>, vector<1x8x1xf32>
    %496 = vector.shape_cast %495 : vector<1x8x1xf32> to vector<8x1xf32>
    %497 = vector.broadcast %496 : vector<8x1xf32> to vector<8x64xf32>
    %498 = arith.mulf %497, %211 : vector<8x64xf32>
    %cst_157 = arith.constant 1.000000e+00 : f32
    %499 = vector.broadcast %cst_157 : f32 to vector<8x1xf32>
    %500 = arith.subf %499, %496 : vector<8x1xf32>
    %501 = vector.broadcast %500 : vector<8x1xf32> to vector<8x64xf32>
    %502 = arith.mulf %501, %494 : vector<8x64xf32>
    %503 = arith.addf %498, %502 : vector<8x64xf32>
    %cst_158 = arith.constant dense<0.000000e+00> : vector<8x128xf32>
    %504 = tpu.matmul %503, %14, %cst_158 {dimension_numbers = #tpu.dot_dimension_numbers<[1], [0], [0], [1], [0, 0, 1, 1], [], []>} : vector<8x64xf32>, vector<64x128xf32>, vector<8x128xf32> -> vector<8x128xf32>
    %cst_159 = arith.constant dense<0.000000e+00> : vector<8x128xf32>
    %505 = tpu.matmul %474, %15, %cst_159 {dimension_numbers = #tpu.dot_dimension_numbers<[1], [0], [0], [1], [0, 0, 1, 1], [], []>} : vector<8x32xf32>, vector<32x128xf32>, vector<8x128xf32> -> vector<8x128xf32>
    %506 = arith.addf %504, %505 : vector<8x128xf32>
    %507 = math.tanh %506 : vector<8x128xf32>
    %508 = arith.negf %506 : vector<8x128xf32>
    %509 = math.exp %508 : vector<8x128xf32>
    %cst_160 = arith.constant 1.000000e+00 : f32
    %510 = vector.broadcast %cst_160 : f32 to vector<8x128xf32>
    %511 = arith.addf %510, %509 : vector<8x128xf32>
    %512 = arith.divf %510, %511 : vector<8x128xf32>
    %513 = arith.select %7, %507, %512 : vector<8x128xi1>, vector<8x128xf32>
    %514 = vector.extract_strided_slice %513 {offsets = [0, 0], sizes = [8, 32], strides = [1, 1]} : vector<8x128xf32> to vector<8x32xf32>
    %515 = vector.extract_strided_slice %513 {offsets = [0, 32], sizes = [8, 32], strides = [1, 1]} : vector<8x128xf32> to vector<8x32xf32>
    %516 = vector.extract_strided_slice %513 {offsets = [0, 64], sizes = [8, 32], strides = [1, 1]} : vector<8x128xf32> to vector<8x32xf32>
    %517 = vector.extract_strided_slice %513 {offsets = [0, 96], sizes = [8, 32], strides = [1, 1]} : vector<8x128xf32> to vector<8x32xf32>
    %518 = arith.mulf %515, %472 : vector<8x32xf32>
    %519 = arith.mulf %514, %516 : vector<8x32xf32>
    %520 = arith.addf %518, %519 : vector<8x32xf32>
    %521 = math.tanh %520 : vector<8x32xf32>
    %522 = arith.mulf %517, %521 : vector<8x32xf32>
    %cst_161 = arith.constant dense<0.000000e+00> : vector<8x128xf32>
    %523 = tpu.matmul %522, %16, %cst_161 {dimension_numbers = #tpu.dot_dimension_numbers<[1], [0], [0], [1], [0, 0, 1, 1], [], []>} : vector<8x32xf32>, vector<32x128xf32>, vector<8x128xf32> -> vector<8x128xf32>
    %524 = vector.broadcast %17 : vector<1x128xf32> to vector<8x128xf32>
    %525 = arith.addf %523, %524 : vector<8x128xf32>
    %c7 = arith.constant 7 : index
    %c0_162 = arith.constant 0 : index
    %c0_163 = arith.constant 0 : index
    %526 = vector.load %arg9[%c7, %c0_162, %c0_163] : memref<8x8x128xf32, #tpu.memory_space<vmem>>, vector<1x8x128xf32>
    %527 = vector.shape_cast %526 : vector<1x8x128xf32> to vector<8x128xf32>
    %528 = vector.shape_cast %525 : vector<8x128xf32> to vector<1x8x128xf32>
    tpu.vector_store %arg9[%c7, %c0_162, %c0_163], %528 {strides = array<i32>} : memref<8x8x128xf32, #tpu.memory_space<vmem>>, vector<1x8x128xf32>,
    return
  }
}

</mosaic_0001>

<llo_original>
// kernel: seq2seq_forward.1
$region0: #{seq2seq_forward.1}
  #allocation0 [shape = 'u32[]', space=smem, size = 0x4, offset = 0x4, fixed_abs, tag = 'smem constant byte address 0x4 - core index']
  #allocation1 [shape = 'u32[144,128]{1,0:T(1,128)}', space=vmem, size = 0x12000, scoped, tag = 'internal scratch']
  %s0 = inlined_call_operand.vmem [shape: s32[6,8,1], index: 0, kind: input, shape index: {}]
  %s1 = inlined_call_operand.vmem [shape: s32[8,8,1], index: 1, kind: input, shape index: {}]
  %s2 = inlined_call_operand.vmem [shape: f32[8,8,1], index: 2, kind: input, shape index: {}]
  %s3 = inlined_call_operand.vmem [shape: f32[64,128], index: 3, kind: input, shape index: {}]
  %s4 = inlined_call_operand.vmem [shape: f32[32,128], index: 4, kind: input, shape index: {}]
  %s5 = inlined_call_operand.vmem [shape: f32[64,128], index: 5, kind: input, shape index: {}]
  %s6 = inlined_call_operand.vmem [shape: f32[32,128], index: 6, kind: input, shape index: {}]
  %s7 = inlined_call_operand.vmem [shape: f32[32,128], index: 7, kind: input, shape index: {}]
  %s8 = inlined_call_operand.vmem [shape: f32[1,128], index: 8, kind: input, shape index: {}]
  %s9 = inlined_call_operand.hbm [shape: f32[8,8,128], index: 9, kind: output, shape index: {}]
  %s10 = sld [smem:[#allocation0]]
  $region46: #{seq2seq_forward.1} parent=0
    _
  %s12 = ssub.s32 1, %s10
  %s13 = scalar_select 0, %s12, %s10
  $region1: #{seq2seq_forward.1} parent=0
    #allocation2 [shape = 'u8[32768]{0}', space=vmem, size = 0x8000, scoped, tag = 'output window, operand 0, single buffered']
    #allocation3 [shape = 's32[1]{0}', space=sflag, size = 0x4, scoped, tag = 'scoped memory for seq2seq_forward.1']
    %14 = vsyncpa [#allocation3], 0
    // Predicated region
    $region2: #{seq2seq_forward.1} parent=1 // pred_check
      _
    $region3: #{seq2seq_forward.1} parent=1 // pred_check_branch
      %16 = sbr.rel (0) target = $region5
    $region4: #{seq2seq_forward.1} parent=1 // pred_region
      _
    $region5: #{seq2seq_forward.1} parent=1 // pred_fallthru
      _
    // Predicated region
    $region6: #{seq2seq_forward.1} parent=1 // pred_check
      _
    $region7: #{seq2seq_forward.1} parent=1 // pred_check_branch
      %18 = sbr.rel (0) target = $region9
    $region8: #{seq2seq_forward.1} parent=1 // pred_region
      _
    $region9: #{seq2seq_forward.1} parent=1 // pred_fallthru
      _
    // Predicated region
    $region10: #{seq2seq_forward.1} parent=1 // pred_check
      _
    $region11: #{seq2seq_forward.1} parent=1 // pred_check_branch
      %20 = sbr.rel (0) target = $region13
    $region12: #{seq2seq_forward.1} parent=1 // pred_region
      _
    $region13: #{seq2seq_forward.1} parent=1 // pred_fallthru
      _
    // Predicated region
    $region14: #{seq2seq_forward.1} parent=1 // pred_check
      _
    $region15: #{seq2seq_forward.1} parent=1 // pred_check_branch
      %22 = sbr.rel (0) target = $region17
    $region16: #{seq2seq_forward.1} parent=1 // pred_region
      _
    $region17: #{seq2seq_forward.1} parent=1 // pred_fallthru
      _
    // Predicated region
    $region18: #{seq2seq_forward.1} parent=1 // pred_check
      _
    $region19: #{seq2seq_forward.1} parent=1 // pred_check_branch
      %24 = sbr.rel (0) target = $region21
    $region20: #{seq2seq_forward.1} parent=1 // pred_region
      _
    $region21: #{seq2seq_forward.1} parent=1 // pred_fallthru
      _
    // Predicated region
    $region22: #{seq2seq_forward.1} parent=1 // pred_check
      _
    $region23: #{seq2seq_forward.1} parent=1 // pred_check_branch
      %26 = sbr.rel (0) target = $region25
    $region24: #{seq2seq_forward.1} parent=1 // pred_region
      _
    $region25: #{seq2seq_forward.1} parent=1 // pred_fallthru
      _
    // Predicated region
    $region26: #{seq2seq_forward.1} parent=1 // pred_check
      _
    $region27: #{seq2seq_forward.1} parent=1 // pred_check_branch
      %28 = sbr.rel (0) target = $region29
    $region28: #{seq2seq_forward.1} parent=1 // pred_region
      _
    $region29: #{seq2seq_forward.1} parent=1 // pred_fallthru
      _
    // Predicated region
    $region30: #{seq2seq_forward.1} parent=1 // pred_check
      _
    $region31: #{seq2seq_forward.1} parent=1 // pred_check_branch
      %30 = sbr.rel (0) target = $region33
    $region32: #{seq2seq_forward.1} parent=1 // pred_region
      _
    $region33: #{seq2seq_forward.1} parent=1 // pred_fallthru
      _
    // Predicated region
    $region34: #{seq2seq_forward.1} parent=1 // pred_check
      _
    $region35: #{seq2seq_forward.1} parent=1 // pred_check_branch
      %32 = sbr.rel (0) target = $region37
    $region36: #{seq2seq_forward.1} parent=1 // pred_region
      _
    $region37: #{seq2seq_forward.1} parent=1 // pred_fallthru
      _
    %v33 = vlaneseq
    %v34 = vand.u32 %v33, 127
    %v35 = vcvt.s32.f32 %v34
    %vm36 = vcmp.ge.s32.totalorder %v34, 64
    %vm37 = vcmp.lt.s32.totalorder %v34, 96
    %vm38 = vmand %vm36, %vm37
    %vm39 = vcmp.lt.s32.totalorder %v34, 64
    %v40 = vld [vmem:[%s3] sm:$0xff]
    %v41 = vld [vmem:[%s3 + $0x8] sm:$0xff]
    %v42 = vld [vmem:[%s3 + $0x10] sm:$0xff]
    %v43 = vld [vmem:[%s3 + $0x18] sm:$0xff]
    %v44 = vld [vmem:[%s3 + $0x20] sm:$0xff]
    %v45 = vld [vmem:[%s3 + $0x28] sm:$0xff]
    %v46 = vld [vmem:[%s3 + $0x30] sm:$0xff]
    %v47 = vld [vmem:[%s3 + $0x38] sm:$0xff]
    %v48 = vld [vmem:[%s4] sm:$0xff]
    %v49 = vld [vmem:[%s4 + $0x8] sm:$0xff]
    %v50 = vld [vmem:[%s4 + $0x10] sm:$0xff]
    %v51 = vld [vmem:[%s4 + $0x18] sm:$0xff]
    %v52 = vld [vmem:[%s5] sm:$0xff]
    %v53 = vld [vmem:[%s5 + $0x8] sm:$0xff]
    %v54 = vld [vmem:[%s5 + $0x10] sm:$0xff]
    %v55 = vld [vmem:[%s5 + $0x18] sm:$0xff]
    %v56 = vld [vmem:[%s5 + $0x20] sm:$0xff]
    %v57 = vld [vmem:[%s5 + $0x28] sm:$0xff]
    %v58 = vld [vmem:[%s5 + $0x30] sm:$0xff]
    %v59 = vld [vmem:[%s5 + $0x38] sm:$0xff]
    %v60 = vld [vmem:[%s6] sm:$0xff]
    %v61 = vld [vmem:[%s6 + $0x8] sm:$0xff]
    %v62 = vld [vmem:[%s6 + $0x10] sm:$0xff]
    %v63 = vld [vmem:[%s6 + $0x18] sm:$0xff]
    %v64 = vld [vmem:[%s7] sm:$0xff]
    %v65 = vld [vmem:[%s7 + $0x8] sm:$0xff]
    %v66 = vld [vmem:[%s7 + $0x10] sm:$0xff]
    %v67 = vld [vmem:[%s7 + $0x18] sm:$0xff]
    %v68 = vld [vmem:[%s8] sm:$0x1]
    %v69 = vld [vmem:[%s0] sm:$0xff]
    %70 = vset.pattern.permute.xlu0 0
    %71 = vperm.xlu0 %70, %v69
    %v72 = vpop.permute.xlu0 %71
    %vm73 = vcmp.eq.s32.totalorder %v72, %v34
    %v74 = vsel %vm73, 1, 0
    %v75 = vcvt.s32.f32 %v74
    %s76 = scalar_lea.vmem %s0, 8
    %v77 = vld [vmem:[%s76] sm:$0xff]
    %78 = vset.pattern.permute.xlu0 0
    %79 = vperm.xlu0 %78, %v77
    %v80 = vpop.permute.xlu0 %79
    %vm81 = vcmp.eq.s32.totalorder %v80, %v34
    %v82 = vsel %vm81, 1, 0
    %v83 = vcvt.s32.f32 %v82
    %s84 = scalar_lea.vmem %s0, 16
    %v85 = vld [vmem:[%s84] sm:$0xff]
    %86 = vset.pattern.permute.xlu0 0
    %87 = vperm.xlu0 %86, %v85
    %v88 = vpop.permute.xlu0 %87
    %vm89 = vcmp.eq.s32.totalorder %v88, %v34
    %v90 = vsel %vm89, 1, 0
    %v91 = vcvt.s32.f32 %v90
    %s92 = scalar_lea.vmem %s0, 24
    %v93 = vld [vmem:[%s92] sm:$0xff]
    %94 = vset.pattern.permute.xlu0 0
    %95 = vperm.xlu0 %94, %v93
    %v96 = vpop.permute.xlu0 %95
    %vm97 = vcmp.eq.s32.totalorder %v96, %v34
    %v98 = vsel %vm97, 1, 0
    %v99 = vcvt.s32.f32 %v98
    %s100 = scalar_lea.vmem %s0, 32
    %v101 = vld [vmem:[%s100] sm:$0xff]
    %102 = vset.pattern.permute.xlu0 0
    %103 = vperm.xlu0 %102, %v101
    %v104 = vpop.permute.xlu0 %103
    %vm105 = vcmp.eq.s32.totalorder %v104, %v34
    %v106 = vsel %vm105, 1, 0
    %v107 = vcvt.s32.f32 %v106
    %s108 = scalar_lea.vmem %s0, 40
    %v109 = vld [vmem:[%s108] sm:$0xff]
    %110 = vset.pattern.permute.xlu0 0
    %111 = vperm.xlu0 %110, %v109
    %v112 = vpop.permute.xlu0 %111
    %vm113 = vcmp.eq.s32.totalorder %v112, %v34
    %v114 = vsel %vm113, 1, 0
    %v115 = vcvt.s32.f32 %v114
    %vm116 = vcmask 261120
    %v118 = vsel %vm116, 0.0, 0
    %120 = vmatprep.subr.mxu0 0.0
    %121 = vmatpush1.msra.mxu0 %v48
    %122 = vmatprep.subr.mxu0 0.0
    %123 = vmatpush1.msra.mxu0 %v49
    %124 = vmatprep.subr.mxu0 0.0
    %125 = vmatpush1.msra.mxu0 %v50
    %126 = vmatprep.subr.mxu0 0.0
    %127 = vmatpush1.msra.mxu0 %v51
    %128 = vmatprep.subr.mxu0 0.0
    %129 = vmatpush1.msra.mxu0 0.0
    %130 = vmatprep.subr.mxu0 0.0
    %131 = vmatpush1.msra.mxu0 0.0
    %132 = vmatprep.subr.mxu0 0.0
    %133 = vmatpush1.msra.mxu0 0.0
    %134 = vmatprep.subr.mxu0 0.0
    %135 = vmatpush1.msra.mxu0 0.0
    %136 = vmatprep.subr.mxu0 0.0
    %137 = vmatpush1.msra.mxu0 0.0
    %138 = vmatprep.subr.mxu0 0.0
    %139 = vmatpush1.msra.mxu0 0.0
    %140 = vmatprep.subr.mxu0 0.0
    %141 = vmatpush1.msra.mxu0 0.0
    %142 = vmatprep.subr.mxu0 0.0
    %143 = vmatpush1.msra.mxu0 0.0
    %144 = vmatprep.subr.mxu0 0.0
    %145 = vmatpush1.msra.mxu0 0.0
    %146 = vmatprep.subr.mxu0 0.0
    %147 = vmatpush1.msra.mxu0 0.0
    %148 = vmatprep.subr.mxu0 0.0
    %149 = vmatpush1.msra.mxu0 0.0
    %150 = vmatprep.subr.mxu0 0.0
    %151 = vmatpush1.msra.mxu0 0.0
    %152 = vmatprep.subr.mxu0 0.0
    %153 = vmatpush1.msra.mxu0 0.0
    %154 = vmatprep.subr.mxu0 0.0
    %155 = vmatpush1.msra.mxu0 0.0
    %156 = vmatprep.subr.mxu0 0.0
    %157 = vmatpush1.msra.mxu0 0.0
    %158 = vmatprep.subr.mxu0 0.0
    %159 = vmatpush1.msra.mxu0 0.0
    %160 = vmatprep.subr.mxu0 0.0
    %161 = vmatpush1.msra.mxu0 0.0
    %162 = vmatprep.subr.mxu0 0.0
    %163 = vmatpush1.msra.mxu0 0.0
    %164 = vmatprep.subr.mxu0 0.0
    %165 = vmatpush1.msra.mxu0 0.0
    %166 = vmatprep.subr.mxu0 0.0
    %167 = vmatpush1.msra.mxu0 0.0
    %168 = vmatprep.subr.mxu0 0.0
    %169 = vmatpush1.msra.mxu0 0.0
    %170 = vmatprep.subr.mxu0 0.0
    %171 = vmatpush1.msra.mxu0 0.0
    %172 = vmatprep.subr.mxu0 0.0
    %173 = vmatpush1.msra.mxu0 0.0
    %174 = vmatprep.subr.mxu0 0.0
    %175 = vmatpush1.msra.mxu0 0.0
    %176 = vmatprep.subr.mxu0 0.0
    %177 = vmatpush1.msra.mxu0 0.0
    %178 = vmatprep.subr.mxu0 0.0
    %179 = vmatpush1.msra.mxu0 0.0
    %180 = vmatprep.subr.mxu0 0.0
    %181 = vmatpush1.msra.mxu0 0.0
    %182 = vmatprep.subr.mxu0 0.0
    %183 = vmatpush1.msra.mxu0 0.0
    %184 = vmatprep.mubr.f32.mxu0 0.0
    %185 = vmatmul.mubr.f32.gmra.mrb[0].mxu0 %v118
    %v186 = vpop.f32.mrb[0].mxu0
    %v187 = vadd.f32 0.0, %v186
    %v188 = vpop.f32.mrb[0].mxu0
    %189 = vdwg.mxu0
    %vm190 = vcmask 523264
    %v192 = vsel %vm190, %v75, 0
    %194 = vmatprep.subr.mxu0 0.0
    %195 = vmatpush1.msra.mxu0 %v40
    %196 = vmatprep.subr.mxu0 0.0
    %197 = vmatpush1.msra.mxu0 %v41
    %198 = vmatprep.subr.mxu0 0.0
    %199 = vmatpush1.msra.mxu0 %v42
    %200 = vmatprep.subr.mxu0 0.0
    %201 = vmatpush1.msra.mxu0 %v43
    %202 = vmatprep.subr.mxu0 0.0
    %203 = vmatpush1.msra.mxu0 %v44
    %204 = vmatprep.subr.mxu0 0.0
    %205 = vmatpush1.msra.mxu0 %v45
    %206 = vmatprep.subr.mxu0 0.0
    %207 = vmatpush1.msra.mxu0 %v46
    %208 = vmatprep.subr.mxu0 0.0
    %209 = vmatpush1.msra.mxu0 %v47
    %210 = vmatprep.subr.mxu0 0.0
    %211 = vmatpush1.msra.mxu0 0.0
    %212 = vmatprep.subr.mxu0 0.0
    %213 = vmatpush1.msra.mxu0 0.0
    %214 = vmatprep.subr.mxu0 0.0
    %215 = vmatpush1.msra.mxu0 0.0
    %216 = vmatprep.subr.mxu0 0.0
    %217 = vmatpush1.msra.mxu0 0.0
    %218 = vmatprep.subr.mxu0 0.0
    %219 = vmatpush1.msra.mxu0 0.0
    %220 = vmatprep.subr.mxu0 0.0
    %221 = vmatpush1.msra.mxu0 0.0
    %222 = vmatprep.subr.mxu0 0.0
    %223 = vmatpush1.msra.mxu0 0.0
    %224 = vmatprep.subr.mxu0 0.0
    %225 = vmatpush1.msra.mxu0 0.0
    %226 = vmatprep.subr.mxu0 0.0
    %227 = vmatpush1.msra.mxu0 0.0
    %228 = vmatprep.subr.mxu0 0.0
    %229 = vmatpush1.msra.mxu0 0.0
    %230 = vmatprep.subr.mxu0 0.0
    %231 = vmatpush1.msra.mxu0 0.0
    %232 = vmatprep.subr.mxu0 0.0
    %233 = vmatpush1.msra.mxu0 0.0
    %234 = vmatprep.subr.mxu0 0.0
    %235 = vmatpush1.msra.mxu0 0.0
    %236 = vmatprep.subr.mxu0 0.0
    %237 = vmatpush1.msra.mxu0 0.0
    %238 = vmatprep.subr.mxu0 0.0
    %239 = vmatpush1.msra.mxu0 0.0
    %240 = vmatprep.subr.mxu0 0.0
    %241 = vmatpush1.msra.mxu0 0.0
    %242 = vmatprep.subr.mxu0 0.0
    %243 = vmatpush1.msra.mxu0 0.0
    %244 = vmatprep.subr.mxu0 0.0
    %245 = vmatpush1.msra.mxu0 0.0
    %246 = vmatprep.subr.mxu0 0.0
    %247 = vmatpush1.msra.mxu0 0.0
    %248 = vmatprep.subr.mxu0 0.0
    %249 = vmatpush1.msra.mxu0 0.0
    %250 = vmatprep.subr.mxu0 0.0
    %251 = vmatpush1.msra.mxu0 0.0
    %252 = vmatprep.subr.mxu0 0.0
    %253 = vmatpush1.msra.mxu0 0.0
    %254 = vmatprep.subr.mxu0 0.0
    %255 = vmatpush1.msra.mxu0 0.0
    %256 = vmatprep.subr.mxu0 0.0
    %257 = vmatpush1.msra.mxu0 0.0
    %258 = vmatprep.mubr.f32.mxu0 0.0
    %259 = vmatmul.mubr.f32.gmra.mrb[0].mxu0 %v192
    %v260 = vpop.f32.mrb[0].mxu0
    %v261 = vadd.f32 %v187, %v260
    %v262 = vpop.f32.mrb[0].mxu0
    %263 = vdwg.mxu0
    %v264 = vtanh.pop %v261
    %v265 = vxor.u32 %v261, 2147483648
    %v266 = vmul.f32 %v265, 1.442695
    %v267 = vpow.pop %v266
    %v268 = vadd.f32 %v267, 1.0
    %v269 = vrcp.pop %v268
    %v270 = vmul.f32 1.0, %v269
    %v271 = vsel %vm38, %v264, %v270
    %v272 = vmul.f32 %v271, 0.0
    %274 = vrot.lane.b32.xlu0 %v271, 64
    %v275 = vpop.permute.xlu0 %274
    %v277 = vmul.f32 %v271, %v275
    %279 = vrot.lane.b32.xlu0 %v277, 32
    %v280 = vpop.permute.xlu0 %279
    %v282 = vadd.f32 %v272, %v280
    %v283 = vtanh.pop %v282
    %285 = vrot.lane.b32.xlu0 %v283, 64
    %v286 = vpop.permute.xlu0 %285
    %v288 = vmul.f32 %v271, %v286
    %290 = vrot.lane.b32.xlu0 %v288, 32
    %v291 = vpop.permute.xlu0 %290
    %v292 = vsel %vm116, %v291, 0
    %294 = vmatprep.subr.mxu0 0.0
    %295 = vmatpush1.msra.mxu0 %v48
    %296 = vmatprep.subr.mxu0 0.0
    %297 = vmatpush1.msra.mxu0 %v49
    %298 = vmatprep.subr.mxu0 0.0
    %299 = vmatpush1.msra.mxu0 %v50
    %300 = vmatprep.subr.mxu0 0.0
    %301 = vmatpush1.msra.mxu0 %v51
    %302 = vmatprep.subr.mxu0 0.0
    %303 = vmatpush1.msra.mxu0 0.0
    %304 = vmatprep.subr.mxu0 0.0
    %305 = vmatpush1.msra.mxu0 0.0
    %306 = vmatprep.subr.mxu0 0.0
    %307 = vmatpush1.msra.mxu0 0.0
    %308 = vmatprep.subr.mxu0 0.0
    %309 = vmatpush1.msra.mxu0 0.0
    %310 = vmatprep.subr.mxu0 0.0
    %311 = vmatpush1.msra.mxu0 0.0
    %312 = vmatprep.subr.mxu0 0.0
    %313 = vmatpush1.msra.mxu0 0.0
    %314 = vmatprep.subr.mxu0 0.0
    %315 = vmatpush1.msra.mxu0 0.0
    %316 = vmatprep.subr.mxu0 0.0
    %317 = vmatpush1.msra.mxu0 0.0
    %318 = vmatprep.subr.mxu0 0.0
    %319 = vmatpush1.msra.mxu0 0.0
    %320 = vmatprep.subr.mxu0 0.0
    %321 = vmatpush1.msra.mxu0 0.0
    %322 = vmatprep.subr.mxu0 0.0
    %323 = vmatpush1.msra.mxu0 0.0
    %324 = vmatprep.subr.mxu0 0.0
    %325 = vmatpush1.msra.mxu0 0.0
    %326 = vmatprep.subr.mxu0 0.0
    %327 = vmatpush1.msra.mxu0 0.0
    %328 = vmatprep.subr.mxu0 0.0
    %329 = vmatpush1.msra.mxu0 0.0
    %330 = vmatprep.subr.mxu0 0.0
    %331 = vmatpush1.msra.mxu0 0.0
    %332 = vmatprep.subr.mxu0 0.0
    %333 = vmatpush1.msra.mxu0 0.0
    %334 = vmatprep.subr.mxu0 0.0
    %335 = vmatpush1.msra.mxu0 0.0
    %336 = vmatprep.subr.mxu0 0.0
    %337 = vmatpush1.msra.mxu0 0.0
    %338 = vmatprep.subr.mxu0 0.0
    %339 = vmatpush1.msra.mxu0 0.0
    %340 = vmatprep.subr.mxu0 0.0
    %341 = vmatpush1.msra.mxu0 0.0
    %342 = vmatprep.subr.mxu0 0.0
    %343 = vmatpush1.msra.mxu0 0.0
    %344 = vmatprep.subr.mxu0 0.0
    %345 = vmatpush1.msra.mxu0 0.0
    %346 = vmatprep.subr.mxu0 0.0
    %347 = vmatpush1.msra.mxu0 0.0
    %348 = vmatprep.subr.mxu0 0.0
    %349 = vmatpush1.msra.mxu0 0.0
    %350 = vmatprep.subr.mxu0 0.0
    %351 = vmatpush1.msra.mxu0 0.0
    %352 = vmatprep.subr.mxu0 0.0
    %353 = vmatpush1.msra.mxu0 0.0
    %354 = vmatprep.subr.mxu0 0.0
    %355 = vmatpush1.msra.mxu0 0.0
    %356 = vmatprep.subr.mxu0 0.0
    %357 = vmatpush1.msra.mxu0 0.0
    %358 = vmatprep.mubr.f32.mxu0 0.0
    %359 = vmatmul.mubr.f32.gmra.mrb[0].mxu0 %v292
    %v360 = vpop.f32.mrb[0].mxu0
    %v361 = vadd.f32 0.0, %v360
    %v362 = vpop.f32.mrb[0].mxu0
    %363 = vdwg.mxu0
    %v365 = vsel %vm190, %v83, 0
    %367 = vmatprep.subr.mxu0 0.0
    %368 = vmatpush1.msra.mxu0 %v40
    %369 = vmatprep.subr.mxu0 0.0
    %370 = vmatpush1.msra.mxu0 %v41
    %371 = vmatprep.subr.mxu0 0.0
    %372 = vmatpush1.msra.mxu0 %v42
    %373 = vmatprep.subr.mxu0 0.0
    %374 = vmatpush1.msra.mxu0 %v43
    %375 = vmatprep.subr.mxu0 0.0
    %376 = vmatpush1.msra.mxu0 %v44
    %377 = vmatprep.subr.mxu0 0.0
    %378 = vmatpush1.msra.mxu0 %v45
    %379 = vmatprep.subr.mxu0 0.0
    %380 = vmatpush1.msra.mxu0 %v46
    %381 = vmatprep.subr.mxu0 0.0
    %382 = vmatpush1.msra.mxu0 %v47
    %383 = vmatprep.subr.mxu0 0.0
    %384 = vmatpush1.msra.mxu0 0.0
    %385 = vmatprep.subr.mxu0 0.0
    %386 = vmatpush1.msra.mxu0 0.0
    %387 = vmatprep.subr.mxu0 0.0
    %388 = vmatpush1.msra.mxu0 0.0
    %389 = vmatprep.subr.mxu0 0.0
    %390 = vmatpush1.msra.mxu0 0.0
    %391 = vmatprep.subr.mxu0 0.0
    %392 = vmatpush1.msra.mxu0 0.0
    %393 = vmatprep.subr.mxu0 0.0
    %394 = vmatpush1.msra.mxu0 0.0
    %395 = vmatprep.subr.mxu0 0.0
    %396 = vmatpush1.msra.mxu0 0.0
    %397 = vmatprep.subr.mxu0 0.0
    %398 = vmatpush1.msra.mxu0 0.0
    %399 = vmatprep.subr.mxu0 0.0
    %400 = vmatpush1.msra.mxu0 0.0
    %401 = vmatprep.subr.mxu0 0.0
    %402 = vmatpush1.msra.mxu0 0.0
    %403 = vmatprep.subr.mxu0 0.0
    %404 = vmatpush1.msra.mxu0 0.0
    %405 = vmatprep.subr.mxu0 0.0
    %406 = vmatpush1.msra.mxu0 0.0
    %407 = vmatprep.subr.mxu0 0.0
    %408 = vmatpush1.msra.mxu0 0.0
    %409 = vmatprep.subr.mxu0 0.0
    %410 = vmatpush1.msra.mxu0 0.0
    %411 = vmatprep.subr.mxu0 0.0
    %412 = vmatpush1.msra.mxu0 0.0
    %413 = vmatprep.subr.mxu0 0.0
    %414 = vmatpush1.msra.mxu0 0.0
    %415 = vmatprep.subr.mxu0 0.0
    %416 = vmatpush1.msra.mxu0 0.0
    %417 = vmatprep.subr.mxu0 0.0
    %418 = vmatpush1.msra.mxu0 0.0
    %419 = vmatprep.subr.mxu0 0.0
    %420 = vmatpush1.msra.mxu0 0.0
    %421 = vmatprep.subr.mxu0 0.0
    %422 = vmatpush1.msra.mxu0 0.0
    %423 = vmatprep.subr.mxu0 0.0
    %424 = vmatpush1.msra.mxu0 0.0
    %425 = vmatprep.subr.mxu0 0.0
    %426 = vmatpush1.msra.mxu0 0.0
    %427 = vmatprep.subr.mxu0 0.0
    %428 = vmatpush1.msra.mxu0 0.0
    %429 = vmatprep.subr.mxu0 0.0
    %430 = vmatpush1.msra.mxu0 0.0
    %431 = vmatprep.mubr.f32.mxu0 0.0
    %432 = vmatmul.mubr.f32.gmra.mrb[0].mxu0 %v365
    %v433 = vpop.f32.mrb[0].mxu0
    %v434 = vadd.f32 %v361, %v433
    %v435 = vpop.f32.mrb[0].mxu0
    %436 = vdwg.mxu0
    %v437 = vtanh.pop %v434
    %v438 = vxor.u32 %v434, 2147483648
    %v439 = vmul.f32 %v438, 1.442695
    %v440 = vpow.pop %v439
    %v441 = vadd.f32 %v440, 1.0
    %v442 = vrcp.pop %v441
    %v443 = vmul.f32 1.0, %v442
    %v444 = vsel %vm38, %v437, %v443
    %v445 = vmul.f32 %v444, %v282
    %447 = vrot.lane.b32.xlu0 %v444, 64
    %v448 = vpop.permute.xlu0 %447
    %v450 = vmul.f32 %v444, %v448
    %452 = vrot.lane.b32.xlu0 %v450, 32
    %v453 = vpop.permute.xlu0 %452
    %v455 = vadd.f32 %v445, %v453
    %v456 = vtanh.pop %v455
    %458 = vrot.lane.b32.xlu0 %v456, 64
    %v459 = vpop.permute.xlu0 %458
    %v461 = vmul.f32 %v444, %v459
    %463 = vrot.lane.b32.xlu0 %v461, 32
    %v464 = vpop.permute.xlu0 %463
    %v465 = vsel %vm116, %v464, 0
    %467 = vmatprep.subr.mxu0 0.0
    %468 = vmatpush1.msra.mxu0 %v48
    %469 = vmatprep.subr.mxu0 0.0
    %470 = vmatpush1.msra.mxu0 %v49
    %471 = vmatprep.subr.mxu0 0.0
    %472 = vmatpush1.msra.mxu0 %v50
    %473 = vmatprep.subr.mxu0 0.0
    %474 = vmatpush1.msra.mxu0 %v51
    %475 = vmatprep.subr.mxu0 0.0
    %476 = vmatpush1.msra.mxu0 0.0
    %477 = vmatprep.subr.mxu0 0.0
    %478 = vmatpush1.msra.mxu0 0.0
    %479 = vmatprep.subr.mxu0 0.0
    %480 = vmatpush1.msra.mxu0 0.0
    %481 = vmatprep.subr.mxu0 0.0
    %482 = vmatpush1.msra.mxu0 0.0
    %483 = vmatprep.subr.mxu0 0.0
    %484 = vmatpush1.msra.mxu0 0.0
    %485 = vmatprep.subr.mxu0 0.0
    %486 = vmatpush1.msra.mxu0 0.0
    %487 = vmatprep.subr.mxu0 0.0
    %488 = vmatpush1.msra.mxu0 0.0
    %489 = vmatprep.subr.mxu0 0.0
    %490 = vmatpush1.msra.mxu0 0.0
    %491 = vmatprep.subr.mxu0 0.0
    %492 = vmatpush1.msra.mxu0 0.0
    %493 = vmatprep.subr.mxu0 0.0
    %494 = vmatpush1.msra.mxu0 0.0
    %495 = vmatprep.subr.mxu0 0.0
    %496 = vmatpush1.msra.mxu0 0.0
    %497 = vmatprep.subr.mxu0 0.0
    %498 = vmatpush1.msra.mxu0 0.0
    %499 = vmatprep.subr.mxu0 0.0
    %500 = vmatpush1.msra.mxu0 0.0
    %501 = vmatprep.subr.mxu0 0.0
    %502 = vmatpush1.msra.mxu0 0.0
    %503 = vmatprep.subr.mxu0 0.0
    %504 = vmatpush1.msra.mxu0 0.0
    %505 = vmatprep.subr.mxu0 0.0
    %506 = vmatpush1.msra.mxu0 0.0
    %507 = vmatprep.subr.mxu0 0.0
    %508 = vmatpush1.msra.mxu0 0.0
    %509 = vmatprep.subr.mxu0 0.0
    %510 = vmatpush1.msra.mxu0 0.0
    %511 = vmatprep.subr.mxu0 0.0
    %512 = vmatpush1.msra.mxu0 0.0
    %513 = vmatprep.subr.mxu0 0.0
    %514 = vmatpush1.msra.mxu0 0.0
    %515 = vmatprep.subr.mxu0 0.0
    %516 = vmatpush1.msra.mxu0 0.0
    %517 = vmatprep.subr.mxu0 0.0
    %518 = vmatpush1.msra.mxu0 0.0
    %519 = vmatprep.subr.mxu0 0.0
    %520 = vmatpush1.msra.mxu0 0.0
    %521 = vmatprep.subr.mxu0 0.0
    %522 = vmatpush1.msra.mxu0 0.0
    %523 = vmatprep.subr.mxu0 0.0
    %524 = vmatpush1.msra.mxu0 0.0
    %525 = vmatprep.subr.mxu0 0.0
    %526 = vmatpush1.msra.mxu0 0.0
    %527 = vmatprep.subr.mxu0 0.0
    %528 = vmatpush1.msra.mxu0 0.0
    %529 = vmatprep.subr.mxu0 0.0
    %530 = vmatpush1.msra.mxu0 0.0
    %531 = vmatprep.mubr.f32.mxu0 0.0
    %532 = vmatmul.mubr.f32.gmra.mrb[0].mxu0 %v465
    %v533 = vpop.f32.mrb[0].mxu0
    %v534 = vadd.f32 0.0, %v533
    %v535 = vpop.f32.mrb[0].mxu0
    %536 = vdwg.mxu0
    %v538 = vsel %vm190, %v91, 0
    %540 = vmatprep.subr.mxu0 0.0
    %541 = vmatpush1.msra.mxu0 %v40
    %542 = vmatprep.subr.mxu0 0.0
    %543 = vmatpush1.msra.mxu0 %v41
    %544 = vmatprep.subr.mxu0 0.0
    %545 = vmatpush1.msra.mxu0 %v42
    %546 = vmatprep.subr.mxu0 0.0
    %547 = vmatpush1.msra.mxu0 %v43
    %548 = vmatprep.subr.mxu0 0.0
    %549 = vmatpush1.msra.mxu0 %v44
    %550 = vmatprep.subr.mxu0 0.0
    %551 = vmatpush1.msra.mxu0 %v45
    %552 = vmatprep.subr.mxu0 0.0
    %553 = vmatpush1.msra.mxu0 %v46
    %554 = vmatprep.subr.mxu0 0.0
    %555 = vmatpush1.msra.mxu0 %v47
    %556 = vmatprep.subr.mxu0 0.0
    %557 = vmatpush1.msra.mxu0 0.0
    %558 = vmatprep.subr.mxu0 0.0
    %559 = vmatpush1.msra.mxu0 0.0
    %560 = vmatprep.subr.mxu0 0.0
    %561 = vmatpush1.msra.mxu0 0.0
    %562 = vmatprep.subr.mxu0 0.0
    %563 = vmatpush1.msra.mxu0 0.0
    %564 = vmatprep.subr.mxu0 0.0
    %565 = vmatpush1.msra.mxu0 0.0
    %566 = vmatprep.subr.mxu0 0.0
    %567 = vmatpush1.msra.mxu0 0.0
    %568 = vmatprep.subr.mxu0 0.0
    %569 = vmatpush1.msra.mxu0 0.0
    %570 = vmatprep.subr.mxu0 0.0
    %571 = vmatpush1.msra.mxu0 0.0
    %572 = vmatprep.subr.mxu0 0.0
    %573 = vmatpush1.msra.mxu0 0.0
    %574 = vmatprep.subr.mxu0 0.0
    %575 = vmatpush1.msra.mxu0 0.0
    %576 = vmatprep.subr.mxu0 0.0
    %577 = vmatpush1.msra.mxu0 0.0
    %578 = vmatprep.subr.mxu0 0.0
    %579 = vmatpush1.msra.mxu0 0.0
    %580 = vmatprep.subr.mxu0 0.0
    %581 = vmatpush1.msra.mxu0 0.0
    %582 = vmatprep.subr.mxu0 0.0
    %583 = vmatpush1.msra.mxu0 0.0
    %584 = vmatprep.subr.mxu0 0.0
    %585 = vmatpush1.msra.mxu0 0.0
    %586 = vmatprep.subr.mxu0 0.0
    %587 = vmatpush1.msra.mxu0 0.0
    %588 = vmatprep.subr.mxu0 0.0
    %589 = vmatpush1.msra.mxu0 0.0
    %590 = vmatprep.subr.mxu0 0.0
    %591 = vmatpush1.msra.mxu0 0.0
    %592 = vmatprep.subr.mxu0 0.0
    %593 = vmatpush1.msra.mxu0 0.0
    %594 = vmatprep.subr.mxu0 0.0
    %595 = vmatpush1.msra.mxu0 0.0
    %596 = vmatprep.subr.mxu0 0.0
    %597 = vmatpush1.msra.mxu0 0.0
    %598 = vmatprep.subr.mxu0 0.0
    %599 = vmatpush1.msra.mxu0 0.0
    %600 = vmatprep.subr.mxu0 0.0
    %601 = vmatpush1.msra.mxu0 0.0
    %602 = vmatprep.subr.mxu0 0.0
    %603 = vmatpush1.msra.mxu0 0.0
    %604 = vmatprep.mubr.f32.mxu0 0.0
    %605 = vmatmul.mubr.f32.gmra.mrb[0].mxu0 %v538
    %v606 = vpop.f32.mrb[0].mxu0
    %v607 = vadd.f32 %v534, %v606
    %v608 = vpop.f32.mrb[0].mxu0
    %609 = vdwg.mxu0
    %v610 = vtanh.pop %v607
    %v611 = vxor.u32 %v607, 2147483648
    %v612 = vmul.f32 %v611, 1.442695
    %v613 = vpow.pop %v612
    %v614 = vadd.f32 %v613, 1.0
    %v615 = vrcp.pop %v614
    %v616 = vmul.f32 1.0, %v615
    %v617 = vsel %vm38, %v610, %v616
    %v618 = vmul.f32 %v617, %v455
    %620 = vrot.lane.b32.xlu0 %v617, 64
    %v621 = vpop.permute.xlu0 %620
    %v623 = vmul.f32 %v617, %v621
    %625 = vrot.lane.b32.xlu0 %v623, 32
    %v626 = vpop.permute.xlu0 %625
    %v628 = vadd.f32 %v618, %v626
    %v629 = vtanh.pop %v628
    %631 = vrot.lane.b32.xlu0 %v629, 64
    %v632 = vpop.permute.xlu0 %631
    %v634 = vmul.f32 %v617, %v632
    %636 = vrot.lane.b32.xlu0 %v634, 32
    %v637 = vpop.permute.xlu0 %636
    %v638 = vsel %vm116, %v637, 0
    %640 = vmatprep.subr.mxu0 0.0
    %641 = vmatpush1.msra.mxu0 %v48
    %642 = vmatprep.subr.mxu0 0.0
    %643 = vmatpush1.msra.mxu0 %v49
    %644 = vmatprep.subr.mxu0 0.0
    %645 = vmatpush1.msra.mxu0 %v50
    %646 = vmatprep.subr.mxu0 0.0
    %647 = vmatpush1.msra.mxu0 %v51
    %648 = vmatprep.subr.mxu0 0.0
    %649 = vmatpush1.msra.mxu0 0.0
    %650 = vmatprep.subr.mxu0 0.0
    %651 = vmatpush1.msra.mxu0 0.0
    %652 = vmatprep.subr.mxu0 0.0
    %653 = vmatpush1.msra.mxu0 0.0
    %654 = vmatprep.subr.mxu0 0.0
    %655 = vmatpush1.msra.mxu0 0.0
    %656 = vmatprep.subr.mxu0 0.0
    %657 = vmatpush1.msra.mxu0 0.0
    %658 = vmatprep.subr.mxu0 0.0
    %659 = vmatpush1.msra.mxu0 0.0
    %660 = vmatprep.subr.mxu0 0.0
    %661 = vmatpush1.msra.mxu0 0.0
    %662 = vmatprep.subr.mxu0 0.0
    %663 = vmatpush1.msra.mxu0 0.0
    %664 = vmatprep.subr.mxu0 0.0
    %665 = vmatpush1.msra.mxu0 0.0
    %666 = vmatprep.subr.mxu0 0.0
    %667 = vmatpush1.msra.mxu0 0.0
    %668 = vmatprep.subr.mxu0 0.0
    %669 = vmatpush1.msra.mxu0 0.0
    %670 = vmatprep.subr.mxu0 0.0
    %671 = vmatpush1.msra.mxu0 0.0
    %672 = vmatprep.subr.mxu0 0.0
    %673 = vmatpush1.msra.mxu0 0.0
    %674 = vmatprep.subr.mxu0 0.0
    %675 = vmatpush1.msra.mxu0 0.0
    %676 = vmatprep.subr.mxu0 0.0
    %677 = vmatpush1.msra.mxu0 0.0
    %678 = vmatprep.subr.mxu0 0.0
    %679 = vmatpush1.msra.mxu0 0.0
    %680 = vmatprep.subr.mxu0 0.0
    %681 = vmatpush1.msra.mxu0 0.0
    %682 = vmatprep.subr.mxu0 0.0
    %683 = vmatpush1.msra.mxu0 0.0
    %684 = vmatprep.subr.mxu0 0.0
    %685 = vmatpush1.msra.mxu0 0.0
    %686 = vmatprep.subr.mxu0 0.0
    %687 = vmatpush1.msra.mxu0 0.0
    %688 = vmatprep.subr.mxu0 0.0
    %689 = vmatpush1.msra.mxu0 0.0
    %690 = vmatprep.subr.mxu0 0.0
    %691 = vmatpush1.msra.mxu0 0.0
    %692 = vmatprep.subr.mxu0 0.0
    %693 = vmatpush1.msra.mxu0 0.0
    %694 = vmatprep.subr.mxu0 0.0
    %695 = vmatpush1.msra.mxu0 0.0
    %696 = vmatprep.subr.mxu0 0.0
    %697 = vmatpush1.msra.mxu0 0.0
    %698 = vmatprep.subr.mxu0 0.0
    %699 = vmatpush1.msra.mxu0 0.0
    %700 = vmatprep.subr.mxu0 0.0
    %701 = vmatpush1.msra.mxu0 0.0
    %702 = vmatprep.subr.mxu0 0.0
    %703 = vmatpush1.msra.mxu0 0.0
    %704 = vmatprep.mubr.f32.mxu0 0.0
    %705 = vmatmul.mubr.f32.gmra.mrb[0].mxu0 %v638
    %v706 = vpop.f32.mrb[0].mxu0
    %v707 = vadd.f32 0.0, %v706
    %v708 = vpop.f32.mrb[0].mxu0
    %709 = vdwg.mxu0
    %v711 = vsel %vm190, %v99, 0
    %713 = vmatprep.subr.mxu0 0.0
    %714 = vmatpush1.msra.mxu0 %v40
    %715 = vmatprep.subr.mxu0 0.0
    %716 = vmatpush1.msra.mxu0 %v41
    %717 = vmatprep.subr.mxu0 0.0
    %718 = vmatpush1.msra.mxu0 %v42
    %719 = vmatprep.subr.mxu0 0.0
    %720 = vmatpush1.msra.mxu0 %v43
    %721 = vmatprep.subr.mxu0 0.0
    %722 = vmatpush1.msra.mxu0 %v44
    %723 = vmatprep.subr.mxu0 0.0
    %724 = vmatpush1.msra.mxu0 %v45
    %725 = vmatprep.subr.mxu0 0.0
    %726 = vmatpush1.msra.mxu0 %v46
    %727 = vmatprep.subr.mxu0 0.0
    %728 = vmatpush1.msra.mxu0 %v47
    %729 = vmatprep.subr.mxu0 0.0
    %730 = vmatpush1.msra.mxu0 0.0
    %731 = vmatprep.subr.mxu0 0.0
    %732 = vmatpush1.msra.mxu0 0.0
    %733 = vmatprep.subr.mxu0 0.0
    %734 = vmatpush1.msra.mxu0 0.0
    %735 = vmatprep.subr.mxu0 0.0
    %736 = vmatpush1.msra.mxu0 0.0
    %737 = vmatprep.subr.mxu0 0.0
    %738 = vmatpush1.msra.mxu0 0.0
    %739 = vmatprep.subr.mxu0 0.0
    %740 = vmatpush1.msra.mxu0 0.0
    %741 = vmatprep.subr.mxu0 0.0
    %742 = vmatpush1.msra.mxu0 0.0
    %743 = vmatprep.subr.mxu0 0.0
    %744 = vmatpush1.msra.mxu0 0.0
    %745 = vmatprep.subr.mxu0 0.0
    %746 = vmatpush1.msra.mxu0 0.0
    %747 = vmatprep.subr.mxu0 0.0
    %748 = vmatpush1.msra.mxu0 0.0
    %749 = vmatprep.subr.mxu0 0.0
    %750 = vmatpush1.msra.mxu0 0.0
    %751 = vmatprep.subr.mxu0 0.0
    %752 = vmatpush1.msra.mxu0 0.0
    %753 = vmatprep.subr.mxu0 0.0
    %754 = vmatpush1.msra.mxu0 0.0
    %755 = vmatprep.subr.mxu0 0.0
    %756 = vmatpush1.msra.mxu0 0.0
    %757 = vmatprep.subr.mxu0 0.0
    %758 = vmatpush1.msra.mxu0 0.0
    %759 = vmatprep.subr.mxu0 0.0
    %760 = vmatpush1.msra.mxu0 0.0
    %761 = vmatprep.subr.mxu0 0.0
    %762 = vmatpush1.msra.mxu0 0.0
    %763 = vmatprep.subr.mxu0 0.0
    %764 = vmatpush1.msra.mxu0 0.0
    %765 = vmatprep.subr.mxu0 0.0
    %766 = vmatpush1.msra.mxu0 0.0
    %767 = vmatprep.subr.mxu0 0.0
    %768 = vmatpush1.msra.mxu0 0.0
    %769 = vmatprep.subr.mxu0 0.0
    %770 = vmatpush1.msra.mxu0 0.0
    %771 = vmatprep.subr.mxu0 0.0
    %772 = vmatpush1.msra.mxu0 0.0
    %773 = vmatprep.subr.mxu0 0.0
    %774 = vmatpush1.msra.mxu0 0.0
    %775 = vmatprep.subr.mxu0 0.0
    %776 = vmatpush1.msra.mxu0 0.0
    %777 = vmatprep.mubr.f32.mxu0 0.0
    %778 = vmatmul.mubr.f32.gmra.mrb[0].mxu0 %v711
    %v779 = vpop.f32.mrb[0].mxu0
    %v780 = vadd.f32 %v707, %v779
    %v781 = vpop.f32.mrb[0].mxu0
    %782 = vdwg.mxu0
    %v783 = vtanh.pop %v780
    %v784 = vxor.u32 %v780, 2147483648
    %v785 = vmul.f32 %v784, 1.442695
    %v786 = vpow.pop %v785
    %v787 = vadd.f32 %v786, 1.0
    %v788 = vrcp.pop %v787
    %v789 = vmul.f32 1.0, %v788
    %v790 = vsel %vm38, %v783, %v789
    %v791 = vmul.f32 %v790, %v628
    %793 = vrot.lane.b32.xlu0 %v790, 64
    %v794 = vpop.permute.xlu0 %793
    %v796 = vmul.f32 %v790, %v794
    %798 = vrot.lane.b32.xlu0 %v796, 32
    %v799 = vpop.permute.xlu0 %798
    %v801 = vadd.f32 %v791, %v799
    %v802 = vtanh.pop %v801
    %804 = vrot.lane.b32.xlu0 %v802, 64
    %v805 = vpop.permute.xlu0 %804
    %v807 = vmul.f32 %v790, %v805
    %809 = vrot.lane.b32.xlu0 %v807, 32
    %v810 = vpop.permute.xlu0 %809
    %v811 = vsel %vm116, %v810, 0
    %813 = vmatprep.subr.mxu0 0.0
    %814 = vmatpush1.msra.mxu0 %v48
    %815 = vmatprep.subr.mxu0 0.0
    %816 = vmatpush1.msra.mxu0 %v49
    %817 = vmatprep.subr.mxu0 0.0
    %818 = vmatpush1.msra.mxu0 %v50
    %819 = vmatprep.subr.mxu0 0.0
    %820 = vmatpush1.msra.mxu0 %v51
    %821 = vmatprep.subr.mxu0 0.0
    %822 = vmatpush1.msra.mxu0 0.0
    %823 = vmatprep.subr.mxu0 0.0
    %824 = vmatpush1.msra.mxu0 0.0
    %825 = vmatprep.subr.mxu0 0.0
    %826 = vmatpush1.msra.mxu0 0.0
    %827 = vmatprep.subr.mxu0 0.0
    %828 = vmatpush1.msra.mxu0 0.0
    %829 = vmatprep.subr.mxu0 0.0
    %830 = vmatpush1.msra.mxu0 0.0
    %831 = vmatprep.subr.mxu0 0.0
    %832 = vmatpush1.msra.mxu0 0.0
    %833 = vmatprep.subr.mxu0 0.0
    %834 = vmatpush1.msra.mxu0 0.0
    %835 = vmatprep.subr.mxu0 0.0
    %836 = vmatpush1.msra.mxu0 0.0
    %837 = vmatprep.subr.mxu0 0.0
    %838 = vmatpush1.msra.mxu0 0.0
    %839 = vmatprep.subr.mxu0 0.0
    %840 = vmatpush1.msra.mxu0 0.0
    %841 = vmatprep.subr.mxu0 0.0
    %842 = vmatpush1.msra.mxu0 0.0
    %843 = vmatprep.subr.mxu0 0.0
    %844 = vmatpush1.msra.mxu0 0.0
    %845 = vmatprep.subr.mxu0 0.0
    %846 = vmatpush1.msra.mxu0 0.0
    %847 = vmatprep.subr.mxu0 0.0
    %848 = vmatpush1.msra.mxu0 0.0
    %849 = vmatprep.subr.mxu0 0.0
    %850 = vmatpush1.msra.mxu0 0.0
    %851 = vmatprep.subr.mxu0 0.0
    %852 = vmatpush1.msra.mxu0 0.0
    %853 = vmatprep.subr.mxu0 0.0
    %854 = vmatpush1.msra.mxu0 0.0
    %855 = vmatprep.subr.mxu0 0.0
    %856 = vmatpush1.msra.mxu0 0.0
    %857 = vmatprep.subr.mxu0 0.0
    %858 = vmatpush1.msra.mxu0 0.0
    %859 = vmatprep.subr.mxu0 0.0
    %860 = vmatpush1.msra.mxu0 0.0
    %861 = vmatprep.subr.mxu0 0.0
    %862 = vmatpush1.msra.mxu0 0.0
    %863 = vmatprep.subr.mxu0 0.0
    %864 = vmatpush1.msra.mxu0 0.0
    %865 = vmatprep.subr.mxu0 0.0
    %866 = vmatpush1.msra.mxu0 0.0
    %867 = vmatprep.subr.mxu0 0.0
    %868 = vmatpush1.msra.mxu0 0.0
    %869 = vmatprep.subr.mxu0 0.0
    %870 = vmatpush1.msra.mxu0 0.0
    %871 = vmatprep.subr.mxu0 0.0
    %872 = vmatpush1.msra.mxu0 0.0
    %873 = vmatprep.subr.mxu0 0.0
    %874 = vmatpush1.msra.mxu0 0.0
    %875 = vmatprep.subr.mxu0 0.0
    %876 = vmatpush1.msra.mxu0 0.0
    %877 = vmatprep.mubr.f32.mxu0 0.0
    %878 = vmatmul.mubr.f32.gmra.mrb[0].mxu0 %v811
    %v879 = vpop.f32.mrb[0].mxu0
    %v880 = vadd.f32 0.0, %v879
    %v881 = vpop.f32.mrb[0].mxu0
    %882 = vdwg.mxu0
    %v884 = vsel %vm190, %v107, 0
    %886 = vmatprep.subr.mxu0 0.0
    %887 = vmatpush1.msra.mxu0 %v40
    %888 = vmatprep.subr.mxu0 0.0
    %889 = vmatpush1.msra.mxu0 %v41
    %890 = vmatprep.subr.mxu0 0.0
    %891 = vmatpush1.msra.mxu0 %v42
    %892 = vmatprep.subr.mxu0 0.0
    %893 = vmatpush1.msra.mxu0 %v43
    %894 = vmatprep.subr.mxu0 0.0
    %895 = vmatpush1.msra.mxu0 %v44
    %896 = vmatprep.subr.mxu0 0.0
    %897 = vmatpush1.msra.mxu0 %v45
    %898 = vmatprep.subr.mxu0 0.0
    %899 = vmatpush1.msra.mxu0 %v46
    %900 = vmatprep.subr.mxu0 0.0
    %901 = vmatpush1.msra.mxu0 %v47
    %902 = vmatprep.subr.mxu0 0.0
    %903 = vmatpush1.msra.mxu0 0.0
    %904 = vmatprep.subr.mxu0 0.0
    %905 = vmatpush1.msra.mxu0 0.0
    %906 = vmatprep.subr.mxu0 0.0
    %907 = vmatpush1.msra.mxu0 0.0
    %908 = vmatprep.subr.mxu0 0.0
    %909 = vmatpush1.msra.mxu0 0.0
    %910 = vmatprep.subr.mxu0 0.0
    %911 = vmatpush1.msra.mxu0 0.0
    %912 = vmatprep.subr.mxu0 0.0
    %913 = vmatpush1.msra.mxu0 0.0
    %914 = vmatprep.subr.mxu0 0.0
    %915 = vmatpush1.msra.mxu0 0.0
    %916 = vmatprep.subr.mxu0 0.0
    %917 = vmatpush1.msra.mxu0 0.0
    %918 = vmatprep.subr.mxu0 0.0
    %919 = vmatpush1.msra.mxu0 0.0
    %920 = vmatprep.subr.mxu0 0.0
    %921 = vmatpush1.msra.mxu0 0.0
    %922 = vmatprep.subr.mxu0 0.0
    %923 = vmatpush1.msra.mxu0 0.0
    %924 = vmatprep.subr.mxu0 0.0
    %925 = vmatpush1.msra.mxu0 0.0
    %926 = vmatprep.subr.mxu0 0.0
    %927 = vmatpush1.msra.mxu0 0.0
    %928 = vmatprep.subr.mxu0 0.0
    %929 = vmatpush1.msra.mxu0 0.0
    %930 = vmatprep.subr.mxu0 0.0
    %931 = vmatpush1.msra.mxu0 0.0
    %932 = vmatprep.subr.mxu0 0.0
    %933 = vmatpush1.msra.mxu0 0.0
    %934 = vmatprep.subr.mxu0 0.0
    %935 = vmatpush1.msra.mxu0 0.0
    %936 = vmatprep.subr.mxu0 0.0
    %937 = vmatpush1.msra.mxu0 0.0
    %938 = vmatprep.subr.mxu0 0.0
    %939 = vmatpush1.msra.mxu0 0.0
    %940 = vmatprep.subr.mxu0 0.0
    %941 = vmatpush1.msra.mxu0 0.0
    %942 = vmatprep.subr.mxu0 0.0
    %943 = vmatpush1.msra.mxu0 0.0
    %944 = vmatprep.subr.mxu0 0.0
    %945 = vmatpush1.msra.mxu0 0.0
    %946 = vmatprep.subr.mxu0 0.0
    %947 = vmatpush1.msra.mxu0 0.0
    %948 = vmatprep.subr.mxu0 0.0
    %949 = vmatpush1.msra.mxu0 0.0
    %950 = vmatprep.mubr.f32.mxu0 0.0
    %951 = vmatmul.mubr.f32.gmra.mrb[0].mxu0 %v884
    %v952 = vpop.f32.mrb[0].mxu0
    %v953 = vadd.f32 %v880, %v952
    %v954 = vpop.f32.mrb[0].mxu0
    %955 = vdwg.mxu0
    %v956 = vtanh.pop %v953
    %v957 = vxor.u32 %v953, 2147483648
    %v958 = vmul.f32 %v957, 1.442695
    %v959 = vpow.pop %v958
    %v960 = vadd.f32 %v959, 1.0
    %v961 = vrcp.pop %v960
    %v962 = vmul.f32 1.0, %v961
    %v963 = vsel %vm38, %v956, %v962
    %v964 = vmul.f32 %v963, %v801
    %966 = vrot.lane.b32.xlu0 %v963, 64
    %v967 = vpop.permute.xlu0 %966
    %v969 = vmul.f32 %v963, %v967
    %971 = vrot.lane.b32.xlu0 %v969, 32
    %v972 = vpop.permute.xlu0 %971
    %v974 = vadd.f32 %v964, %v972
    %v975 = vtanh.pop %v974
    %977 = vrot.lane.b32.xlu0 %v975, 64
    %v978 = vpop.permute.xlu0 %977
    %v980 = vmul.f32 %v963, %v978
    %982 = vrot.lane.b32.xlu0 %v980, 32
    %v983 = vpop.permute.xlu0 %982
    %v984 = vsel %vm116, %v983, 0
    %986 = vmatprep.subr.mxu0 0.0
    %987 = vmatpush1.msra.mxu0 %v48
    %988 = vmatprep.subr.mxu0 0.0
    %989 = vmatpush1.msra.mxu0 %v49
    %990 = vmatprep.subr.mxu0 0.0
    %991 = vmatpush1.msra.mxu0 %v50
    %992 = vmatprep.subr.mxu0 0.0
    %993 = vmatpush1.msra.mxu0 %v51
    %994 = vmatprep.subr.mxu0 0.0
    %995 = vmatpush1.msra.mxu0 0.0
    %996 = vmatprep.subr.mxu0 0.0
    %997 = vmatpush1.msra.mxu0 0.0
    %998 = vmatprep.subr.mxu0 0.0
    %999 = vmatpush1.msra.mxu0 0.0
    %1000 = vmatprep.subr.mxu0 0.0
    %1001 = vmatpush1.msra.mxu0 0.0
    %1002 = vmatprep.subr.mxu0 0.0
    %1003 = vmatpush1.msra.mxu0 0.0
    %1004 = vmatprep.subr.mxu0 0.0
    %1005 = vmatpush1.msra.mxu0 0.0
    %1006 = vmatprep.subr.mxu0 0.0
    %1007 = vmatpush1.msra.mxu0 0.0
    %1008 = vmatprep.subr.mxu0 0.0
    %1009 = vmatpush1.msra.mxu0 0.0
    %1010 = vmatprep.subr.mxu0 0.0
    %1011 = vmatpush1.msra.mxu0 0.0
    %1012 = vmatprep.subr.mxu0 0.0
    %1013 = vmatpush1.msra.mxu0 0.0
    %1014 = vmatprep.subr.mxu0 0.0
    %1015 = vmatpush1.msra.mxu0 0.0
    %1016 = vmatprep.subr.mxu0 0.0
    %1017 = vmatpush1.msra.mxu0 0.0
    %1018 = vmatprep.subr.mxu0 0.0
    %1019 = vmatpush1.msra.mxu0 0.0
    %1020 = vmatprep.subr.mxu0 0.0
    %1021 = vmatpush1.msra.mxu0 0.0
    %1022 = vmatprep.subr.mxu0 0.0
    %1023 = vmatpush1.msra.mxu0 0.0
    %1024 = vmatprep.subr.mxu0 0.0
    %1025 = vmatpush1.msra.mxu0 0.0
    %1026 = vmatprep.subr.mxu0 0.0
    %1027 = vmatpush1.msra.mxu0 0.0
    %1028 = vmatprep.subr.mxu0 0.0
    %1029 = vmatpush1.msra.mxu0 0.0
    %1030 = vmatprep.subr.mxu0 0.0
    %1031 = vmatpush1.msra.mxu0 0.0
    %1032 = vmatprep.subr.mxu0 0.0
    %1033 = vmatpush1.msra.mxu0 0.0
    %1034 = vmatprep.subr.mxu0 0.0
    %1035 = vmatpush1.msra.mxu0 0.0
    %1036 = vmatprep.subr.mxu0 0.0
    %1037 = vmatpush1.msra.mxu0 0.0
    %1038 = vmatprep.subr.mxu0 0.0
    %1039 = vmatpush1.msra.mxu0 0.0
    %1040 = vmatprep.subr.mxu0 0.0
    %1041 = vmatpush1.msra.mxu0 0.0
    %1042 = vmatprep.subr.mxu0 0.0
    %1043 = vmatpush1.msra.mxu0 0.0
    %1044 = vmatprep.subr.mxu0 0.0
    %1045 = vmatpush1.msra.mxu0 0.0
    %1046 = vmatprep.subr.mxu0 0.0
    %1047 = vmatpush1.msra.mxu0 0.0
    %1048 = vmatprep.subr.mxu0 0.0
    %1049 = vmatpush1.msra.mxu0 0.0
    %1050 = vmatprep.mubr.f32.mxu0 0.0
    %1051 = vmatmul.mubr.f32.gmra.mrb[0].mxu0 %v984
    %v1052 = vpop.f32.mrb[0].mxu0
    %v1053 = vadd.f32 0.0, %v1052
    %v1054 = vpop.f32.mrb[0].mxu0
    %1055 = vdwg.mxu0
    %v1057 = vsel %vm190, %v115, 0
    %1059 = vmatprep.subr.mxu0 0.0
    %1060 = vmatpush1.msra.mxu0 %v40
    %1061 = vmatprep.subr.mxu0 0.0
    %1062 = vmatpush1.msra.mxu0 %v41
    %1063 = vmatprep.subr.mxu0 0.0
    %1064 = vmatpush1.msra.mxu0 %v42
    %1065 = vmatprep.subr.mxu0 0.0
    %1066 = vmatpush1.msra.mxu0 %v43
    %1067 = vmatprep.subr.mxu0 0.0
    %1068 = vmatpush1.msra.mxu0 %v44
    %1069 = vmatprep.subr.mxu0 0.0
    %1070 = vmatpush1.msra.mxu0 %v45
    %1071 = vmatprep.subr.mxu0 0.0
    %1072 = vmatpush1.msra.mxu0 %v46
    %1073 = vmatprep.subr.mxu0 0.0
    %1074 = vmatpush1.msra.mxu0 %v47
    %1075 = vmatprep.subr.mxu0 0.0
    %1076 = vmatpush1.msra.mxu0 0.0
    %1077 = vmatprep.subr.mxu0 0.0
    %1078 = vmatpush1.msra.mxu0 0.0
    %1079 = vmatprep.subr.mxu0 0.0
    %1080 = vmatpush1.msra.mxu0 0.0
    %1081 = vmatprep.subr.mxu0 0.0
    %1082 = vmatpush1.msra.mxu0 0.0
    %1083 = vmatprep.subr.mxu0 0.0
    %1084 = vmatpush1.msra.mxu0 0.0
    %1085 = vmatprep.subr.mxu0 0.0
    %1086 = vmatpush1.msra.mxu0 0.0
    %1087 = vmatprep.subr.mxu0 0.0
    %1088 = vmatpush1.msra.mxu0 0.0
    %1089 = vmatprep.subr.mxu0 0.0
    %1090 = vmatpush1.msra.mxu0 0.0
    %1091 = vmatprep.subr.mxu0 0.0
    %1092 = vmatpush1.msra.mxu0 0.0
    %1093 = vmatprep.subr.mxu0 0.0
    %1094 = vmatpush1.msra.mxu0 0.0
    %1095 = vmatprep.subr.mxu0 0.0
    %1096 = vmatpush1.msra.mxu0 0.0
    %1097 = vmatprep.subr.mxu0 0.0
    %1098 = vmatpush1.msra.mxu0 0.0
    %1099 = vmatprep.subr.mxu0 0.0
    %1100 = vmatpush1.msra.mxu0 0.0
    %1101 = vmatprep.subr.mxu0 0.0
    %1102 = vmatpush1.msra.mxu0 0.0
    %1103 = vmatprep.subr.mxu0 0.0
    %1104 = vmatpush1.msra.mxu0 0.0
    %1105 = vmatprep.subr.mxu0 0.0
    %1106 = vmatpush1.msra.mxu0 0.0
    %1107 = vmatprep.subr.mxu0 0.0
    %1108 = vmatpush1.msra.mxu0 0.0
    %1109 = vmatprep.subr.mxu0 0.0
    %1110 = vmatpush1.msra.mxu0 0.0
    %1111 = vmatprep.subr.mxu0 0.0
    %1112 = vmatpush1.msra.mxu0 0.0
    %1113 = vmatprep.subr.mxu0 0.0
    %1114 = vmatpush1.msra.mxu0 0.0
    %1115 = vmatprep.subr.mxu0 0.0
    %1116 = vmatpush1.msra.mxu0 0.0
    %1117 = vmatprep.subr.mxu0 0.0
    %1118 = vmatpush1.msra.mxu0 0.0
    %1119 = vmatprep.subr.mxu0 0.0
    %1120 = vmatpush1.msra.mxu0 0.0
    %1121 = vmatprep.subr.mxu0 0.0
    %1122 = vmatpush1.msra.mxu0 0.0
    %1123 = vmatprep.mubr.f32.mxu0 0.0
    %1124 = vmatmul.mubr.f32.gmra.mrb[0].mxu0 %v1057
    %v1125 = vpop.f32.mrb[0].mxu0
    %v1126 = vadd.f32 %v1053, %v1125
    %v1127 = vpop.f32.mrb[0].mxu0
    %1128 = vdwg.mxu0
    %v1129 = vtanh.pop %v1126
    %v1130 = vxor.u32 %v1126, 2147483648
    %v1131 = vmul.f32 %v1130, 1.442695
    %v1132 = vpow.pop %v1131
    %v1133 = vadd.f32 %v1132, 1.0
    %v1134 = vrcp.pop %v1133
    %v1135 = vmul.f32 1.0, %v1134
    %v1136 = vsel %vm38, %v1129, %v1135
    %v1137 = vmul.f32 %v1136, %v974
    %1139 = vrot.lane.b32.xlu0 %v1136, 64
    %v1140 = vpop.permute.xlu0 %1139
    %v1142 = vmul.f32 %v1136, %v1140
    %1144 = vrot.lane.b32.xlu0 %v1142, 32
    %v1145 = vpop.permute.xlu0 %1144
    %v1147 = vadd.f32 %v1137, %v1145
    %v1148 = vtanh.pop %v1147
    %1150 = vrot.lane.b32.xlu0 %v1148, 64
    %v1151 = vpop.permute.xlu0 %1150
    %v1153 = vmul.f32 %v1136, %v1151
    %v1154 = vld [vmem:[%s1] sm:$0xff]
    %1155 = vset.pattern.permute.xlu0 0
    %1156 = vperm.xlu0 %1155, %v1154
    %v1157 = vpop.permute.xlu0 %1156
    %vm1158 = vcmp.eq.s32.totalorder %v1157, %v34
    %v1159 = vsel %vm1158, 1, 0
    %v1160 = vcvt.s32.f32 %v1159
    %s1161 = scalar_lea.vmem %s1, 8
    %v1162 = vld [vmem:[%s1161] sm:$0xff]
    %1163 = vset.pattern.permute.xlu0 0
    %1164 = vperm.xlu0 %1163, %v1162
    %v1165 = vpop.permute.xlu0 %1164
    %vm1166 = vcmp.eq.s32.totalorder %v1165, %v34
    %v1167 = vsel %vm1166, 1, 0
    %v1168 = vcvt.s32.f32 %v1167
    %s1169 = scalar_lea.vmem %s1, 16
    %v1170 = vld [vmem:[%s1169] sm:$0xff]
    %1171 = vset.pattern.permute.xlu0 0
    %1172 = vperm.xlu0 %1171, %v1170
    %v1173 = vpop.permute.xlu0 %1172
    %vm1174 = vcmp.eq.s32.totalorder %v1173, %v34
    %v1175 = vsel %vm1174, 1, 0
    %v1176 = vcvt.s32.f32 %v1175
    %s1177 = scalar_lea.vmem %s1, 24
    %v1178 = vld [vmem:[%s1177] sm:$0xff]
    %1179 = vset.pattern.permute.xlu0 0
    %1180 = vperm.xlu0 %1179, %v1178
    %v1181 = vpop.permute.xlu0 %1180
    %vm1182 = vcmp.eq.s32.totalorder %v1181, %v34
    %v1183 = vsel %vm1182, 1, 0
    %v1184 = vcvt.s32.f32 %v1183
    %s1185 = scalar_lea.vmem %s1, 32
    %v1186 = vld [vmem:[%s1185] sm:$0xff]
    %1187 = vset.pattern.permute.xlu0 0
    %1188 = vperm.xlu0 %1187, %v1186
    %v1189 = vpop.permute.xlu0 %1188
    %vm1190 = vcmp.eq.s32.totalorder %v1189, %v34
    %v1191 = vsel %vm1190, 1, 0
    %v1192 = vcvt.s32.f32 %v1191
    %s1193 = scalar_lea.vmem %s1, 40
    %v1194 = vld [vmem:[%s1193] sm:$0xff]
    %1195 = vset.pattern.permute.xlu0 0
    %1196 = vperm.xlu0 %1195, %v1194
    %v1197 = vpop.permute.xlu0 %1196
    %vm1198 = vcmp.eq.s32.totalorder %v1197, %v34
    %v1199 = vsel %vm1198, 1, 0
    %v1200 = vcvt.s32.f32 %v1199
    %s1201 = scalar_lea.vmem %s1, 48
    %v1202 = vld [vmem:[%s1201] sm:$0xff]
    %1203 = vset.pattern.permute.xlu0 0
    %1204 = vperm.xlu0 %1203, %v1202
    %v1205 = vpop.permute.xlu0 %1204
    %vm1206 = vcmp.eq.s32.totalorder %v1205, %v34
    %v1207 = vsel %vm1206, 1, 0
    %v1208 = vcvt.s32.f32 %v1207
    %1209 = vst [vmem:[#allocation2] sm:$0xff] 0.0
    %1211 = vrot.lane.b32.xlu0 %v1153, 32
    %v1212 = vpop.permute.xlu0 %1211
    %v1213 = vsel %vm116, %v1212, 0
    %1215 = vmatprep.subr.mxu0 0.0
    %1216 = vmatpush1.msra.mxu0 %v60
    %1217 = vmatprep.subr.mxu0 0.0
    %1218 = vmatpush1.msra.mxu0 %v61
    %1219 = vmatprep.subr.mxu0 0.0
    %1220 = vmatpush1.msra.mxu0 %v62
    %1221 = vmatprep.subr.mxu0 0.0
    %1222 = vmatpush1.msra.mxu0 %v63
    %1223 = vmatprep.subr.mxu0 0.0
    %1224 = vmatpush1.msra.mxu0 0.0
    %1225 = vmatprep.subr.mxu0 0.0
    %1226 = vmatpush1.msra.mxu0 0.0
    %1227 = vmatprep.subr.mxu0 0.0
    %1228 = vmatpush1.msra.mxu0 0.0
    %1229 = vmatprep.subr.mxu0 0.0
    %1230 = vmatpush1.msra.mxu0 0.0
    %1231 = vmatprep.subr.mxu0 0.0
    %1232 = vmatpush1.msra.mxu0 0.0
    %1233 = vmatprep.subr.mxu0 0.0
    %1234 = vmatpush1.msra.mxu0 0.0
    %1235 = vmatprep.subr.mxu0 0.0
    %1236 = vmatpush1.msra.mxu0 0.0
    %1237 = vmatprep.subr.mxu0 0.0
    %1238 = vmatpush1.msra.mxu0 0.0
    %1239 = vmatprep.subr.mxu0 0.0
    %1240 = vmatpush1.msra.mxu0 0.0
    %1241 = vmatprep.subr.mxu0 0.0
    %1242 = vmatpush1.msra.mxu0 0.0
    %1243 = vmatprep.subr.mxu0 0.0
    %1244 = vmatpush1.msra.mxu0 0.0
    %1245 = vmatprep.subr.mxu0 0.0
    %1246 = vmatpush1.msra.mxu0 0.0
    %1247 = vmatprep.subr.mxu0 0.0
    %1248 = vmatpush1.msra.mxu0 0.0
    %1249 = vmatprep.subr.mxu0 0.0
    %1250 = vmatpush1.msra.mxu0 0.0
    %1251 = vmatprep.subr.mxu0 0.0
    %1252 = vmatpush1.msra.mxu0 0.0
    %1253 = vmatprep.subr.mxu0 0.0
    %1254 = vmatpush1.msra.mxu0 0.0
    %1255 = vmatprep.subr.mxu0 0.0
    %1256 = vmatpush1.msra.mxu0 0.0
    %1257 = vmatprep.subr.mxu0 0.0
    %1258 = vmatpush1.msra.mxu0 0.0
    %1259 = vmatprep.subr.mxu0 0.0
    %1260 = vmatpush1.msra.mxu0 0.0
    %1261 = vmatprep.subr.mxu0 0.0
    %1262 = vmatpush1.msra.mxu0 0.0
    %1263 = vmatprep.subr.mxu0 0.0
    %1264 = vmatpush1.msra.mxu0 0.0
    %1265 = vmatprep.subr.mxu0 0.0
    %1266 = vmatpush1.msra.mxu0 0.0
    %1267 = vmatprep.subr.mxu0 0.0
    %1268 = vmatpush1.msra.mxu0 0.0
    %1269 = vmatprep.subr.mxu0 0.0
    %1270 = vmatpush1.msra.mxu0 0.0
    %1271 = vmatprep.subr.mxu0 0.0
    %1272 = vmatpush1.msra.mxu0 0.0
    %1273 = vmatprep.subr.mxu0 0.0
    %1274 = vmatpush1.msra.mxu0 0.0
    %1275 = vmatprep.subr.mxu0 0.0
    %1276 = vmatpush1.msra.mxu0 0.0
    %1277 = vmatprep.subr.mxu0 0.0
    %1278 = vmatpush1.msra.mxu0 0.0
    %1279 = vmatprep.mubr.f32.mxu0 0.0
    %1280 = vmatmul.mubr.f32.gmra.mrb[0].mxu0 %v1213
    %v1281 = vpop.f32.mrb[0].mxu0
    %v1282 = vadd.f32 0.0, %v1281
    %v1283 = vpop.f32.mrb[0].mxu0
    %1284 = vdwg.mxu0
    %v1286 = vsel %vm190, %v1160, 0
    %1288 = vmatprep.subr.mxu0 0.0
    %1289 = vmatpush1.msra.mxu0 %v52
    %1290 = vmatprep.subr.mxu0 0.0
    %1291 = vmatpush1.msra.mxu0 %v53
    %1292 = vmatprep.subr.mxu0 0.0
    %1293 = vmatpush1.msra.mxu0 %v54
    %1294 = vmatprep.subr.mxu0 0.0
    %1295 = vmatpush1.msra.mxu0 %v55
    %1296 = vmatprep.subr.mxu0 0.0
    %1297 = vmatpush1.msra.mxu0 %v56
    %1298 = vmatprep.subr.mxu0 0.0
    %1299 = vmatpush1.msra.mxu0 %v57
    %1300 = vmatprep.subr.mxu0 0.0
    %1301 = vmatpush1.msra.mxu0 %v58
    %1302 = vmatprep.subr.mxu0 0.0
    %1303 = vmatpush1.msra.mxu0 %v59
    %1304 = vmatprep.subr.mxu0 0.0
    %1305 = vmatpush1.msra.mxu0 0.0
    %1306 = vmatprep.subr.mxu0 0.0
    %1307 = vmatpush1.msra.mxu0 0.0
    %1308 = vmatprep.subr.mxu0 0.0
    %1309 = vmatpush1.msra.mxu0 0.0
    %1310 = vmatprep.subr.mxu0 0.0
    %1311 = vmatpush1.msra.mxu0 0.0
    %1312 = vmatprep.subr.mxu0 0.0
    %1313 = vmatpush1.msra.mxu0 0.0
    %1314 = vmatprep.subr.mxu0 0.0
    %1315 = vmatpush1.msra.mxu0 0.0
    %1316 = vmatprep.subr.mxu0 0.0
    %1317 = vmatpush1.msra.mxu0 0.0
    %1318 = vmatprep.subr.mxu0 0.0
    %1319 = vmatpush1.msra.mxu0 0.0
    %1320 = vmatprep.subr.mxu0 0.0
    %1321 = vmatpush1.msra.mxu0 0.0
    %1322 = vmatprep.subr.mxu0 0.0
    %1323 = vmatpush1.msra.mxu0 0.0
    %1324 = vmatprep.subr.mxu0 0.0
    %1325 = vmatpush1.msra.mxu0 0.0
    %1326 = vmatprep.subr.mxu0 0.0
    %1327 = vmatpush1.msra.mxu0 0.0
    %1328 = vmatprep.subr.mxu0 0.0
    %1329 = vmatpush1.msra.mxu0 0.0
    %1330 = vmatprep.subr.mxu0 0.0
    %1331 = vmatpush1.msra.mxu0 0.0
    %1332 = vmatprep.subr.mxu0 0.0
    %1333 = vmatpush1.msra.mxu0 0.0
    %1334 = vmatprep.subr.mxu0 0.0
    %1335 = vmatpush1.msra.mxu0 0.0
    %1336 = vmatprep.subr.mxu0 0.0
    %1337 = vmatpush1.msra.mxu0 0.0
    %1338 = vmatprep.subr.mxu0 0.0
    %1339 = vmatpush1.msra.mxu0 0.0
    %1340 = vmatprep.subr.mxu0 0.0
    %1341 = vmatpush1.msra.mxu0 0.0
    %1342 = vmatprep.subr.mxu0 0.0
    %1343 = vmatpush1.msra.mxu0 0.0
    %1344 = vmatprep.subr.mxu0 0.0
    %1345 = vmatpush1.msra.mxu0 0.0
    %1346 = vmatprep.subr.mxu0 0.0
    %1347 = vmatpush1.msra.mxu0 0.0
    %1348 = vmatprep.subr.mxu0 0.0
    %1349 = vmatpush1.msra.mxu0 0.0
    %1350 = vmatprep.subr.mxu0 0.0
    %1351 = vmatpush1.msra.mxu0 0.0
    %1352 = vmatprep.mubr.f32.mxu0 0.0
    %1353 = vmatmul.mubr.f32.gmra.mrb[0].mxu0 %v1286
    %v1354 = vpop.f32.mrb[0].mxu0
    %v1355 = vadd.f32 %v1282, %v1354
    %v1356 = vpop.f32.mrb[0].mxu0
    %1357 = vdwg.mxu0
    %v1358 = vtanh.pop %v1355
    %v1359 = vxor.u32 %v1355, 2147483648
    %v1360 = vmul.f32 %v1359, 1.442695
    %v1361 = vpow.pop %v1360
    %v1362 = vadd.f32 %v1361, 1.0
    %v1363 = vrcp.pop %v1362
    %v1364 = vmul.f32 1.0, %v1363
    %v1365 = vsel %vm38, %v1358, %v1364
    %v1366 = vmul.f32 %v1365, %v1147
    %1368 = vrot.lane.b32.xlu0 %v1365, 64
    %v1369 = vpop.permute.xlu0 %1368
    %v1371 = vmul.f32 %v1365, %v1369
    %1373 = vrot.lane.b32.xlu0 %v1371, 32
    %v1374 = vpop.permute.xlu0 %1373
    %v1376 = vadd.f32 %v1366, %v1374
    %v1377 = vtanh.pop %v1376
    %1379 = vrot.lane.b32.xlu0 %v1377, 64
    %v1380 = vpop.permute.xlu0 %1379
    %v1382 = vmul.f32 %v1365, %v1380
    %v1384 = vlaneseq
    %v1385 = vshrl.u32 %v1384, 7
    %v1386 = vsub.s32 0, %v1385
    %v1387 = vrot.slane %v68, %v1386
    %1390 = vrot.lane.b32.xlu0 %v1382, 32
    %v1391 = vpop.permute.xlu0 %1390
    %v1392 = vsel %vm116, %v1391, 0
    %1394 = vmatprep.subr.mxu0 0.0
    %1395 = vmatpush1.msra.mxu0 %v64
    %1396 = vmatprep.subr.mxu0 0.0
    %1397 = vmatpush1.msra.mxu0 %v65
    %1398 = vmatprep.subr.mxu0 0.0
    %1399 = vmatpush1.msra.mxu0 %v66
    %1400 = vmatprep.subr.mxu0 0.0
    %1401 = vmatpush1.msra.mxu0 %v67
    %1402 = vmatprep.subr.mxu0 0.0
    %1403 = vmatpush1.msra.mxu0 0.0
    %1404 = vmatprep.subr.mxu0 0.0
    %1405 = vmatpush1.msra.mxu0 0.0
    %1406 = vmatprep.subr.mxu0 0.0
    %1407 = vmatpush1.msra.mxu0 0.0
    %1408 = vmatprep.subr.mxu0 0.0
    %1409 = vmatpush1.msra.mxu0 0.0
    %1410 = vmatprep.subr.mxu0 0.0
    %1411 = vmatpush1.msra.mxu0 0.0
    %1412 = vmatprep.subr.mxu0 0.0
    %1413 = vmatpush1.msra.mxu0 0.0
    %1414 = vmatprep.subr.mxu0 0.0
    %1415 = vmatpush1.msra.mxu0 0.0
    %1416 = vmatprep.subr.mxu0 0.0
    %1417 = vmatpush1.msra.mxu0 0.0
    %1418 = vmatprep.subr.mxu0 0.0
    %1419 = vmatpush1.msra.mxu0 0.0
    %1420 = vmatprep.subr.mxu0 0.0
    %1421 = vmatpush1.msra.mxu0 0.0
    %1422 = vmatprep.subr.mxu0 0.0
    %1423 = vmatpush1.msra.mxu0 0.0
    %1424 = vmatprep.subr.mxu0 0.0
    %1425 = vmatpush1.msra.mxu0 0.0
    %1426 = vmatprep.subr.mxu0 0.0
    %1427 = vmatpush1.msra.mxu0 0.0
    %1428 = vmatprep.subr.mxu0 0.0
    %1429 = vmatpush1.msra.mxu0 0.0
    %1430 = vmatprep.subr.mxu0 0.0
    %1431 = vmatpush1.msra.mxu0 0.0
    %1432 = vmatprep.subr.mxu0 0.0
    %1433 = vmatpush1.msra.mxu0 0.0
    %1434 = vmatprep.subr.mxu0 0.0
    %1435 = vmatpush1.msra.mxu0 0.0
    %1436 = vmatprep.subr.mxu0 0.0
    %1437 = vmatpush1.msra.mxu0 0.0
    %1438 = vmatprep.subr.mxu0 0.0
    %1439 = vmatpush1.msra.mxu0 0.0
    %1440 = vmatprep.subr.mxu0 0.0
    %1441 = vmatpush1.msra.mxu0 0.0
    %1442 = vmatprep.subr.mxu0 0.0
    %1443 = vmatpush1.msra.mxu0 0.0
    %1444 = vmatprep.subr.mxu0 0.0
    %1445 = vmatpush1.msra.mxu0 0.0
    %1446 = vmatprep.subr.mxu0 0.0
    %1447 = vmatpush1.msra.mxu0 0.0
    %1448 = vmatprep.subr.mxu0 0.0
    %1449 = vmatpush1.msra.mxu0 0.0
    %1450 = vmatprep.subr.mxu0 0.0
    %1451 = vmatpush1.msra.mxu0 0.0
    %1452 = vmatprep.subr.mxu0 0.0
    %1453 = vmatpush1.msra.mxu0 0.0
    %1454 = vmatprep.subr.mxu0 0.0
    %1455 = vmatpush1.msra.mxu0 0.0
    %1456 = vmatprep.subr.mxu0 0.0
    %1457 = vmatpush1.msra.mxu0 0.0
    %1458 = vmatprep.mubr.f32.mxu0 0.0
    %1459 = vmatmul.mubr.f32.gmra.mrb[0].mxu0 %v1392
    %v1460 = vpop.f32.mrb[0].mxu0
    %v1461 = vadd.f32 %v1387, %v1460
    %v1462 = vpop.f32.mrb[0].mxu0
    %1463 = vdwg.mxu0
    %s1464 = scalar_lea.vmem [#allocation2], 8
    %1465 = vst [vmem:[%s1464] sm:$0xff] %v1461
    %v1466 = vsel %vm39, %v1461, -1e+30
    %1467 = vmax.xlane.f32.xlu0 %v1466
    %v1468 = vpop.xlane.xlu0 %1467
    %vm1469 = vcmp.eq.f32.partialorder %v1466, %v1468
    %v1470 = vsel %vm1469, %v35, 128.0
    %1471 = vmin.xlane.f32.xlu0 %v1470
    %v1472 = vpop.xlane.xlu0 %1471
    %vm1473 = vcmp.eq.f32.partialorder %v35, %v1472
    %v1474 = vsel %vm1473, 1, 0
    %v1475 = vcvt.s32.f32 %v1474
    %s1476 = scalar_lea.vmem %s2, 8
    %v1477 = vld [vmem:[%s1476] sm:$0xff]
    %1479 = vset.pattern.permute.xlu0 0
    %1480 = vperm.xlu0 %1479, %v1477
    %v1481 = vpop.permute.xlu0 %1480
    %v1483 = vmul.f32 %v1481, %v1168
    %v1484 = vsub.f32 1.0, %v1477
    %1486 = vset.pattern.permute.xlu0 0
    %1487 = vperm.xlu0 %1486, %v1484
    %v1488 = vpop.permute.xlu0 %1487
    %v1490 = vmul.f32 %v1488, %v1475
    %v1491 = vadd.f32 %v1483, %v1490
    %1492 = vmatprep.subr.mxu0 0.0
    %1493 = vmatpush1.msra.mxu0 %v60
    %1494 = vmatprep.subr.mxu0 0.0
    %1495 = vmatpush1.msra.mxu0 %v61
    %1496 = vmatprep.subr.mxu0 0.0
    %1497 = vmatpush1.msra.mxu0 %v62
    %1498 = vmatprep.subr.mxu0 0.0
    %1499 = vmatpush1.msra.mxu0 %v63
    %1500 = vmatprep.subr.mxu0 0.0
    %1501 = vmatpush1.msra.mxu0 0.0
    %1502 = vmatprep.subr.mxu0 0.0
    %1503 = vmatpush1.msra.mxu0 0.0
    %1504 = vmatprep.subr.mxu0 0.0
    %1505 = vmatpush1.msra.mxu0 0.0
    %1506 = vmatprep.subr.mxu0 0.0
    %1507 = vmatpush1.msra.mxu0 0.0
    %1508 = vmatprep.subr.mxu0 0.0
    %1509 = vmatpush1.msra.mxu0 0.0
    %1510 = vmatprep.subr.mxu0 0.0
    %1511 = vmatpush1.msra.mxu0 0.0
    %1512 = vmatprep.subr.mxu0 0.0
    %1513 = vmatpush1.msra.mxu0 0.0
    %1514 = vmatprep.subr.mxu0 0.0
    %1515 = vmatpush1.msra.mxu0 0.0
    %1516 = vmatprep.subr.mxu0 0.0
    %1517 = vmatpush1.msra.mxu0 0.0
    %1518 = vmatprep.subr.mxu0 0.0
    %1519 = vmatpush1.msra.mxu0 0.0
    %1520 = vmatprep.subr.mxu0 0.0
    %1521 = vmatpush1.msra.mxu0 0.0
    %1522 = vmatprep.subr.mxu0 0.0
    %1523 = vmatpush1.msra.mxu0 0.0
    %1524 = vmatprep.subr.mxu0 0.0
    %1525 = vmatpush1.msra.mxu0 0.0
    %1526 = vmatprep.subr.mxu0 0.0
    %1527 = vmatpush1.msra.mxu0 0.0
    %1528 = vmatprep.subr.mxu0 0.0
    %1529 = vmatpush1.msra.mxu0 0.0
    %1530 = vmatprep.subr.mxu0 0.0
    %1531 = vmatpush1.msra.mxu0 0.0
    %1532 = vmatprep.subr.mxu0 0.0
    %1533 = vmatpush1.msra.mxu0 0.0
    %1534 = vmatprep.subr.mxu0 0.0
    %1535 = vmatpush1.msra.mxu0 0.0
    %1536 = vmatprep.subr.mxu0 0.0
    %1537 = vmatpush1.msra.mxu0 0.0
    %1538 = vmatprep.subr.mxu0 0.0
    %1539 = vmatpush1.msra.mxu0 0.0
    %1540 = vmatprep.subr.mxu0 0.0
    %1541 = vmatpush1.msra.mxu0 0.0
    %1542 = vmatprep.subr.mxu0 0.0
    %1543 = vmatpush1.msra.mxu0 0.0
    %1544 = vmatprep.subr.mxu0 0.0
    %1545 = vmatpush1.msra.mxu0 0.0
    %1546 = vmatprep.subr.mxu0 0.0
    %1547 = vmatpush1.msra.mxu0 0.0
    %1548 = vmatprep.subr.mxu0 0.0
    %1549 = vmatpush1.msra.mxu0 0.0
    %1550 = vmatprep.subr.mxu0 0.0
    %1551 = vmatpush1.msra.mxu0 0.0
    %1552 = vmatprep.subr.mxu0 0.0
    %1553 = vmatpush1.msra.mxu0 0.0
    %1554 = vmatprep.subr.mxu0 0.0
    %1555 = vmatpush1.msra.mxu0 0.0
    %1556 = vmatprep.mubr.f32.mxu0 0.0
    %1557 = vmatmul.mubr.f32.gmra.mrb[0].mxu0 %v1392
    %v1558 = vpop.f32.mrb[0].mxu0
    %v1559 = vadd.f32 0.0, %v1558
    %v1560 = vpop.f32.mrb[0].mxu0
    %1561 = vdwg.mxu0
    %v1563 = vsel %vm190, %v1491, 0
    %1565 = vmatprep.subr.mxu0 0.0
    %1566 = vmatpush1.msra.mxu0 %v52
    %1567 = vmatprep.subr.mxu0 0.0
    %1568 = vmatpush1.msra.mxu0 %v53
    %1569 = vmatprep.subr.mxu0 0.0
    %1570 = vmatpush1.msra.mxu0 %v54
    %1571 = vmatprep.subr.mxu0 0.0
    %1572 = vmatpush1.msra.mxu0 %v55
    %1573 = vmatprep.subr.mxu0 0.0
    %1574 = vmatpush1.msra.mxu0 %v56
    %1575 = vmatprep.subr.mxu0 0.0
    %1576 = vmatpush1.msra.mxu0 %v57
    %1577 = vmatprep.subr.mxu0 0.0
    %1578 = vmatpush1.msra.mxu0 %v58
    %1579 = vmatprep.subr.mxu0 0.0
    %1580 = vmatpush1.msra.mxu0 %v59
    %1581 = vmatprep.subr.mxu0 0.0
    %1582 = vmatpush1.msra.mxu0 0.0
    %1583 = vmatprep.subr.mxu0 0.0
    %1584 = vmatpush1.msra.mxu0 0.0
    %1585 = vmatprep.subr.mxu0 0.0
    %1586 = vmatpush1.msra.mxu0 0.0
    %1587 = vmatprep.subr.mxu0 0.0
    %1588 = vmatpush1.msra.mxu0 0.0
    %1589 = vmatprep.subr.mxu0 0.0
    %1590 = vmatpush1.msra.mxu0 0.0
    %1591 = vmatprep.subr.mxu0 0.0
    %1592 = vmatpush1.msra.mxu0 0.0
    %1593 = vmatprep.subr.mxu0 0.0
    %1594 = vmatpush1.msra.mxu0 0.0
    %1595 = vmatprep.subr.mxu0 0.0
    %1596 = vmatpush1.msra.mxu0 0.0
    %1597 = vmatprep.subr.mxu0 0.0
    %1598 = vmatpush1.msra.mxu0 0.0
    %1599 = vmatprep.subr.mxu0 0.0
    %1600 = vmatpush1.msra.mxu0 0.0
    %1601 = vmatprep.subr.mxu0 0.0
    %1602 = vmatpush1.msra.mxu0 0.0
    %1603 = vmatprep.subr.mxu0 0.0
    %1604 = vmatpush1.msra.mxu0 0.0
    %1605 = vmatprep.subr.mxu0 0.0
    %1606 = vmatpush1.msra.mxu0 0.0
    %1607 = vmatprep.subr.mxu0 0.0
    %1608 = vmatpush1.msra.mxu0 0.0
    %1609 = vmatprep.subr.mxu0 0.0
    %1610 = vmatpush1.msra.mxu0 0.0
    %1611 = vmatprep.subr.mxu0 0.0
    %1612 = vmatpush1.msra.mxu0 0.0
    %1613 = vmatprep.subr.mxu0 0.0
    %1614 = vmatpush1.msra.mxu0 0.0
    %1615 = vmatprep.subr.mxu0 0.0
    %1616 = vmatpush1.msra.mxu0 0.0
    %1617 = vmatprep.subr.mxu0 0.0
    %1618 = vmatpush1.msra.mxu0 0.0
    %1619 = vmatprep.subr.mxu0 0.0
    %1620 = vmatpush1.msra.mxu0 0.0
    %1621 = vmatprep.subr.mxu0 0.0
    %1622 = vmatpush1.msra.mxu0 0.0
    %1623 = vmatprep.subr.mxu0 0.0
    %1624 = vmatpush1.msra.mxu0 0.0
    %1625 = vmatprep.subr.mxu0 0.0
    %1626 = vmatpush1.msra.mxu0 0.0
    %1627 = vmatprep.subr.mxu0 0.0
    %1628 = vmatpush1.msra.mxu0 0.0
    %1629 = vmatprep.mubr.f32.mxu0 0.0
    %1630 = vmatmul.mubr.f32.gmra.mrb[0].mxu0 %v1563
    %v1631 = vpop.f32.mrb[0].mxu0
    %v1632 = vadd.f32 %v1559, %v1631
    %v1633 = vpop.f32.mrb[0].mxu0
    %1634 = vdwg.mxu0
    %v1635 = vtanh.pop %v1632
    %v1636 = vxor.u32 %v1632, 2147483648
    %v1637 = vmul.f32 %v1636, 1.442695
    %v1638 = vpow.pop %v1637
    %v1639 = vadd.f32 %v1638, 1.0
    %v1640 = vrcp.pop %v1639
    %v1641 = vmul.f32 1.0, %v1640
    %v1642 = vsel %vm38, %v1635, %v1641
    %v1643 = vmul.f32 %v1642, %v1376
    %1645 = vrot.lane.b32.xlu0 %v1642, 64
    %v1646 = vpop.permute.xlu0 %1645
    %v1648 = vmul.f32 %v1642, %v1646
    %1650 = vrot.lane.b32.xlu0 %v1648, 32
    %v1651 = vpop.permute.xlu0 %1650
    %v1653 = vadd.f32 %v1643, %v1651
    %v1654 = vtanh.pop %v1653
    %1656 = vrot.lane.b32.xlu0 %v1654, 64
    %v1657 = vpop.permute.xlu0 %1656
    %v1659 = vmul.f32 %v1642, %v1657
    %1661 = vrot.lane.b32.xlu0 %v1659, 32
    %v1662 = vpop.permute.xlu0 %1661
    %v1663 = vsel %vm116, %v1662, 0
    %1665 = vmatprep.subr.mxu0 0.0
    %1666 = vmatpush1.msra.mxu0 %v64
    %1667 = vmatprep.subr.mxu0 0.0
    %1668 = vmatpush1.msra.mxu0 %v65
    %1669 = vmatprep.subr.mxu0 0.0
    %1670 = vmatpush1.msra.mxu0 %v66
    %1671 = vmatprep.subr.mxu0 0.0
    %1672 = vmatpush1.msra.mxu0 %v67
    %1673 = vmatprep.subr.mxu0 0.0
    %1674 = vmatpush1.msra.mxu0 0.0
    %1675 = vmatprep.subr.mxu0 0.0
    %1676 = vmatpush1.msra.mxu0 0.0
    %1677 = vmatprep.subr.mxu0 0.0
    %1678 = vmatpush1.msra.mxu0 0.0
    %1679 = vmatprep.subr.mxu0 0.0
    %1680 = vmatpush1.msra.mxu0 0.0
    %1681 = vmatprep.subr.mxu0 0.0
    %1682 = vmatpush1.msra.mxu0 0.0
    %1683 = vmatprep.subr.mxu0 0.0
    %1684 = vmatpush1.msra.mxu0 0.0
    %1685 = vmatprep.subr.mxu0 0.0
    %1686 = vmatpush1.msra.mxu0 0.0
    %1687 = vmatprep.subr.mxu0 0.0
    %1688 = vmatpush1.msra.mxu0 0.0
    %1689 = vmatprep.subr.mxu0 0.0
    %1690 = vmatpush1.msra.mxu0 0.0
    %1691 = vmatprep.subr.mxu0 0.0
    %1692 = vmatpush1.msra.mxu0 0.0
    %1693 = vmatprep.subr.mxu0 0.0
    %1694 = vmatpush1.msra.mxu0 0.0
    %1695 = vmatprep.subr.mxu0 0.0
    %1696 = vmatpush1.msra.mxu0 0.0
    %1697 = vmatprep.subr.mxu0 0.0
    %1698 = vmatpush1.msra.mxu0 0.0
    %1699 = vmatprep.subr.mxu0 0.0
    %1700 = vmatpush1.msra.mxu0 0.0
    %1701 = vmatprep.subr.mxu0 0.0
    %1702 = vmatpush1.msra.mxu0 0.0
    %1703 = vmatprep.subr.mxu0 0.0
    %1704 = vmatpush1.msra.mxu0 0.0
    %1705 = vmatprep.subr.mxu0 0.0
    %1706 = vmatpush1.msra.mxu0 0.0
    %1707 = vmatprep.subr.mxu0 0.0
    %1708 = vmatpush1.msra.mxu0 0.0
    %1709 = vmatprep.subr.mxu0 0.0
    %1710 = vmatpush1.msra.mxu0 0.0
    %1711 = vmatprep.subr.mxu0 0.0
    %1712 = vmatpush1.msra.mxu0 0.0
    %1713 = vmatprep.subr.mxu0 0.0
    %1714 = vmatpush1.msra.mxu0 0.0
    %1715 = vmatprep.subr.mxu0 0.0
    %1716 = vmatpush1.msra.mxu0 0.0
    %1717 = vmatprep.subr.mxu0 0.0
    %1718 = vmatpush1.msra.mxu0 0.0
    %1719 = vmatprep.subr.mxu0 0.0
    %1720 = vmatpush1.msra.mxu0 0.0
    %1721 = vmatprep.subr.mxu0 0.0
    %1722 = vmatpush1.msra.mxu0 0.0
    %1723 = vmatprep.subr.mxu0 0.0
    %1724 = vmatpush1.msra.mxu0 0.0
    %1725 = vmatprep.subr.mxu0 0.0
    %1726 = vmatpush1.msra.mxu0 0.0
    %1727 = vmatprep.subr.mxu0 0.0
    %1728 = vmatpush1.msra.mxu0 0.0
    %1729 = vmatprep.mubr.f32.mxu0 0.0
    %1730 = vmatmul.mubr.f32.gmra.mrb[0].mxu0 %v1663
    %v1731 = vpop.f32.mrb[0].mxu0
    %v1732 = vadd.f32 %v1387, %v1731
    %v1733 = vpop.f32.mrb[0].mxu0
    %1734 = vdwg.mxu0
    %s1735 = scalar_lea.vmem [#allocation2], 16
    %1736 = vst [vmem:[%s1735] sm:$0xff] %v1732
    %v1737 = vsel %vm39, %v1732, -1e+30
    %1738 = vmax.xlane.f32.xlu0 %v1737
    %v1739 = vpop.xlane.xlu0 %1738
    %vm1740 = vcmp.eq.f32.partialorder %v1737, %v1739
    %v1741 = vsel %vm1740, %v35, 128.0
    %1742 = vmin.xlane.f32.xlu0 %v1741
    %v1743 = vpop.xlane.xlu0 %1742
    %vm1744 = vcmp.eq.f32.partialorder %v35, %v1743
    %v1745 = vsel %vm1744, 1, 0
    %v1746 = vcvt.s32.f32 %v1745
    %s1747 = scalar_lea.vmem %s2, 16
    %v1748 = vld [vmem:[%s1747] sm:$0xff]
    %1750 = vset.pattern.permute.xlu0 0
    %1751 = vperm.xlu0 %1750, %v1748
    %v1752 = vpop.permute.xlu0 %1751
    %v1754 = vmul.f32 %v1752, %v1176
    %v1755 = vsub.f32 1.0, %v1748
    %1757 = vset.pattern.permute.xlu0 0
    %1758 = vperm.xlu0 %1757, %v1755
    %v1759 = vpop.permute.xlu0 %1758
    %v1761 = vmul.f32 %v1759, %v1746
    %v1762 = vadd.f32 %v1754, %v1761
    %1763 = vmatprep.subr.mxu0 0.0
    %1764 = vmatpush1.msra.mxu0 %v60
    %1765 = vmatprep.subr.mxu0 0.0
    %1766 = vmatpush1.msra.mxu0 %v61
    %1767 = vmatprep.subr.mxu0 0.0
    %1768 = vmatpush1.msra.mxu0 %v62
    %1769 = vmatprep.subr.mxu0 0.0
    %1770 = vmatpush1.msra.mxu0 %v63
    %1771 = vmatprep.subr.mxu0 0.0
    %1772 = vmatpush1.msra.mxu0 0.0
    %1773 = vmatprep.subr.mxu0 0.0
    %1774 = vmatpush1.msra.mxu0 0.0
    %1775 = vmatprep.subr.mxu0 0.0
    %1776 = vmatpush1.msra.mxu0 0.0
    %1777 = vmatprep.subr.mxu0 0.0
    %1778 = vmatpush1.msra.mxu0 0.0
    %1779 = vmatprep.subr.mxu0 0.0
    %1780 = vmatpush1.msra.mxu0 0.0
    %1781 = vmatprep.subr.mxu0 0.0
    %1782 = vmatpush1.msra.mxu0 0.0
    %1783 = vmatprep.subr.mxu0 0.0
    %1784 = vmatpush1.msra.mxu0 0.0
    %1785 = vmatprep.subr.mxu0 0.0
    %1786 = vmatpush1.msra.mxu0 0.0
    %1787 = vmatprep.subr.mxu0 0.0
    %1788 = vmatpush1.msra.mxu0 0.0
    %1789 = vmatprep.subr.mxu0 0.0
    %1790 = vmatpush1.msra.mxu0 0.0
    %1791 = vmatprep.subr.mxu0 0.0
    %1792 = vmatpush1.msra.mxu0 0.0
    %1793 = vmatprep.subr.mxu0 0.0
    %1794 = vmatpush1.msra.mxu0 0.0
    %1795 = vmatprep.subr.mxu0 0.0
    %1796 = vmatpush1.msra.mxu0 0.0
    %1797 = vmatprep.subr.mxu0 0.0
    %1798 = vmatpush1.msra.mxu0 0.0
    %1799 = vmatprep.subr.mxu0 0.0
    %1800 = vmatpush1.msra.mxu0 0.0
    %1801 = vmatprep.subr.mxu0 0.0
    %1802 = vmatpush1.msra.mxu0 0.0
    %1803 = vmatprep.subr.mxu0 0.0
    %1804 = vmatpush1.msra.mxu0 0.0
    %1805 = vmatprep.subr.mxu0 0.0
    %1806 = vmatpush1.msra.mxu0 0.0
    %1807 = vmatprep.subr.mxu0 0.0
    %1808 = vmatpush1.msra.mxu0 0.0
    %1809 = vmatprep.subr.mxu0 0.0
    %1810 = vmatpush1.msra.mxu0 0.0
    %1811 = vmatprep.subr.mxu0 0.0
    %1812 = vmatpush1.msra.mxu0 0.0
    %1813 = vmatprep.subr.mxu0 0.0
    %1814 = vmatpush1.msra.mxu0 0.0
    %1815 = vmatprep.subr.mxu0 0.0
    %1816 = vmatpush1.msra.mxu0 0.0
    %1817 = vmatprep.subr.mxu0 0.0
    %1818 = vmatpush1.msra.mxu0 0.0
    %1819 = vmatprep.subr.mxu0 0.0
    %1820 = vmatpush1.msra.mxu0 0.0
    %1821 = vmatprep.subr.mxu0 0.0
    %1822 = vmatpush1.msra.mxu0 0.0
    %1823 = vmatprep.subr.mxu0 0.0
    %1824 = vmatpush1.msra.mxu0 0.0
    %1825 = vmatprep.subr.mxu0 0.0
    %1826 = vmatpush1.msra.mxu0 0.0
    %1827 = vmatprep.mubr.f32.mxu0 0.0
    %1828 = vmatmul.mubr.f32.gmra.mrb[0].mxu0 %v1663
    %v1829 = vpop.f32.mrb[0].mxu0
    %v1830 = vadd.f32 0.0, %v1829
    %v1831 = vpop.f32.mrb[0].mxu0
    %1832 = vdwg.mxu0
    %v1834 = vsel %vm190, %v1762, 0
    %1836 = vmatprep.subr.mxu0 0.0
    %1837 = vmatpush1.msra.mxu0 %v52
    %1838 = vmatprep.subr.mxu0 0.0
    %1839 = vmatpush1.msra.mxu0 %v53
    %1840 = vmatprep.subr.mxu0 0.0
    %1841 = vmatpush1.msra.mxu0 %v54
    %1842 = vmatprep.subr.mxu0 0.0
    %1843 = vmatpush1.msra.mxu0 %v55
    %1844 = vmatprep.subr.mxu0 0.0
    %1845 = vmatpush1.msra.mxu0 %v56
    %1846 = vmatprep.subr.mxu0 0.0
    %1847 = vmatpush1.msra.mxu0 %v57
    %1848 = vmatprep.subr.mxu0 0.0
    %1849 = vmatpush1.msra.mxu0 %v58
    %1850 = vmatprep.subr.mxu0 0.0
    %1851 = vmatpush1.msra.mxu0 %v59
    %1852 = vmatprep.subr.mxu0 0.0
    %1853 = vmatpush1.msra.mxu0 0.0
    %1854 = vmatprep.subr.mxu0 0.0
    %1855 = vmatpush1.msra.mxu0 0.0
    %1856 = vmatprep.subr.mxu0 0.0
    %1857 = vmatpush1.msra.mxu0 0.0
    %1858 = vmatprep.subr.mxu0 0.0
    %1859 = vmatpush1.msra.mxu0 0.0
    %1860 = vmatprep.subr.mxu0 0.0
    %1861 = vmatpush1.msra.mxu0 0.0
    %1862 = vmatprep.subr.mxu0 0.0
    %1863 = vmatpush1.msra.mxu0 0.0
    %1864 = vmatprep.subr.mxu0 0.0
    %1865 = vmatpush1.msra.mxu0 0.0
    %1866 = vmatprep.subr.mxu0 0.0
    %1867 = vmatpush1.msra.mxu0 0.0
    %1868 = vmatprep.subr.mxu0 0.0
    %1869 = vmatpush1.msra.mxu0 0.0
    %1870 = vmatprep.subr.mxu0 0.0
    %1871 = vmatpush1.msra.mxu0 0.0
    %1872 = vmatprep.subr.mxu0 0.0
    %1873 = vmatpush1.msra.mxu0 0.0
    %1874 = vmatprep.subr.mxu0 0.0
    %1875 = vmatpush1.msra.mxu0 0.0
    %1876 = vmatprep.subr.mxu0 0.0
    %1877 = vmatpush1.msra.mxu0 0.0
    %1878 = vmatprep.subr.mxu0 0.0
    %1879 = vmatpush1.msra.mxu0 0.0
    %1880 = vmatprep.subr.mxu0 0.0
    %1881 = vmatpush1.msra.mxu0 0.0
    %1882 = vmatprep.subr.mxu0 0.0
    %1883 = vmatpush1.msra.mxu0 0.0
    %1884 = vmatprep.subr.mxu0 0.0
    %1885 = vmatpush1.msra.mxu0 0.0
    %1886 = vmatprep.subr.mxu0 0.0
    %1887 = vmatpush1.msra.mxu0 0.0
    %1888 = vmatprep.subr.mxu0 0.0
    %1889 = vmatpush1.msra.mxu0 0.0
    %1890 = vmatprep.subr.mxu0 0.0
    %1891 = vmatpush1.msra.mxu0 0.0
    %1892 = vmatprep.subr.mxu0 0.0
    %1893 = vmatpush1.msra.mxu0 0.0
    %1894 = vmatprep.subr.mxu0 0.0
    %1895 = vmatpush1.msra.mxu0 0.0
    %1896 = vmatprep.subr.mxu0 0.0
    %1897 = vmatpush1.msra.mxu0 0.0
    %1898 = vmatprep.subr.mxu0 0.0
    %1899 = vmatpush1.msra.mxu0 0.0
    %1900 = vmatprep.mubr.f32.mxu0 0.0
    %1901 = vmatmul.mubr.f32.gmra.mrb[0].mxu0 %v1834
    %v1902 = vpop.f32.mrb[0].mxu0
    %v1903 = vadd.f32 %v1830, %v1902
    %v1904 = vpop.f32.mrb[0].mxu0
    %1905 = vdwg.mxu0
    %v1906 = vtanh.pop %v1903
    %v1907 = vxor.u32 %v1903, 2147483648
    %v1908 = vmul.f32 %v1907, 1.442695
    %v1909 = vpow.pop %v1908
    %v1910 = vadd.f32 %v1909, 1.0
    %v1911 = vrcp.pop %v1910
    %v1912 = vmul.f32 1.0, %v1911
    %v1913 = vsel %vm38, %v1906, %v1912
    %v1914 = vmul.f32 %v1913, %v1653
    %1916 = vrot.lane.b32.xlu0 %v1913, 64
    %v1917 = vpop.permute.xlu0 %1916
    %v1919 = vmul.f32 %v1913, %v1917
    %1921 = vrot.lane.b32.xlu0 %v1919, 32
    %v1922 = vpop.permute.xlu0 %1921
    %v1924 = vadd.f32 %v1914, %v1922
    %v1925 = vtanh.pop %v1924
    %1927 = vrot.lane.b32.xlu0 %v1925, 64
    %v1928 = vpop.permute.xlu0 %1927
    %v1930 = vmul.f32 %v1913, %v1928
    %1932 = vrot.lane.b32.xlu0 %v1930, 32
    %v1933 = vpop.permute.xlu0 %1932
    %v1934 = vsel %vm116, %v1933, 0
    %1936 = vmatprep.subr.mxu0 0.0
    %1937 = vmatpush1.msra.mxu0 %v64
    %1938 = vmatprep.subr.mxu0 0.0
    %1939 = vmatpush1.msra.mxu0 %v65
    %1940 = vmatprep.subr.mxu0 0.0
    %1941 = vmatpush1.msra.mxu0 %v66
    %1942 = vmatprep.subr.mxu0 0.0
    %1943 = vmatpush1.msra.mxu0 %v67
    %1944 = vmatprep.subr.mxu0 0.0
    %1945 = vmatpush1.msra.mxu0 0.0
    %1946 = vmatprep.subr.mxu0 0.0
    %1947 = vmatpush1.msra.mxu0 0.0
    %1948 = vmatprep.subr.mxu0 0.0
    %1949 = vmatpush1.msra.mxu0 0.0
    %1950 = vmatprep.subr.mxu0 0.0
    %1951 = vmatpush1.msra.mxu0 0.0
    %1952 = vmatprep.subr.mxu0 0.0
    %1953 = vmatpush1.msra.mxu0 0.0
    %1954 = vmatprep.subr.mxu0 0.0
    %1955 = vmatpush1.msra.mxu0 0.0
    %1956 = vmatprep.subr.mxu0 0.0
    %1957 = vmatpush1.msra.mxu0 0.0
    %1958 = vmatprep.subr.mxu0 0.0
    %1959 = vmatpush1.msra.mxu0 0.0
    %1960 = vmatprep.subr.mxu0 0.0
    %1961 = vmatpush1.msra.mxu0 0.0
    %1962 = vmatprep.subr.mxu0 0.0
    %1963 = vmatpush1.msra.mxu0 0.0
    %1964 = vmatprep.subr.mxu0 0.0
    %1965 = vmatpush1.msra.mxu0 0.0
    %1966 = vmatprep.subr.mxu0 0.0
    %1967 = vmatpush1.msra.mxu0 0.0
    %1968 = vmatprep.subr.mxu0 0.0
    %1969 = vmatpush1.msra.mxu0 0.0
    %1970 = vmatprep.subr.mxu0 0.0
    %1971 = vmatpush1.msra.mxu0 0.0
    %1972 = vmatprep.subr.mxu0 0.0
    %1973 = vmatpush1.msra.mxu0 0.0
    %1974 = vmatprep.subr.mxu0 0.0
    %1975 = vmatpush1.msra.mxu0 0.0
    %1976 = vmatprep.subr.mxu0 0.0
    %1977 = vmatpush1.msra.mxu0 0.0
    %1978 = vmatprep.subr.mxu0 0.0
    %1979 = vmatpush1.msra.mxu0 0.0
    %1980 = vmatprep.subr.mxu0 0.0
    %1981 = vmatpush1.msra.mxu0 0.0
    %1982 = vmatprep.subr.mxu0 0.0
    %1983 = vmatpush1.msra.mxu0 0.0
    %1984 = vmatprep.subr.mxu0 0.0
    %1985 = vmatpush1.msra.mxu0 0.0
    %1986 = vmatprep.subr.mxu0 0.0
    %1987 = vmatpush1.msra.mxu0 0.0
    %1988 = vmatprep.subr.mxu0 0.0
    %1989 = vmatpush1.msra.mxu0 0.0
    %1990 = vmatprep.subr.mxu0 0.0
    %1991 = vmatpush1.msra.mxu0 0.0
    %1992 = vmatprep.subr.mxu0 0.0
    %1993 = vmatpush1.msra.mxu0 0.0
    %1994 = vmatprep.subr.mxu0 0.0
    %1995 = vmatpush1.msra.mxu0 0.0
    %1996 = vmatprep.subr.mxu0 0.0
    %1997 = vmatpush1.msra.mxu0 0.0
    %1998 = vmatprep.subr.mxu0 0.0
    %1999 = vmatpush1.msra.mxu0 0.0
    %2000 = vmatprep.mubr.f32.mxu0 0.0
    %2001 = vmatmul.mubr.f32.gmra.mrb[0].mxu0 %v1934
    %v2002 = vpop.f32.mrb[0].mxu0
    %v2003 = vadd.f32 %v1387, %v2002
    %v2004 = vpop.f32.mrb[0].mxu0
    %2005 = vdwg.mxu0
    %s2006 = scalar_lea.vmem [#allocation2], 24
    %2007 = vst [vmem:[%s2006] sm:$0xff] %v2003
    %v2008 = vsel %vm39, %v2003, -1e+30
    %2009 = vmax.xlane.f32.xlu0 %v2008
    %v2010 = vpop.xlane.xlu0 %2009
    %vm2011 = vcmp.eq.f32.partialorder %v2008, %v2010
    %v2012 = vsel %vm2011, %v35, 128.0
    %2013 = vmin.xlane.f32.xlu0 %v2012
    %v2014 = vpop.xlane.xlu0 %2013
    %vm2015 = vcmp.eq.f32.partialorder %v35, %v2014
    %v2016 = vsel %vm2015, 1, 0
    %v2017 = vcvt.s32.f32 %v2016
    %s2018 = scalar_lea.vmem %s2, 24
    %v2019 = vld [vmem:[%s2018] sm:$0xff]
    %2021 = vset.pattern.permute.xlu0 0
    %2022 = vperm.xlu0 %2021, %v2019
    %v2023 = vpop.permute.xlu0 %2022
    %v2025 = vmul.f32 %v2023, %v1184
    %v2026 = vsub.f32 1.0, %v2019
    %2028 = vset.pattern.permute.xlu0 0
    %2029 = vperm.xlu0 %2028, %v2026
    %v2030 = vpop.permute.xlu0 %2029
    %v2032 = vmul.f32 %v2030, %v2017
    %v2033 = vadd.f32 %v2025, %v2032
    %2034 = vmatprep.subr.mxu0 0.0
    %2035 = vmatpush1.msra.mxu0 %v60
    %2036 = vmatprep.subr.mxu0 0.0
    %2037 = vmatpush1.msra.mxu0 %v61
    %2038 = vmatprep.subr.mxu0 0.0
    %2039 = vmatpush1.msra.mxu0 %v62
    %2040 = vmatprep.subr.mxu0 0.0
    %2041 = vmatpush1.msra.mxu0 %v63
    %2042 = vmatprep.subr.mxu0 0.0
    %2043 = vmatpush1.msra.mxu0 0.0
    %2044 = vmatprep.subr.mxu0 0.0
    %2045 = vmatpush1.msra.mxu0 0.0
    %2046 = vmatprep.subr.mxu0 0.0
    %2047 = vmatpush1.msra.mxu0 0.0
    %2048 = vmatprep.subr.mxu0 0.0
    %2049 = vmatpush1.msra.mxu0 0.0
    %2050 = vmatprep.subr.mxu0 0.0
    %2051 = vmatpush1.msra.mxu0 0.0
    %2052 = vmatprep.subr.mxu0 0.0
    %2053 = vmatpush1.msra.mxu0 0.0
    %2054 = vmatprep.subr.mxu0 0.0
    %2055 = vmatpush1.msra.mxu0 0.0
    %2056 = vmatprep.subr.mxu0 0.0
    %2057 = vmatpush1.msra.mxu0 0.0
    %2058 = vmatprep.subr.mxu0 0.0
    %2059 = vmatpush1.msra.mxu0 0.0
    %2060 = vmatprep.subr.mxu0 0.0
    %2061 = vmatpush1.msra.mxu0 0.0
    %2062 = vmatprep.subr.mxu0 0.0
    %2063 = vmatpush1.msra.mxu0 0.0
    %2064 = vmatprep.subr.mxu0 0.0
    %2065 = vmatpush1.msra.mxu0 0.0
    %2066 = vmatprep.subr.mxu0 0.0
    %2067 = vmatpush1.msra.mxu0 0.0
    %2068 = vmatprep.subr.mxu0 0.0
    %2069 = vmatpush1.msra.mxu0 0.0
    %2070 = vmatprep.subr.mxu0 0.0
    %2071 = vmatpush1.msra.mxu0 0.0
    %2072 = vmatprep.subr.mxu0 0.0
    %2073 = vmatpush1.msra.mxu0 0.0
    %2074 = vmatprep.subr.mxu0 0.0
    %2075 = vmatpush1.msra.mxu0 0.0
    %2076 = vmatprep.subr.mxu0 0.0
    %2077 = vmatpush1.msra.mxu0 0.0
    %2078 = vmatprep.subr.mxu0 0.0
    %2079 = vmatpush1.msra.mxu0 0.0
    %2080 = vmatprep.subr.mxu0 0.0
    %2081 = vmatpush1.msra.mxu0 0.0
    %2082 = vmatprep.subr.mxu0 0.0
    %2083 = vmatpush1.msra.mxu0 0.0
    %2084 = vmatprep.subr.mxu0 0.0
    %2085 = vmatpush1.msra.mxu0 0.0
    %2086 = vmatprep.subr.mxu0 0.0
    %2087 = vmatpush1.msra.mxu0 0.0
    %2088 = vmatprep.subr.mxu0 0.0
    %2089 = vmatpush1.msra.mxu0 0.0
    %2090 = vmatprep.subr.mxu0 0.0
    %2091 = vmatpush1.msra.mxu0 0.0
    %2092 = vmatprep.subr.mxu0 0.0
    %2093 = vmatpush1.msra.mxu0 0.0
    %2094 = vmatprep.subr.mxu0 0.0
    %2095 = vmatpush1.msra.mxu0 0.0
    %2096 = vmatprep.subr.mxu0 0.0
    %2097 = vmatpush1.msra.mxu0 0.0
    %2098 = vmatprep.mubr.f32.mxu0 0.0
    %2099 = vmatmul.mubr.f32.gmra.mrb[0].mxu0 %v1934
    %v2100 = vpop.f32.mrb[0].mxu0
    %v2101 = vadd.f32 0.0, %v2100
    %v2102 = vpop.f32.mrb[0].mxu0
    %2103 = vdwg.mxu0
    %v2105 = vsel %vm190, %v2033, 0
    %2107 = vmatprep.subr.mxu0 0.0
    %2108 = vmatpush1.msra.mxu0 %v52
    %2109 = vmatprep.subr.mxu0 0.0
    %2110 = vmatpush1.msra.mxu0 %v53
    %2111 = vmatprep.subr.mxu0 0.0
    %2112 = vmatpush1.msra.mxu0 %v54
    %2113 = vmatprep.subr.mxu0 0.0
    %2114 = vmatpush1.msra.mxu0 %v55
    %2115 = vmatprep.subr.mxu0 0.0
    %2116 = vmatpush1.msra.mxu0 %v56
    %2117 = vmatprep.subr.mxu0 0.0
    %2118 = vmatpush1.msra.mxu0 %v57
    %2119 = vmatprep.subr.mxu0 0.0
    %2120 = vmatpush1.msra.mxu0 %v58
    %2121 = vmatprep.subr.mxu0 0.0
    %2122 = vmatpush1.msra.mxu0 %v59
    %2123 = vmatprep.subr.mxu0 0.0
    %2124 = vmatpush1.msra.mxu0 0.0
    %2125 = vmatprep.subr.mxu0 0.0
    %2126 = vmatpush1.msra.mxu0 0.0
    %2127 = vmatprep.subr.mxu0 0.0
    %2128 = vmatpush1.msra.mxu0 0.0
    %2129 = vmatprep.subr.mxu0 0.0
    %2130 = vmatpush1.msra.mxu0 0.0
    %2131 = vmatprep.subr.mxu0 0.0
    %2132 = vmatpush1.msra.mxu0 0.0
    %2133 = vmatprep.subr.mxu0 0.0
    %2134 = vmatpush1.msra.mxu0 0.0
    %2135 = vmatprep.subr.mxu0 0.0
    %2136 = vmatpush1.msra.mxu0 0.0
    %2137 = vmatprep.subr.mxu0 0.0
    %2138 = vmatpush1.msra.mxu0 0.0
    %2139 = vmatprep.subr.mxu0 0.0
    %2140 = vmatpush1.msra.mxu0 0.0
    %2141 = vmatprep.subr.mxu0 0.0
    %2142 = vmatpush1.msra.mxu0 0.0
    %2143 = vmatprep.subr.mxu0 0.0
    %2144 = vmatpush1.msra.mxu0 0.0
    %2145 = vmatprep.subr.mxu0 0.0
    %2146 = vmatpush1.msra.mxu0 0.0
    %2147 = vmatprep.subr.mxu0 0.0
    %2148 = vmatpush1.msra.mxu0 0.0
    %2149 = vmatprep.subr.mxu0 0.0
    %2150 = vmatpush1.msra.mxu0 0.0
    %2151 = vmatprep.subr.mxu0 0.0
    %2152 = vmatpush1.msra.mxu0 0.0
    %2153 = vmatprep.subr.mxu0 0.0
    %2154 = vmatpush1.msra.mxu0 0.0
    %2155 = vmatprep.subr.mxu0 0.0
    %2156 = vmatpush1.msra.mxu0 0.0
    %2157 = vmatprep.subr.mxu0 0.0
    %2158 = vmatpush1.msra.mxu0 0.0
    %2159 = vmatprep.subr.mxu0 0.0
    %2160 = vmatpush1.msra.mxu0 0.0
    %2161 = vmatprep.subr.mxu0 0.0
    %2162 = vmatpush1.msra.mxu0 0.0
    %2163 = vmatprep.subr.mxu0 0.0
    %2164 = vmatpush1.msra.mxu0 0.0
    %2165 = vmatprep.subr.mxu0 0.0
    %2166 = vmatpush1.msra.mxu0 0.0
    %2167 = vmatprep.subr.mxu0 0.0
    %2168 = vmatpush1.msra.mxu0 0.0
    %2169 = vmatprep.subr.mxu0 0.0
    %2170 = vmatpush1.msra.mxu0 0.0
    %2171 = vmatprep.mubr.f32.mxu0 0.0
    %2172 = vmatmul.mubr.f32.gmra.mrb[0].mxu0 %v2105
    %v2173 = vpop.f32.mrb[0].mxu0
    %v2174 = vadd.f32 %v2101, %v2173
    %v2175 = vpop.f32.mrb[0].mxu0
    %2176 = vdwg.mxu0
    %v2177 = vtanh.pop %v2174
    %v2178 = vxor.u32 %v2174, 2147483648
    %v2179 = vmul.f32 %v2178, 1.442695
    %v2180 = vpow.pop %v2179
    %v2181 = vadd.f32 %v2180, 1.0
    %v2182 = vrcp.pop %v2181
    %v2183 = vmul.f32 1.0, %v2182
    %v2184 = vsel %vm38, %v2177, %v2183
    %v2185 = vmul.f32 %v2184, %v1924
    %2187 = vrot.lane.b32.xlu0 %v2184, 64
    %v2188 = vpop.permute.xlu0 %2187
    %v2190 = vmul.f32 %v2184, %v2188
    %2192 = vrot.lane.b32.xlu0 %v2190, 32
    %v2193 = vpop.permute.xlu0 %2192
    %v2195 = vadd.f32 %v2185, %v2193
    %v2196 = vtanh.pop %v2195
    %2198 = vrot.lane.b32.xlu0 %v2196, 64
    %v2199 = vpop.permute.xlu0 %2198
    %v2201 = vmul.f32 %v2184, %v2199
    %2203 = vrot.lane.b32.xlu0 %v2201, 32
    %v2204 = vpop.permute.xlu0 %2203
    %v2205 = vsel %vm116, %v2204, 0
    %2207 = vmatprep.subr.mxu0 0.0
    %2208 = vmatpush1.msra.mxu0 %v64
    %2209 = vmatprep.subr.mxu0 0.0
    %2210 = vmatpush1.msra.mxu0 %v65
    %2211 = vmatprep.subr.mxu0 0.0
    %2212 = vmatpush1.msra.mxu0 %v66
    %2213 = vmatprep.subr.mxu0 0.0
    %2214 = vmatpush1.msra.mxu0 %v67
    %2215 = vmatprep.subr.mxu0 0.0
    %2216 = vmatpush1.msra.mxu0 0.0
    %2217 = vmatprep.subr.mxu0 0.0
    %2218 = vmatpush1.msra.mxu0 0.0
    %2219 = vmatprep.subr.mxu0 0.0
    %2220 = vmatpush1.msra.mxu0 0.0
    %2221 = vmatprep.subr.mxu0 0.0
    %2222 = vmatpush1.msra.mxu0 0.0
    %2223 = vmatprep.subr.mxu0 0.0
    %2224 = vmatpush1.msra.mxu0 0.0
    %2225 = vmatprep.subr.mxu0 0.0
    %2226 = vmatpush1.msra.mxu0 0.0
    %2227 = vmatprep.subr.mxu0 0.0
    %2228 = vmatpush1.msra.mxu0 0.0
    %2229 = vmatprep.subr.mxu0 0.0
    %2230 = vmatpush1.msra.mxu0 0.0
    %2231 = vmatprep.subr.mxu0 0.0
    %2232 = vmatpush1.msra.mxu0 0.0
    %2233 = vmatprep.subr.mxu0 0.0
    %2234 = vmatpush1.msra.mxu0 0.0
    %2235 = vmatprep.subr.mxu0 0.0
    %2236 = vmatpush1.msra.mxu0 0.0
    %2237 = vmatprep.subr.mxu0 0.0
    %2238 = vmatpush1.msra.mxu0 0.0
    %2239 = vmatprep.subr.mxu0 0.0
    %2240 = vmatpush1.msra.mxu0 0.0
    %2241 = vmatprep.subr.mxu0 0.0
    %2242 = vmatpush1.msra.mxu0 0.0
    %2243 = vmatprep.subr.mxu0 0.0
    %2244 = vmatpush1.msra.mxu0 0.0
    %2245 = vmatprep.subr.mxu0 0.0
    %2246 = vmatpush1.msra.mxu0 0.0
    %2247 = vmatprep.subr.mxu0 0.0
    %2248 = vmatpush1.msra.mxu0 0.0
    %2249 = vmatprep.subr.mxu0 0.0
    %2250 = vmatpush1.msra.mxu0 0.0
    %2251 = vmatprep.subr.mxu0 0.0
    %2252 = vmatpush1.msra.mxu0 0.0
    %2253 = vmatprep.subr.mxu0 0.0
    %2254 = vmatpush1.msra.mxu0 0.0
    %2255 = vmatprep.subr.mxu0 0.0
    %2256 = vmatpush1.msra.mxu0 0.0
    %2257 = vmatprep.subr.mxu0 0.0
    %2258 = vmatpush1.msra.mxu0 0.0
    %2259 = vmatprep.subr.mxu0 0.0
    %2260 = vmatpush1.msra.mxu0 0.0
    %2261 = vmatprep.subr.mxu0 0.0
    %2262 = vmatpush1.msra.mxu0 0.0
    %2263 = vmatprep.subr.mxu0 0.0
    %2264 = vmatpush1.msra.mxu0 0.0
    %2265 = vmatprep.subr.mxu0 0.0
    %2266 = vmatpush1.msra.mxu0 0.0
    %2267 = vmatprep.subr.mxu0 0.0
    %2268 = vmatpush1.msra.mxu0 0.0
    %2269 = vmatprep.subr.mxu0 0.0
    %2270 = vmatpush1.msra.mxu0 0.0
    %2271 = vmatprep.mubr.f32.mxu0 0.0
    %2272 = vmatmul.mubr.f32.gmra.mrb[0].mxu0 %v2205
    %v2273 = vpop.f32.mrb[0].mxu0
    %v2274 = vadd.f32 %v1387, %v2273
    %v2275 = vpop.f32.mrb[0].mxu0
    %2276 = vdwg.mxu0
    %s2277 = scalar_lea.vmem [#allocation2], 32
    %2278 = vst [vmem:[%s2277] sm:$0xff] %v2274
    %v2279 = vsel %vm39, %v2274, -1e+30
    %2280 = vmax.xlane.f32.xlu0 %v2279
    %v2281 = vpop.xlane.xlu0 %2280
    %vm2282 = vcmp.eq.f32.partialorder %v2279, %v2281
    %v2283 = vsel %vm2282, %v35, 128.0
    %2284 = vmin.xlane.f32.xlu0 %v2283
    %v2285 = vpop.xlane.xlu0 %2284
    %vm2286 = vcmp.eq.f32.partialorder %v35, %v2285
    %v2287 = vsel %vm2286, 1, 0
    %v2288 = vcvt.s32.f32 %v2287
    %s2289 = scalar_lea.vmem %s2, 32
    %v2290 = vld [vmem:[%s2289] sm:$0xff]
    %2292 = vset.pattern.permute.xlu0 0
    %2293 = vperm.xlu0 %2292, %v2290
    %v2294 = vpop.permute.xlu0 %2293
    %v2296 = vmul.f32 %v2294, %v1192
    %v2297 = vsub.f32 1.0, %v2290
    %2299 = vset.pattern.permute.xlu0 0
    %2300 = vperm.xlu0 %2299, %v2297
    %v2301 = vpop.permute.xlu0 %2300
    %v2303 = vmul.f32 %v2301, %v2288
    %v2304 = vadd.f32 %v2296, %v2303
    %2305 = vmatprep.subr.mxu0 0.0
    %2306 = vmatpush1.msra.mxu0 %v60
    %2307 = vmatprep.subr.mxu0 0.0
    %2308 = vmatpush1.msra.mxu0 %v61
    %2309 = vmatprep.subr.mxu0 0.0
    %2310 = vmatpush1.msra.mxu0 %v62
    %2311 = vmatprep.subr.mxu0 0.0
    %2312 = vmatpush1.msra.mxu0 %v63
    %2313 = vmatprep.subr.mxu0 0.0
    %2314 = vmatpush1.msra.mxu0 0.0
    %2315 = vmatprep.subr.mxu0 0.0
    %2316 = vmatpush1.msra.mxu0 0.0
    %2317 = vmatprep.subr.mxu0 0.0
    %2318 = vmatpush1.msra.mxu0 0.0
    %2319 = vmatprep.subr.mxu0 0.0
    %2320 = vmatpush1.msra.mxu0 0.0
    %2321 = vmatprep.subr.mxu0 0.0
    %2322 = vmatpush1.msra.mxu0 0.0
    %2323 = vmatprep.subr.mxu0 0.0
    %2324 = vmatpush1.msra.mxu0 0.0
    %2325 = vmatprep.subr.mxu0 0.0
    %2326 = vmatpush1.msra.mxu0 0.0
    %2327 = vmatprep.subr.mxu0 0.0
    %2328 = vmatpush1.msra.mxu0 0.0
    %2329 = vmatprep.subr.mxu0 0.0
    %2330 = vmatpush1.msra.mxu0 0.0
    %2331 = vmatprep.subr.mxu0 0.0
    %2332 = vmatpush1.msra.mxu0 0.0
    %2333 = vmatprep.subr.mxu0 0.0
    %2334 = vmatpush1.msra.mxu0 0.0
    %2335 = vmatprep.subr.mxu0 0.0
    %2336 = vmatpush1.msra.mxu0 0.0
    %2337 = vmatprep.subr.mxu0 0.0
    %2338 = vmatpush1.msra.mxu0 0.0
    %2339 = vmatprep.subr.mxu0 0.0
    %2340 = vmatpush1.msra.mxu0 0.0
    %2341 = vmatprep.subr.mxu0 0.0
    %2342 = vmatpush1.msra.mxu0 0.0
    %2343 = vmatprep.subr.mxu0 0.0
    %2344 = vmatpush1.msra.mxu0 0.0
    %2345 = vmatprep.subr.mxu0 0.0
    %2346 = vmatpush1.msra.mxu0 0.0
    %2347 = vmatprep.subr.mxu0 0.0
    %2348 = vmatpush1.msra.mxu0 0.0
    %2349 = vmatprep.subr.mxu0 0.0
    %2350 = vmatpush1.msra.mxu0 0.0
    %2351 = vmatprep.subr.mxu0 0.0
    %2352 = vmatpush1.msra.mxu0 0.0
    %2353 = vmatprep.subr.mxu0 0.0
    %2354 = vmatpush1.msra.mxu0 0.0
    %2355 = vmatprep.subr.mxu0 0.0
    %2356 = vmatpush1.msra.mxu0 0.0
    %2357 = vmatprep.subr.mxu0 0.0
    %2358 = vmatpush1.msra.mxu0 0.0
    %2359 = vmatprep.subr.mxu0 0.0
    %2360 = vmatpush1.msra.mxu0 0.0
    %2361 = vmatprep.subr.mxu0 0.0
    %2362 = vmatpush1.msra.mxu0 0.0
    %2363 = vmatprep.subr.mxu0 0.0
    %2364 = vmatpush1.msra.mxu0 0.0
    %2365 = vmatprep.subr.mxu0 0.0
    %2366 = vmatpush1.msra.mxu0 0.0
    %2367 = vmatprep.subr.mxu0 0.0
    %2368 = vmatpush1.msra.mxu0 0.0
    %2369 = vmatprep.mubr.f32.mxu0 0.0
    %2370 = vmatmul.mubr.f32.gmra.mrb[0].mxu0 %v2205
    %v2371 = vpop.f32.mrb[0].mxu0
    %v2372 = vadd.f32 0.0, %v2371
    %v2373 = vpop.f32.mrb[0].mxu0
    %2374 = vdwg.mxu0
    %v2376 = vsel %vm190, %v2304, 0
    %2378 = vmatprep.subr.mxu0 0.0
    %2379 = vmatpush1.msra.mxu0 %v52
    %2380 = vmatprep.subr.mxu0 0.0
    %2381 = vmatpush1.msra.mxu0 %v53
    %2382 = vmatprep.subr.mxu0 0.0
    %2383 = vmatpush1.msra.mxu0 %v54
    %2384 = vmatprep.subr.mxu0 0.0
    %2385 = vmatpush1.msra.mxu0 %v55
    %2386 = vmatprep.subr.mxu0 0.0
    %2387 = vmatpush1.msra.mxu0 %v56
    %2388 = vmatprep.subr.mxu0 0.0
    %2389 = vmatpush1.msra.mxu0 %v57
    %2390 = vmatprep.subr.mxu0 0.0
    %2391 = vmatpush1.msra.mxu0 %v58
    %2392 = vmatprep.subr.mxu0 0.0
    %2393 = vmatpush1.msra.mxu0 %v59
    %2394 = vmatprep.subr.mxu0 0.0
    %2395 = vmatpush1.msra.mxu0 0.0
    %2396 = vmatprep.subr.mxu0 0.0
    %2397 = vmatpush1.msra.mxu0 0.0
    %2398 = vmatprep.subr.mxu0 0.0
    %2399 = vmatpush1.msra.mxu0 0.0
    %2400 = vmatprep.subr.mxu0 0.0
    %2401 = vmatpush1.msra.mxu0 0.0
    %2402 = vmatprep.subr.mxu0 0.0
    %2403 = vmatpush1.msra.mxu0 0.0
    %2404 = vmatprep.subr.mxu0 0.0
    %2405 = vmatpush1.msra.mxu0 0.0
    %2406 = vmatprep.subr.mxu0 0.0
    %2407 = vmatpush1.msra.mxu0 0.0
    %2408 = vmatprep.subr.mxu0 0.0
    %2409 = vmatpush1.msra.mxu0 0.0
    %2410 = vmatprep.subr.mxu0 0.0
    %2411 = vmatpush1.msra.mxu0 0.0
    %2412 = vmatprep.subr.mxu0 0.0
    %2413 = vmatpush1.msra.mxu0 0.0
    %2414 = vmatprep.subr.mxu0 0.0
    %2415 = vmatpush1.msra.mxu0 0.0
    %2416 = vmatprep.subr.mxu0 0.0
    %2417 = vmatpush1.msra.mxu0 0.0
    %2418 = vmatprep.subr.mxu0 0.0
    %2419 = vmatpush1.msra.mxu0 0.0
    %2420 = vmatprep.subr.mxu0 0.0
    %2421 = vmatpush1.msra.mxu0 0.0
    %2422 = vmatprep.subr.mxu0 0.0
    %2423 = vmatpush1.msra.mxu0 0.0
    %2424 = vmatprep.subr.mxu0 0.0
    %2425 = vmatpush1.msra.mxu0 0.0
    %2426 = vmatprep.subr.mxu0 0.0
    %2427 = vmatpush1.msra.mxu0 0.0
    %2428 = vmatprep.subr.mxu0 0.0
    %2429 = vmatpush1.msra.mxu0 0.0
    %2430 = vmatprep.subr.mxu0 0.0
    %2431 = vmatpush1.msra.mxu0 0.0
    %2432 = vmatprep.subr.mxu0 0.0
    %2433 = vmatpush1.msra.mxu0 0.0
    %2434 = vmatprep.subr.mxu0 0.0
    %2435 = vmatpush1.msra.mxu0 0.0
    %2436 = vmatprep.subr.mxu0 0.0
    %2437 = vmatpush1.msra.mxu0 0.0
    %2438 = vmatprep.subr.mxu0 0.0
    %2439 = vmatpush1.msra.mxu0 0.0
    %2440 = vmatprep.subr.mxu0 0.0
    %2441 = vmatpush1.msra.mxu0 0.0
    %2442 = vmatprep.mubr.f32.mxu0 0.0
    %2443 = vmatmul.mubr.f32.gmra.mrb[0].mxu0 %v2376
    %v2444 = vpop.f32.mrb[0].mxu0
    %v2445 = vadd.f32 %v2372, %v2444
    %v2446 = vpop.f32.mrb[0].mxu0
    %2447 = vdwg.mxu0
    %v2448 = vtanh.pop %v2445
    %v2449 = vxor.u32 %v2445, 2147483648
    %v2450 = vmul.f32 %v2449, 1.442695
    %v2451 = vpow.pop %v2450
    %v2452 = vadd.f32 %v2451, 1.0
    %v2453 = vrcp.pop %v2452
    %v2454 = vmul.f32 1.0, %v2453
    %v2455 = vsel %vm38, %v2448, %v2454
    %v2456 = vmul.f32 %v2455, %v2195
    %2458 = vrot.lane.b32.xlu0 %v2455, 64
    %v2459 = vpop.permute.xlu0 %2458
    %v2461 = vmul.f32 %v2455, %v2459
    %2463 = vrot.lane.b32.xlu0 %v2461, 32
    %v2464 = vpop.permute.xlu0 %2463
    %v2466 = vadd.f32 %v2456, %v2464
    %v2467 = vtanh.pop %v2466
    %2469 = vrot.lane.b32.xlu0 %v2467, 64
    %v2470 = vpop.permute.xlu0 %2469
    %v2472 = vmul.f32 %v2455, %v2470
    %2474 = vrot.lane.b32.xlu0 %v2472, 32
    %v2475 = vpop.permute.xlu0 %2474
    %v2476 = vsel %vm116, %v2475, 0
    %2478 = vmatprep.subr.mxu0 0.0
    %2479 = vmatpush1.msra.mxu0 %v64
    %2480 = vmatprep.subr.mxu0 0.0
    %2481 = vmatpush1.msra.mxu0 %v65
    %2482 = vmatprep.subr.mxu0 0.0
    %2483 = vmatpush1.msra.mxu0 %v66
    %2484 = vmatprep.subr.mxu0 0.0
    %2485 = vmatpush1.msra.mxu0 %v67
    %2486 = vmatprep.subr.mxu0 0.0
    %2487 = vmatpush1.msra.mxu0 0.0
    %2488 = vmatprep.subr.mxu0 0.0
    %2489 = vmatpush1.msra.mxu0 0.0
    %2490 = vmatprep.subr.mxu0 0.0
    %2491 = vmatpush1.msra.mxu0 0.0
    %2492 = vmatprep.subr.mxu0 0.0
    %2493 = vmatpush1.msra.mxu0 0.0
    %2494 = vmatprep.subr.mxu0 0.0
    %2495 = vmatpush1.msra.mxu0 0.0
    %2496 = vmatprep.subr.mxu0 0.0
    %2497 = vmatpush1.msra.mxu0 0.0
    %2498 = vmatprep.subr.mxu0 0.0
    %2499 = vmatpush1.msra.mxu0 0.0
    %2500 = vmatprep.subr.mxu0 0.0
    %2501 = vmatpush1.msra.mxu0 0.0
    %2502 = vmatprep.subr.mxu0 0.0
    %2503 = vmatpush1.msra.mxu0 0.0
    %2504 = vmatprep.subr.mxu0 0.0
    %2505 = vmatpush1.msra.mxu0 0.0
    %2506 = vmatprep.subr.mxu0 0.0
    %2507 = vmatpush1.msra.mxu0 0.0
    %2508 = vmatprep.subr.mxu0 0.0
    %2509 = vmatpush1.msra.mxu0 0.0
    %2510 = vmatprep.subr.mxu0 0.0
    %2511 = vmatpush1.msra.mxu0 0.0
    %2512 = vmatprep.subr.mxu0 0.0
    %2513 = vmatpush1.msra.mxu0 0.0
    %2514 = vmatprep.subr.mxu0 0.0
    %2515 = vmatpush1.msra.mxu0 0.0
    %2516 = vmatprep.subr.mxu0 0.0
    %2517 = vmatpush1.msra.mxu0 0.0
    %2518 = vmatprep.subr.mxu0 0.0
    %2519 = vmatpush1.msra.mxu0 0.0
    %2520 = vmatprep.subr.mxu0 0.0
    %2521 = vmatpush1.msra.mxu0 0.0
    %2522 = vmatprep.subr.mxu0 0.0
    %2523 = vmatpush1.msra.mxu0 0.0
    %2524 = vmatprep.subr.mxu0 0.0
    %2525 = vmatpush1.msra.mxu0 0.0
    %2526 = vmatprep.subr.mxu0 0.0
    %2527 = vmatpush1.msra.mxu0 0.0
    %2528 = vmatprep.subr.mxu0 0.0
    %2529 = vmatpush1.msra.mxu0 0.0
    %2530 = vmatprep.subr.mxu0 0.0
    %2531 = vmatpush1.msra.mxu0 0.0
    %2532 = vmatprep.subr.mxu0 0.0
    %2533 = vmatpush1.msra.mxu0 0.0
    %2534 = vmatprep.subr.mxu0 0.0
    %2535 = vmatpush1.msra.mxu0 0.0
    %2536 = vmatprep.subr.mxu0 0.0
    %2537 = vmatpush1.msra.mxu0 0.0
    %2538 = vmatprep.subr.mxu0 0.0
    %2539 = vmatpush1.msra.mxu0 0.0
    %2540 = vmatprep.subr.mxu0 0.0
    %2541 = vmatpush1.msra.mxu0 0.0
    %2542 = vmatprep.mubr.f32.mxu0 0.0
    %2543 = vmatmul.mubr.f32.gmra.mrb[0].mxu0 %v2476
    %v2544 = vpop.f32.mrb[0].mxu0
    %v2545 = vadd.f32 %v1387, %v2544
    %v2546 = vpop.f32.mrb[0].mxu0
    %2547 = vdwg.mxu0
    %s2548 = scalar_lea.vmem [#allocation2], 40
    %2549 = vst [vmem:[%s2548] sm:$0xff] %v2545
    %v2550 = vsel %vm39, %v2545, -1e+30
    %2551 = vmax.xlane.f32.xlu0 %v2550
    %v2552 = vpop.xlane.xlu0 %2551
    %vm2553 = vcmp.eq.f32.partialorder %v2550, %v2552
    %v2554 = vsel %vm2553, %v35, 128.0
    %2555 = vmin.xlane.f32.xlu0 %v2554
    %v2556 = vpop.xlane.xlu0 %2555
    %vm2557 = vcmp.eq.f32.partialorder %v35, %v2556
    %v2558 = vsel %vm2557, 1, 0
    %v2559 = vcvt.s32.f32 %v2558
    %s2560 = scalar_lea.vmem %s2, 40
    %v2561 = vld [vmem:[%s2560] sm:$0xff]
    %2563 = vset.pattern.permute.xlu0 0
    %2564 = vperm.xlu0 %2563, %v2561
    %v2565 = vpop.permute.xlu0 %2564
    %v2567 = vmul.f32 %v2565, %v1200
    %v2568 = vsub.f32 1.0, %v2561
    %2570 = vset.pattern.permute.xlu0 0
    %2571 = vperm.xlu0 %2570, %v2568
    %v2572 = vpop.permute.xlu0 %2571
    %v2574 = vmul.f32 %v2572, %v2559
    %v2575 = vadd.f32 %v2567, %v2574
    %2576 = vmatprep.subr.mxu0 0.0
    %2577 = vmatpush1.msra.mxu0 %v60
    %2578 = vmatprep.subr.mxu0 0.0
    %2579 = vmatpush1.msra.mxu0 %v61
    %2580 = vmatprep.subr.mxu0 0.0
    %2581 = vmatpush1.msra.mxu0 %v62
    %2582 = vmatprep.subr.mxu0 0.0
    %2583 = vmatpush1.msra.mxu0 %v63
    %2584 = vmatprep.subr.mxu0 0.0
    %2585 = vmatpush1.msra.mxu0 0.0
    %2586 = vmatprep.subr.mxu0 0.0
    %2587 = vmatpush1.msra.mxu0 0.0
    %2588 = vmatprep.subr.mxu0 0.0
    %2589 = vmatpush1.msra.mxu0 0.0
    %2590 = vmatprep.subr.mxu0 0.0
    %2591 = vmatpush1.msra.mxu0 0.0
    %2592 = vmatprep.subr.mxu0 0.0
    %2593 = vmatpush1.msra.mxu0 0.0
    %2594 = vmatprep.subr.mxu0 0.0
    %2595 = vmatpush1.msra.mxu0 0.0
    %2596 = vmatprep.subr.mxu0 0.0
    %2597 = vmatpush1.msra.mxu0 0.0
    %2598 = vmatprep.subr.mxu0 0.0
    %2599 = vmatpush1.msra.mxu0 0.0
    %2600 = vmatprep.subr.mxu0 0.0
    %2601 = vmatpush1.msra.mxu0 0.0
    %2602 = vmatprep.subr.mxu0 0.0
    %2603 = vmatpush1.msra.mxu0 0.0
    %2604 = vmatprep.subr.mxu0 0.0
    %2605 = vmatpush1.msra.mxu0 0.0
    %2606 = vmatprep.subr.mxu0 0.0
    %2607 = vmatpush1.msra.mxu0 0.0
    %2608 = vmatprep.subr.mxu0 0.0
    %2609 = vmatpush1.msra.mxu0 0.0
    %2610 = vmatprep.subr.mxu0 0.0
    %2611 = vmatpush1.msra.mxu0 0.0
    %2612 = vmatprep.subr.mxu0 0.0
    %2613 = vmatpush1.msra.mxu0 0.0
    %2614 = vmatprep.subr.mxu0 0.0
    %2615 = vmatpush1.msra.mxu0 0.0
    %2616 = vmatprep.subr.mxu0 0.0
    %2617 = vmatpush1.msra.mxu0 0.0
    %2618 = vmatprep.subr.mxu0 0.0
    %2619 = vmatpush1.msra.mxu0 0.0
    %2620 = vmatprep.subr.mxu0 0.0
    %2621 = vmatpush1.msra.mxu0 0.0
    %2622 = vmatprep.subr.mxu0 0.0
    %2623 = vmatpush1.msra.mxu0 0.0
    %2624 = vmatprep.subr.mxu0 0.0
    %2625 = vmatpush1.msra.mxu0 0.0
    %2626 = vmatprep.subr.mxu0 0.0
    %2627 = vmatpush1.msra.mxu0 0.0
    %2628 = vmatprep.subr.mxu0 0.0
    %2629 = vmatpush1.msra.mxu0 0.0
    %2630 = vmatprep.subr.mxu0 0.0
    %2631 = vmatpush1.msra.mxu0 0.0
    %2632 = vmatprep.subr.mxu0 0.0
    %2633 = vmatpush1.msra.mxu0 0.0
    %2634 = vmatprep.subr.mxu0 0.0
    %2635 = vmatpush1.msra.mxu0 0.0
    %2636 = vmatprep.subr.mxu0 0.0
    %2637 = vmatpush1.msra.mxu0 0.0
    %2638 = vmatprep.subr.mxu0 0.0
    %2639 = vmatpush1.msra.mxu0 0.0
    %2640 = vmatprep.mubr.f32.mxu0 0.0
    %2641 = vmatmul.mubr.f32.gmra.mrb[0].mxu0 %v2476
    %v2642 = vpop.f32.mrb[0].mxu0
    %v2643 = vadd.f32 0.0, %v2642
    %v2644 = vpop.f32.mrb[0].mxu0
    %2645 = vdwg.mxu0
    %v2647 = vsel %vm190, %v2575, 0
    %2649 = vmatprep.subr.mxu0 0.0
    %2650 = vmatpush1.msra.mxu0 %v52
    %2651 = vmatprep.subr.mxu0 0.0
    %2652 = vmatpush1.msra.mxu0 %v53
    %2653 = vmatprep.subr.mxu0 0.0
    %2654 = vmatpush1.msra.mxu0 %v54
    %2655 = vmatprep.subr.mxu0 0.0
    %2656 = vmatpush1.msra.mxu0 %v55
    %2657 = vmatprep.subr.mxu0 0.0
    %2658 = vmatpush1.msra.mxu0 %v56
    %2659 = vmatprep.subr.mxu0 0.0
    %2660 = vmatpush1.msra.mxu0 %v57
    %2661 = vmatprep.subr.mxu0 0.0
    %2662 = vmatpush1.msra.mxu0 %v58
    %2663 = vmatprep.subr.mxu0 0.0
    %2664 = vmatpush1.msra.mxu0 %v59
    %2665 = vmatprep.subr.mxu0 0.0
    %2666 = vmatpush1.msra.mxu0 0.0
    %2667 = vmatprep.subr.mxu0 0.0
    %2668 = vmatpush1.msra.mxu0 0.0
    %2669 = vmatprep.subr.mxu0 0.0
    %2670 = vmatpush1.msra.mxu0 0.0
    %2671 = vmatprep.subr.mxu0 0.0
    %2672 = vmatpush1.msra.mxu0 0.0
    %2673 = vmatprep.subr.mxu0 0.0
    %2674 = vmatpush1.msra.mxu0 0.0
    %2675 = vmatprep.subr.mxu0 0.0
    %2676 = vmatpush1.msra.mxu0 0.0
    %2677 = vmatprep.subr.mxu0 0.0
    %2678 = vmatpush1.msra.mxu0 0.0
    %2679 = vmatprep.subr.mxu0 0.0
    %2680 = vmatpush1.msra.mxu0 0.0
    %2681 = vmatprep.subr.mxu0 0.0
    %2682 = vmatpush1.msra.mxu0 0.0
    %2683 = vmatprep.subr.mxu0 0.0
    %2684 = vmatpush1.msra.mxu0 0.0
    %2685 = vmatprep.subr.mxu0 0.0
    %2686 = vmatpush1.msra.mxu0 0.0
    %2687 = vmatprep.subr.mxu0 0.0
    %2688 = vmatpush1.msra.mxu0 0.0
    %2689 = vmatprep.subr.mxu0 0.0
    %2690 = vmatpush1.msra.mxu0 0.0
    %2691 = vmatprep.subr.mxu0 0.0
    %2692 = vmatpush1.msra.mxu0 0.0
    %2693 = vmatprep.subr.mxu0 0.0
    %2694 = vmatpush1.msra.mxu0 0.0
    %2695 = vmatprep.subr.mxu0 0.0
    %2696 = vmatpush1.msra.mxu0 0.0
    %2697 = vmatprep.subr.mxu0 0.0
    %2698 = vmatpush1.msra.mxu0 0.0
    %2699 = vmatprep.subr.mxu0 0.0
    %2700 = vmatpush1.msra.mxu0 0.0
    %2701 = vmatprep.subr.mxu0 0.0
    %2702 = vmatpush1.msra.mxu0 0.0
    %2703 = vmatprep.subr.mxu0 0.0
    %2704 = vmatpush1.msra.mxu0 0.0
    %2705 = vmatprep.subr.mxu0 0.0
    %2706 = vmatpush1.msra.mxu0 0.0
    %2707 = vmatprep.subr.mxu0 0.0
    %2708 = vmatpush1.msra.mxu0 0.0
    %2709 = vmatprep.subr.mxu0 0.0
    %2710 = vmatpush1.msra.mxu0 0.0
    %2711 = vmatprep.subr.mxu0 0.0
    %2712 = vmatpush1.msra.mxu0 0.0
    %2713 = vmatprep.mubr.f32.mxu0 0.0
    %2714 = vmatmul.mubr.f32.gmra.mrb[0].mxu0 %v2647
    %v2715 = vpop.f32.mrb[0].mxu0
    %v2716 = vadd.f32 %v2643, %v2715
    %v2717 = vpop.f32.mrb[0].mxu0
    %2718 = vdwg.mxu0
    %v2719 = vtanh.pop %v2716
    %v2720 = vxor.u32 %v2716, 2147483648
    %v2721 = vmul.f32 %v2720, 1.442695
    %v2722 = vpow.pop %v2721
    %v2723 = vadd.f32 %v2722, 1.0
    %v2724 = vrcp.pop %v2723
    %v2725 = vmul.f32 1.0, %v2724
    %v2726 = vsel %vm38, %v2719, %v2725
    %v2727 = vmul.f32 %v2726, %v2466
    %2729 = vrot.lane.b32.xlu0 %v2726, 64
    %v2730 = vpop.permute.xlu0 %2729
    %v2732 = vmul.f32 %v2726, %v2730
    %2734 = vrot.lane.b32.xlu0 %v2732, 32
    %v2735 = vpop.permute.xlu0 %2734
    %v2737 = vadd.f32 %v2727, %v2735
    %v2738 = vtanh.pop %v2737
    %2740 = vrot.lane.b32.xlu0 %v2738, 64
    %v2741 = vpop.permute.xlu0 %2740
    %v2743 = vmul.f32 %v2726, %v2741
    %2745 = vrot.lane.b32.xlu0 %v2743, 32
    %v2746 = vpop.permute.xlu0 %2745
    %v2747 = vsel %vm116, %v2746, 0
    %2749 = vmatprep.subr.mxu0 0.0
    %2750 = vmatpush1.msra.mxu0 %v64
    %2751 = vmatprep.subr.mxu0 0.0
    %2752 = vmatpush1.msra.mxu0 %v65
    %2753 = vmatprep.subr.mxu0 0.0
    %2754 = vmatpush1.msra.mxu0 %v66
    %2755 = vmatprep.subr.mxu0 0.0
    %2756 = vmatpush1.msra.mxu0 %v67
    %2757 = vmatprep.subr.mxu0 0.0
    %2758 = vmatpush1.msra.mxu0 0.0
    %2759 = vmatprep.subr.mxu0 0.0
    %2760 = vmatpush1.msra.mxu0 0.0
    %2761 = vmatprep.subr.mxu0 0.0
    %2762 = vmatpush1.msra.mxu0 0.0
    %2763 = vmatprep.subr.mxu0 0.0
    %2764 = vmatpush1.msra.mxu0 0.0
    %2765 = vmatprep.subr.mxu0 0.0
    %2766 = vmatpush1.msra.mxu0 0.0
    %2767 = vmatprep.subr.mxu0 0.0
    %2768 = vmatpush1.msra.mxu0 0.0
    %2769 = vmatprep.subr.mxu0 0.0
    %2770 = vmatpush1.msra.mxu0 0.0
    %2771 = vmatprep.subr.mxu0 0.0
    %2772 = vmatpush1.msra.mxu0 0.0
    %2773 = vmatprep.subr.mxu0 0.0
    %2774 = vmatpush1.msra.mxu0 0.0
    %2775 = vmatprep.subr.mxu0 0.0
    %2776 = vmatpush1.msra.mxu0 0.0
    %2777 = vmatprep.subr.mxu0 0.0
    %2778 = vmatpush1.msra.mxu0 0.0
    %2779 = vmatprep.subr.mxu0 0.0
    %2780 = vmatpush1.msra.mxu0 0.0
    %2781 = vmatprep.subr.mxu0 0.0
    %2782 = vmatpush1.msra.mxu0 0.0
    %2783 = vmatprep.subr.mxu0 0.0
    %2784 = vmatpush1.msra.mxu0 0.0
    %2785 = vmatprep.subr.mxu0 0.0
    %2786 = vmatpush1.msra.mxu0 0.0
    %2787 = vmatprep.subr.mxu0 0.0
    %2788 = vmatpush1.msra.mxu0 0.0
    %2789 = vmatprep.subr.mxu0 0.0
    %2790 = vmatpush1.msra.mxu0 0.0
    %2791 = vmatprep.subr.mxu0 0.0
    %2792 = vmatpush1.msra.mxu0 0.0
    %2793 = vmatprep.subr.mxu0 0.0
    %2794 = vmatpush1.msra.mxu0 0.0
    %2795 = vmatprep.subr.mxu0 0.0
    %2796 = vmatpush1.msra.mxu0 0.0
    %2797 = vmatprep.subr.mxu0 0.0
    %2798 = vmatpush1.msra.mxu0 0.0
    %2799 = vmatprep.subr.mxu0 0.0
    %2800 = vmatpush1.msra.mxu0 0.0
    %2801 = vmatprep.subr.mxu0 0.0
    %2802 = vmatpush1.msra.mxu0 0.0
    %2803 = vmatprep.subr.mxu0 0.0
    %2804 = vmatpush1.msra.mxu0 0.0
    %2805 = vmatprep.subr.mxu0 0.0
    %2806 = vmatpush1.msra.mxu0 0.0
    %2807 = vmatprep.subr.mxu0 0.0
    %2808 = vmatpush1.msra.mxu0 0.0
    %2809 = vmatprep.subr.mxu0 0.0
    %2810 = vmatpush1.msra.mxu0 0.0
    %2811 = vmatprep.subr.mxu0 0.0
    %2812 = vmatpush1.msra.mxu0 0.0
    %2813 = vmatprep.mubr.f32.mxu0 0.0
    %2814 = vmatmul.mubr.f32.gmra.mrb[0].mxu0 %v2747
    %v2815 = vpop.f32.mrb[0].mxu0
    %v2816 = vadd.f32 %v1387, %v2815
    %v2817 = vpop.f32.mrb[0].mxu0
    %2818 = vdwg.mxu0
    %s2819 = scalar_lea.vmem [#allocation2], 48
    %2820 = vst [vmem:[%s2819] sm:$0xff] %v2816
    %v2821 = vsel %vm39, %v2816, -1e+30
    %2822 = vmax.xlane.f32.xlu0 %v2821
    %v2823 = vpop.xlane.xlu0 %2822
    %vm2824 = vcmp.eq.f32.partialorder %v2821, %v2823
    %v2825 = vsel %vm2824, %v35, 128.0
    %2826 = vmin.xlane.f32.xlu0 %v2825
    %v2827 = vpop.xlane.xlu0 %2826
    %vm2828 = vcmp.eq.f32.partialorder %v35, %v2827
    %v2829 = vsel %vm2828, 1, 0
    %v2830 = vcvt.s32.f32 %v2829
    %s2831 = scalar_lea.vmem %s2, 48
    %v2832 = vld [vmem:[%s2831] sm:$0xff]
    %2834 = vset.pattern.permute.xlu0 0
    %2835 = vperm.xlu0 %2834, %v2832
    %v2836 = vpop.permute.xlu0 %2835
    %v2838 = vmul.f32 %v2836, %v1208
    %v2839 = vsub.f32 1.0, %v2832
    %2841 = vset.pattern.permute.xlu0 0
    %2842 = vperm.xlu0 %2841, %v2839
    %v2843 = vpop.permute.xlu0 %2842
    %v2845 = vmul.f32 %v2843, %v2830
    %v2846 = vadd.f32 %v2838, %v2845
    %2847 = vmatprep.subr.mxu0 0.0
    %2848 = vmatpush1.msra.mxu0 %v60
    %2849 = vmatprep.subr.mxu0 0.0
    %2850 = vmatpush1.msra.mxu0 %v61
    %2851 = vmatprep.subr.mxu0 0.0
    %2852 = vmatpush1.msra.mxu0 %v62
    %2853 = vmatprep.subr.mxu0 0.0
    %2854 = vmatpush1.msra.mxu0 %v63
    %2855 = vmatprep.subr.mxu0 0.0
    %2856 = vmatpush1.msra.mxu0 0.0
    %2857 = vmatprep.subr.mxu0 0.0
    %2858 = vmatpush1.msra.mxu0 0.0
    %2859 = vmatprep.subr.mxu0 0.0
    %2860 = vmatpush1.msra.mxu0 0.0
    %2861 = vmatprep.subr.mxu0 0.0
    %2862 = vmatpush1.msra.mxu0 0.0
    %2863 = vmatprep.subr.mxu0 0.0
    %2864 = vmatpush1.msra.mxu0 0.0
    %2865 = vmatprep.subr.mxu0 0.0
    %2866 = vmatpush1.msra.mxu0 0.0
    %2867 = vmatprep.subr.mxu0 0.0
    %2868 = vmatpush1.msra.mxu0 0.0
    %2869 = vmatprep.subr.mxu0 0.0
    %2870 = vmatpush1.msra.mxu0 0.0
    %2871 = vmatprep.subr.mxu0 0.0
    %2872 = vmatpush1.msra.mxu0 0.0
    %2873 = vmatprep.subr.mxu0 0.0
    %2874 = vmatpush1.msra.mxu0 0.0
    %2875 = vmatprep.subr.mxu0 0.0
    %2876 = vmatpush1.msra.mxu0 0.0
    %2877 = vmatprep.subr.mxu0 0.0
    %2878 = vmatpush1.msra.mxu0 0.0
    %2879 = vmatprep.subr.mxu0 0.0
    %2880 = vmatpush1.msra.mxu0 0.0
    %2881 = vmatprep.subr.mxu0 0.0
    %2882 = vmatpush1.msra.mxu0 0.0
    %2883 = vmatprep.subr.mxu0 0.0
    %2884 = vmatpush1.msra.mxu0 0.0
    %2885 = vmatprep.subr.mxu0 0.0
    %2886 = vmatpush1.msra.mxu0 0.0
    %2887 = vmatprep.subr.mxu0 0.0
    %2888 = vmatpush1.msra.mxu0 0.0
    %2889 = vmatprep.subr.mxu0 0.0
    %2890 = vmatpush1.msra.mxu0 0.0
    %2891 = vmatprep.subr.mxu0 0.0
    %2892 = vmatpush1.msra.mxu0 0.0
    %2893 = vmatprep.subr.mxu0 0.0
    %2894 = vmatpush1.msra.mxu0 0.0
    %2895 = vmatprep.subr.mxu0 0.0
    %2896 = vmatpush1.msra.mxu0 0.0
    %2897 = vmatprep.subr.mxu0 0.0
    %2898 = vmatpush1.msra.mxu0 0.0
    %2899 = vmatprep.subr.mxu0 0.0
    %2900 = vmatpush1.msra.mxu0 0.0
    %2901 = vmatprep.subr.mxu0 0.0
    %2902 = vmatpush1.msra.mxu0 0.0
    %2903 = vmatprep.subr.mxu0 0.0
    %2904 = vmatpush1.msra.mxu0 0.0
    %2905 = vmatprep.subr.mxu0 0.0
    %2906 = vmatpush1.msra.mxu0 0.0
    %2907 = vmatprep.subr.mxu0 0.0
    %2908 = vmatpush1.msra.mxu0 0.0
    %2909 = vmatprep.subr.mxu0 0.0
    %2910 = vmatpush1.msra.mxu0 0.0
    %2911 = vmatprep.mubr.f32.mxu0 0.0
    %2912 = vmatmul.mubr.f32.gmra.mrb[0].mxu0 %v2747
    %v2913 = vpop.f32.mrb[0].mxu0
    %v2914 = vadd.f32 0.0, %v2913
    %v2915 = vpop.f32.mrb[0].mxu0
    %2916 = vdwg.mxu0
    %v2918 = vsel %vm190, %v2846, 0
    %2920 = vmatprep.subr.mxu0 0.0
    %2921 = vmatpush1.msra.mxu0 %v52
    %2922 = vmatprep.subr.mxu0 0.0
    %2923 = vmatpush1.msra.mxu0 %v53
    %2924 = vmatprep.subr.mxu0 0.0
    %2925 = vmatpush1.msra.mxu0 %v54
    %2926 = vmatprep.subr.mxu0 0.0
    %2927 = vmatpush1.msra.mxu0 %v55
    %2928 = vmatprep.subr.mxu0 0.0
    %2929 = vmatpush1.msra.mxu0 %v56
    %2930 = vmatprep.subr.mxu0 0.0
    %2931 = vmatpush1.msra.mxu0 %v57
    %2932 = vmatprep.subr.mxu0 0.0
    %2933 = vmatpush1.msra.mxu0 %v58
    %2934 = vmatprep.subr.mxu0 0.0
    %2935 = vmatpush1.msra.mxu0 %v59
    %2936 = vmatprep.subr.mxu0 0.0
    %2937 = vmatpush1.msra.mxu0 0.0
    %2938 = vmatprep.subr.mxu0 0.0
    %2939 = vmatpush1.msra.mxu0 0.0
    %2940 = vmatprep.subr.mxu0 0.0
    %2941 = vmatpush1.msra.mxu0 0.0
    %2942 = vmatprep.subr.mxu0 0.0
    %2943 = vmatpush1.msra.mxu0 0.0
    %2944 = vmatprep.subr.mxu0 0.0
    %2945 = vmatpush1.msra.mxu0 0.0
    %2946 = vmatprep.subr.mxu0 0.0
    %2947 = vmatpush1.msra.mxu0 0.0
    %2948 = vmatprep.subr.mxu0 0.0
    %2949 = vmatpush1.msra.mxu0 0.0
    %2950 = vmatprep.subr.mxu0 0.0
    %2951 = vmatpush1.msra.mxu0 0.0
    %2952 = vmatprep.subr.mxu0 0.0
    %2953 = vmatpush1.msra.mxu0 0.0
    %2954 = vmatprep.subr.mxu0 0.0
    %2955 = vmatpush1.msra.mxu0 0.0
    %2956 = vmatprep.subr.mxu0 0.0
    %2957 = vmatpush1.msra.mxu0 0.0
    %2958 = vmatprep.subr.mxu0 0.0
    %2959 = vmatpush1.msra.mxu0 0.0
    %2960 = vmatprep.subr.mxu0 0.0
    %2961 = vmatpush1.msra.mxu0 0.0
    %2962 = vmatprep.subr.mxu0 0.0
    %2963 = vmatpush1.msra.mxu0 0.0
    %2964 = vmatprep.subr.mxu0 0.0
    %2965 = vmatpush1.msra.mxu0 0.0
    %2966 = vmatprep.subr.mxu0 0.0
    %2967 = vmatpush1.msra.mxu0 0.0
    %2968 = vmatprep.subr.mxu0 0.0
    %2969 = vmatpush1.msra.mxu0 0.0
    %2970 = vmatprep.subr.mxu0 0.0
    %2971 = vmatpush1.msra.mxu0 0.0
    %2972 = vmatprep.subr.mxu0 0.0
    %2973 = vmatpush1.msra.mxu0 0.0
    %2974 = vmatprep.subr.mxu0 0.0
    %2975 = vmatpush1.msra.mxu0 0.0
    %2976 = vmatprep.subr.mxu0 0.0
    %2977 = vmatpush1.msra.mxu0 0.0
    %2978 = vmatprep.subr.mxu0 0.0
    %2979 = vmatpush1.msra.mxu0 0.0
    %2980 = vmatprep.subr.mxu0 0.0
    %2981 = vmatpush1.msra.mxu0 0.0
    %2982 = vmatprep.subr.mxu0 0.0
    %2983 = vmatpush1.msra.mxu0 0.0
    %2984 = vmatprep.mubr.f32.mxu0 0.0
    %2985 = vmatmul.mubr.f32.gmra.mrb[0].mxu0 %v2918
    %v2986 = vpop.f32.mrb[0].mxu0
    %v2987 = vadd.f32 %v2914, %v2986
    %v2988 = vpop.f32.mrb[0].mxu0
    %2989 = vdwg.mxu0
    %v2990 = vtanh.pop %v2987
    %v2991 = vxor.u32 %v2987, 2147483648
    %v2992 = vmul.f32 %v2991, 1.442695
    %v2993 = vpow.pop %v2992
    %v2994 = vadd.f32 %v2993, 1.0
    %v2995 = vrcp.pop %v2994
    %v2996 = vmul.f32 1.0, %v2995
    %v2997 = vsel %vm38, %v2990, %v2996
    %v2998 = vmul.f32 %v2997, %v2737
    %3000 = vrot.lane.b32.xlu0 %v2997, 64
    %v3001 = vpop.permute.xlu0 %3000
    %v3003 = vmul.f32 %v2997, %v3001
    %3005 = vrot.lane.b32.xlu0 %v3003, 32
    %v3006 = vpop.permute.xlu0 %3005
    %v3008 = vadd.f32 %v2998, %v3006
    %v3009 = vtanh.pop %v3008
    %3011 = vrot.lane.b32.xlu0 %v3009, 64
    %v3012 = vpop.permute.xlu0 %3011
    %v3014 = vmul.f32 %v2997, %v3012
    %3016 = vrot.lane.b32.xlu0 %v3014, 32
    %v3017 = vpop.permute.xlu0 %3016
    %v3018 = vsel %vm116, %v3017, 0
    %3020 = vmatprep.subr.mxu0 0.0
    %3021 = vmatpush1.msra.mxu0 %v64
    %3022 = vmatprep.subr.mxu0 0.0
    %3023 = vmatpush1.msra.mxu0 %v65
    %3024 = vmatprep.subr.mxu0 0.0
    %3025 = vmatpush1.msra.mxu0 %v66
    %3026 = vmatprep.subr.mxu0 0.0
    %3027 = vmatpush1.msra.mxu0 %v67
    %3028 = vmatprep.subr.mxu0 0.0
    %3029 = vmatpush1.msra.mxu0 0.0
    %3030 = vmatprep.subr.mxu0 0.0
    %3031 = vmatpush1.msra.mxu0 0.0
    %3032 = vmatprep.subr.mxu0 0.0
    %3033 = vmatpush1.msra.mxu0 0.0
    %3034 = vmatprep.subr.mxu0 0.0
    %3035 = vmatpush1.msra.mxu0 0.0
    %3036 = vmatprep.subr.mxu0 0.0
    %3037 = vmatpush1.msra.mxu0 0.0
    %3038 = vmatprep.subr.mxu0 0.0
    %3039 = vmatpush1.msra.mxu0 0.0
    %3040 = vmatprep.subr.mxu0 0.0
    %3041 = vmatpush1.msra.mxu0 0.0
    %3042 = vmatprep.subr.mxu0 0.0
    %3043 = vmatpush1.msra.mxu0 0.0
    %3044 = vmatprep.subr.mxu0 0.0
    %3045 = vmatpush1.msra.mxu0 0.0
    %3046 = vmatprep.subr.mxu0 0.0
    %3047 = vmatpush1.msra.mxu0 0.0
    %3048 = vmatprep.subr.mxu0 0.0
    %3049 = vmatpush1.msra.mxu0 0.0
    %3050 = vmatprep.subr.mxu0 0.0
    %3051 = vmatpush1.msra.mxu0 0.0
    %3052 = vmatprep.subr.mxu0 0.0
    %3053 = vmatpush1.msra.mxu0 0.0
    %3054 = vmatprep.subr.mxu0 0.0
    %3055 = vmatpush1.msra.mxu0 0.0
    %3056 = vmatprep.subr.mxu0 0.0
    %3057 = vmatpush1.msra.mxu0 0.0
    %3058 = vmatprep.subr.mxu0 0.0
    %3059 = vmatpush1.msra.mxu0 0.0
    %3060 = vmatprep.subr.mxu0 0.0
    %3061 = vmatpush1.msra.mxu0 0.0
    %3062 = vmatprep.subr.mxu0 0.0
    %3063 = vmatpush1.msra.mxu0 0.0
    %3064 = vmatprep.subr.mxu0 0.0
    %3065 = vmatpush1.msra.mxu0 0.0
    %3066 = vmatprep.subr.mxu0 0.0
    %3067 = vmatpush1.msra.mxu0 0.0
    %3068 = vmatprep.subr.mxu0 0.0
    %3069 = vmatpush1.msra.mxu0 0.0
    %3070 = vmatprep.subr.mxu0 0.0
    %3071 = vmatpush1.msra.mxu0 0.0
    %3072 = vmatprep.subr.mxu0 0.0
    %3073 = vmatpush1.msra.mxu0 0.0
    %3074 = vmatprep.subr.mxu0 0.0
    %3075 = vmatpush1.msra.mxu0 0.0
    %3076 = vmatprep.subr.mxu0 0.0
    %3077 = vmatpush1.msra.mxu0 0.0
    %3078 = vmatprep.subr.mxu0 0.0
    %3079 = vmatpush1.msra.mxu0 0.0
    %3080 = vmatprep.subr.mxu0 0.0
    %3081 = vmatpush1.msra.mxu0 0.0
    %3082 = vmatprep.subr.mxu0 0.0
    %3083 = vmatpush1.msra.mxu0 0.0
    %3084 = vmatprep.mubr.f32.mxu0 0.0
    %3085 = vmatmul.mubr.f32.gmra.mrb[0].mxu0 %v3018
    %v3086 = vpop.f32.mrb[0].mxu0
    %v3087 = vadd.f32 %v1387, %v3086
    %v3088 = vpop.f32.mrb[0].mxu0
    %3089 = vdwg.mxu0
    %s3090 = scalar_lea.vmem [#allocation2], 56
    %3091 = vst [vmem:[%s3090] sm:$0xff] %v3087
    // Predicated region
    $region38: #{seq2seq_forward.1} parent=1 // pred_check
      _
    $region39: #{seq2seq_forward.1} parent=1 // pred_check_branch
      %3093 = sbr.rel (0) target = $region41
    $region40: #{seq2seq_forward.1} parent=1 // pred_region
      %s3095 = ssub.s32 1024, 1024
      %3096 = vsyncadd [#allocation3], %s3095
      %s3097 = sshll.u32 [#allocation2], 4
      %s3098 = int_to_ptr.vmem [resolvable:$true] %s3097
      %3103 = dma.vmem_to_hbm [thread:$0]  %s3098, 1024, %s9, [#allocation3], 128, 128, 8
    $region41: #{seq2seq_forward.1} parent=1 // pred_fallthru
      _
    // Predicated region
    $region42: #{seq2seq_forward.1} parent=1 // pred_check
      _
    $region43: #{seq2seq_forward.1} parent=1 // pred_check_branch
      %3105 = sbr.rel (0) target = $region45
    $region44: #{seq2seq_forward.1} parent=1 // pred_region
      %3106 = dma.done [#allocation3], 1024
    $region45: #{seq2seq_forward.1} parent=1 // pred_fallthru
      _
    %3107 = vsyncpa [#allocation3], 1

</llo_original>
